<compile_context>
chip_gen: v6e
topology: v6e:2x2x1
jax: 0.10.0
libtpu: 0.0.40
codegen_flags: <defaults>
</compile_context>

<pallas_src>
import math
from functools import partial

import jax
import jax.numpy as jnp
import numpy as np
from jax import lax
from jax.experimental import pallas as pl
from jax.experimental.pallas import tpu as pltpu

_F32 = jnp.float32
_BF16 = jnp.bfloat16


# ----------------------------- Pallas kernel ------------------------------ #

def _layer_norm(h, gamma, beta, eps=1e-5):
    mu = jnp.mean(h, axis=-1, keepdims=True)
    var = jnp.mean((h - mu) ** 2, axis=-1, keepdims=True)
    return (h - mu) * lax.rsqrt(var + eps) * gamma + beta


def _decoder_layer_kernel(x_ref, enc_ref, tgt_bias_ref, src_bias_ref,
                          s_qkv_w_ref, s_qkv_b_ref, s_ow_ref, s_ob_ref,
                          c_qkv_w_ref, c_qkv_b_ref, c_ow_ref, c_ob_ref,
                          w1_ref, b1_ref, w2_ref, b2_ref,
                          g_ref, be_ref,
                          out_ref, *w_refs, num_heads, return_probs):
    # One grid step == one batch element (all tiles resident in VMEM).
    self_w_ref = w_refs[0] if return_probs else None
    cross_w_ref = w_refs[1] if return_probs else None

    H = num_heads
    _, T, D = x_ref.shape
    dk = D // H
    scale = 1.0 / math.sqrt(dk)

    x_bf = x_ref[0]        # (T, D) bf16
    enc_bf = enc_ref[0]    # (S, D) bf16
    g = g_ref[...]         # (3, D) f32 LayerNorm gammas
    be = be_ref[...]       # (3, D) f32 LayerNorm betas

    def mha(q_in_bf, kv_in_bf, qkv_w_ref, qkv_b_ref, ow_ref, ob_ref,
            bias_ref, p_out_ref, fused_qkv):
        Tq = q_in_bf.shape[0]
        Tk = kv_in_bf.shape[0]
        w = qkv_w_ref[...]           # (D, 3D) bf16  [Wq | Wk | Wv]
        b = qkv_b_ref[...]           # (1, 3D) f32

        if fused_qkv:
            # Self-attention: one lane-dense (Tq, D) @ (D, 3D) matmul.
            qkv = jnp.dot(q_in_bf, w, preferred_element_type=_F32) + b
            q2, k2, v2 = qkv[:, :D], qkv[:, D:2 * D], qkv[:, 2 * D:]
        else:
            # Cross-attention: Q from decoder stream, K/V from encoder output.
            q2 = jnp.dot(q_in_bf, w[:, :D],
                         preferred_element_type=_F32) + b[:, :D]
            kv = jnp.dot(kv_in_bf, w[:, D:],
                         preferred_element_type=_F32) + b[:, D:]
            k2, v2 = kv[:, :D], kv[:, D:]

        def heads(a, Tn):            # (Tn, D) -> (H, Tn, dk)
            return a.reshape(Tn, H, dk).transpose(1, 0, 2)

        q = heads(q2 * scale, Tq).astype(_BF16)   # fold 1/sqrt(dk) into q
        k = heads(k2, Tk).astype(_BF16)
        v = heads(v2, Tk).astype(_BF16)

        # Scores: 'hqd,hkd->hqk' (contract last dims, flash-style layout).
        scores = lax.dot_general(q, k, (((2,), (2,)), ((0,), (0,))),
                                 preferred_element_type=_F32)   # (H, Tq, Tk)
        scores = scores + bias_ref[...][None]                   # additive bias
        m = jnp.max(scores, axis=-1, keepdims=True)
        e = jnp.exp(scores - m)
        denom = jnp.sum(e, axis=-1, keepdims=True)
        # Exact reciprocal when probabilities are user-facing, EUP approx
        # (free slot) when they only feed the context matmul.
        p = e * pl.reciprocal(denom, approx=not return_probs)
        if p_out_ref is not None:
            p_out_ref[0] = p.astype(p_out_ref.dtype)   # one bf16 store/block

        ctx = lax.dot_general(p.astype(_BF16), v,
                              (((2,), (1,)), ((0,), (0,))),
                              preferred_element_type=_F32)      # (H, Tq, dk)
        # Output projection: one (Tq, D) @ (D, D) matmul on concatenated heads.
        ctx2 = ctx.transpose(1, 0, 2).reshape(Tq, D).astype(_BF16)
        return jnp.dot(ctx2, ow_ref[...],
                       preferred_element_type=_F32) + ob_ref[...]

    # 1) masked self-attention + add & norm   (dropout = identity)
    sa = mha(x_bf, x_bf, s_qkv_w_ref, s_qkv_b_ref, s_ow_ref, s_ob_ref,
             tgt_bias_ref, self_w_ref, fused_qkv=True)
    x1 = _layer_norm(x_bf.astype(_F32) + sa, g[0], be[0])

    # 2) encoder-decoder attention + add & norm
    ca = mha(x1.astype(_BF16), enc_bf, c_qkv_w_ref, c_qkv_b_ref,
             c_ow_ref, c_ob_ref, src_bias_ref, cross_w_ref, fused_qkv=False)
    x2 = _layer_norm(x1 + ca, g[1], be[1])

    # 3) position-wise feed-forward + add & norm
    # TODO(synk): K-tile w1/w2/hid over d_ff (extra grid axis or manual DMA)
    #             for production d_ff on v7x's 64 MiB VMEM.
    hid = jnp.maximum(
        jnp.dot(x2.astype(_BF16), w1_ref[...],
                preferred_element_type=_F32) + b1_ref[...], 0.0)
    ff = jnp.dot(hid.astype(_BF16), w2_ref[...],
                 preferred_element_type=_F32) + b2_ref[...]
    x3 = _layer_norm(x2 + ff, g[2], be[2])

    out_ref[0] = x3.astype(out_ref.dtype)


# ------------------------------- wrapper ----------------------------------- #

def _const_spec(shape):
    """BlockSpec for a grid-invariant operand: constant index map, and
    single-buffered (no point double-buffering a block that never changes)."""
    nd = len(shape)
    idx = lambda b, _nd=nd: (0,) * _nd
    try:
        return pl.BlockSpec(shape, idx, pipeline_mode=pl.Buffered(1))
    except TypeError:   # jax version without pipeline_mode on BlockSpec
        return pl.BlockSpec(shape, idx)


def _vmem_limit_bytes():
    """~75% of this generation's VMEM (capped at 100 MiB): leaves the compiler
    headroom on v7x (64 MiB total) while not under-using v5e/v6e (128 MiB)."""
    try:
        cap = int(pltpu.get_tpu_info().vmem_capacity_bytes)
    except Exception:
        cap = 128 * 1024 * 1024
    return min((cap * 3) // 4, 100 * 1024 * 1024)


def transformer_decoder_layer(x, enc, tgt_mask, src_mask, params, num_heads,
                              return_weights=True):
    B, T, D = x.shape
    S = enc.shape[1]
    H = num_heads
    assert D % H == 0
    d_ff = params["w1"].shape[1]

    def fuse(W4, b4):
        # stacked (4, D, D)/(4, D) [Wq, Wk, Wv, Wo] -> lane-dense operands.
        qkv_w = jnp.concatenate([W4[0], W4[1], W4[2]], axis=1)        # (D, 3D)
        qkv_b = jnp.concatenate([b4[0], b4[1], b4[2]])[None, :]       # (1, 3D)
        return (qkv_w.astype(_BF16), qkv_b.astype(_F32),
                W4[3].astype(_BF16), b4[3][None, :].astype(_F32))

    s_qkv_w, s_qkv_b, s_ow, s_ob = fuse(params["sW"], params["sb"])
    c_qkv_w, c_qkv_b, c_ow, c_ob = fuse(params["cW"], params["cb"])

    # 0/1 keep-masks -> additive biases, computed once in the wrapper.
    tgt_bias = ((tgt_mask.astype(_F32) - 1.0) * 1e9)
    src_bias = ((src_mask.astype(_F32) - 1.0) * 1e9)

    in_specs = [
        pl.BlockSpec((1, T, D), lambda b: (b, 0, 0)),   # x (bf16)
        pl.BlockSpec((1, S, D), lambda b: (b, 0, 0)),   # encoder output (bf16)
        _const_spec((T, T)), _const_spec((T, S)),       # additive biases
        _const_spec((D, 3 * D)), _const_spec((1, 3 * D)),   # self-attn QKV
        _const_spec((D, D)), _const_spec((1, D)),           # self-attn out proj
        _const_spec((D, 3 * D)), _const_spec((1, 3 * D)),   # cross-attn QKV
        _const_spec((D, D)), _const_spec((1, D)),           # cross-attn out proj
        _const_spec((D, d_ff)), _const_spec((1, d_ff)),     # FFN w1, b1
        _const_spec((d_ff, D)), _const_spec((1, D)),        # FFN w2, b2
        _const_spec((3, D)), _const_spec((3, D)),           # LN gamma, beta
    ]
    out_specs = [pl.BlockSpec((1, T, D), lambda b: (b, 0, 0))]
    out_shape = [jax.ShapeDtypeStruct((B, T, D), _F32)]
    if return_weights:
        # Attention probabilities emitted in bf16 (halves HBM writeback);
        # pass return_weights=False to skip the writeback entirely.
        out_specs += [pl.BlockSpec((1, H, T, T), lambda b: (b, 0, 0, 0)),
                      pl.BlockSpec((1, H, T, S), lambda b: (b, 0, 0, 0))]
        out_shape += [jax.ShapeDtypeStruct((B, H, T, T), _BF16),
                      jax.ShapeDtypeStruct((B, H, T, S), _BF16)]

    outs = pl.pallas_call(
        partial(_decoder_layer_kernel, num_heads=H,
                return_probs=return_weights),
        grid=(B,),
        in_specs=in_specs,
        out_specs=out_specs,
        out_shape=out_shape,
        compiler_params=pltpu.CompilerParams(
            dimension_semantics=("parallel",),      # 2 TensorCores on v7x
            vmem_limit_bytes=_vmem_limit_bytes()),
    )(x.astype(_BF16), enc.astype(_BF16), tgt_bias, src_bias,
      s_qkv_w, s_qkv_b, s_ow, s_ob,
      c_qkv_w, c_qkv_b, c_ow, c_ob,
      params["w1"].astype(_BF16), params["b1"].astype(_F32),
      params["w2"].astype(_BF16), params["b2"].astype(_F32),
      params["gamma"].astype(_F32), params["beta"].astype(_F32))

    if return_weights:
        out, self_w, cross_w = outs
        return out, (self_w, cross_w)
    return outs[0], (None, None)


# ------------------------ pure-JAX reference check ------------------------- #

def _ref_forward(x, enc, tgt_mask, src_mask, p, H):
    def mha(q_in, kv_in, W, b, mask):
        B, Tq, D = q_in.shape
        Tk = kv_in.shape[1]
        dk = D // H
        q = (q_in @ W[0] + b[0]).reshape(B, Tq, H, dk).transpose(0, 2, 1, 3)
        k = (kv_in @ W[1] + b[1]).reshape(B, Tk, H, dk).transpose(0, 2, 1, 3)
        v = (kv_in @ W[2] + b[2]).reshape(B, Tk, H, dk).transpose(0, 2, 1, 3)
        scores = jnp.einsum("bhqd,bhkd->bhqk", q, k) / math.sqrt(dk)
        scores = jnp.where(mask == 0, -1e9, scores)
        w = jax.nn.softmax(scores, axis=-1)
        ctx = jnp.einsum("bhqk,bhkd->bhqd", w, v)
        ctx = ctx.transpose(0, 2, 1, 3).reshape(B, Tq, D)
        return ctx @ W[3] + b[3], w

    def ln(h, g, b):
        mu = h.mean(-1, keepdims=True)
        var = ((h - mu) ** 2).mean(-1, keepdims=True)
        return (h - mu) / jnp.sqrt(var + 1e-5) * g + b

    sa, sw = mha(x, x, p["sW"], p["sb"], tgt_mask)
    x1 = ln(x + sa, p["gamma"][0], p["beta"][0])
    ca, cw = mha(x1, enc, p["cW"], p["cb"], src_mask)
    x2 = ln(x1 + ca, p["gamma"][1], p["beta"][1])
    ff = jnp.maximum(x2 @ p["w1"] + p["b1"], 0.0) @ p["w2"] + p["b2"]
    x3 = ln(x2 + ff, p["gamma"][2], p["beta"][2])
    return x3, sw, cw


# --------------------------------- main ------------------------------------ #

if __name__ == "__main__":
    B, T, S, D, H, D_FF = 2, 8, 8, 32, 4, 64

    key = jax.random.PRNGKey(0)
    ks = jax.random.split(key, 12)

    def u(k, shape, scale):
        return jax.random.uniform(k, shape, jnp.float32, -1.0, 1.0) * scale

    def rt(a):  # round-trip through bf16 so kernel & reference see same values
        return a.astype(jnp.bfloat16).astype(jnp.float32)

    params = {
        "sW": rt(u(ks[0], (4, D, D), 1.0 / math.sqrt(D))),
        "sb": rt(u(ks[1], (4, D), 1.0 / math.sqrt(D))),
        "cW": rt(u(ks[2], (4, D, D), 1.0 / math.sqrt(D))),
        "cb": rt(u(ks[3], (4, D), 1.0 / math.sqrt(D))),
        "w1": rt(u(ks[4], (D, D_FF), 1.0 / math.sqrt(D))),
        "b1": rt(u(ks[5], (1, D_FF), 1.0 / math.sqrt(D))),
        "w2": rt(u(ks[6], (D_FF, D), 1.0 / math.sqrt(D_FF))),
        "b2": rt(u(ks[7], (1, D), 1.0 / math.sqrt(D_FF))),
        "gamma": rt(1.0 + 0.1 * jax.random.normal(ks[8], (3, D), jnp.float32)),
        "beta": rt(0.1 * jax.random.normal(ks[9], (3, D), jnp.float32)),
    }

    x = rt(jax.random.normal(ks[10], (B, T, D), jnp.float32))
    enc_out = rt(jax.random.normal(ks[11], (B, S, D), jnp.float32))
    tgt_mask = jnp.tril(jnp.ones((T, T), jnp.float32))   # causal mask
    src_mask = jnp.ones((T, S), jnp.float32)             # no source masking

    out, (self_w, cross_w) = transformer_decoder_layer(
        x, enc_out, tgt_mask, src_mask, params, num_heads=H,
        return_weights=True)
    jax.block_until_ready((out, self_w, cross_w))

    ref_out, ref_sw, ref_cw = _ref_forward(x, enc_out, tgt_mask, src_mask,
                                           params, H)
    # bf16 inputs / intermediates / prob outputs -> looser tolerances than f32.
    out_np = np.asarray(out)
    sw_np = np.asarray(self_w.astype(jnp.float32))
    cw_np = np.asarray(cross_w.astype(jnp.float32))
    assert np.max(np.abs(out_np - np.asarray(ref_out))) < 5e-2
    assert np.max(np.abs(sw_np - np.asarray(ref_sw))) < 2e-2
    assert np.max(np.abs(cw_np - np.asarray(ref_cw))) < 2e-2

    print("KERNEL_OK")
</pallas_src>

<mosaic_0001>
module attributes {stable_mosaic.version = 11 : i64} {
  func.func @_decoder_layer_kernel(%arg0: i32, %arg1: memref<1x8x32xbf16, #tpu.memory_space<vmem>>, %arg2: memref<1x8x32xbf16, #tpu.memory_space<vmem>>, %arg3: memref<8x8xf32, #tpu.memory_space<vmem>>, %arg4: memref<8x8xf32, #tpu.memory_space<vmem>>, %arg5: memref<32x96xbf16, #tpu.memory_space<vmem>>, %arg6: memref<1x96xf32, #tpu.memory_space<vmem>>, %arg7: memref<32x32xbf16, #tpu.memory_space<vmem>>, %arg8: memref<1x32xf32, #tpu.memory_space<vmem>>, %arg9: memref<32x96xbf16, #tpu.memory_space<vmem>>, %arg10: memref<1x96xf32, #tpu.memory_space<vmem>>, %arg11: memref<32x32xbf16, #tpu.memory_space<vmem>>, %arg12: memref<1x32xf32, #tpu.memory_space<vmem>>, %arg13: memref<32x64xbf16, #tpu.memory_space<vmem>>, %arg14: memref<1x64xf32, #tpu.memory_space<vmem>>, %arg15: memref<64x32xbf16, #tpu.memory_space<vmem>>, %arg16: memref<1x32xf32, #tpu.memory_space<vmem>>, %arg17: memref<3x32xf32, #tpu.memory_space<vmem>>, %arg18: memref<3x32xf32, #tpu.memory_space<vmem>>, %arg19: memref<1x8x32xf32, #tpu.memory_space<vmem>>, %arg20: memref<1x4x8x8xbf16, #tpu.memory_space<vmem>>, %arg21: memref<1x4x8x8xbf16, #tpu.memory_space<vmem>>) attributes {dimension_semantics = [#tpu.dimension_semantics<parallel>], iteration_bounds = array<i64: 2>, scalar_prefetch = 0 : i64, scratch_operands = 0 : i64, tpu.core_type = #tpu.core_type<tc>, window_params = [{transform_indices = @transform_0, window_bounds = array<i64: 1, 8, 32>}, {transform_indices = @transform_1, window_bounds = array<i64: 1, 8, 32>}, {pipeline_mode = #tpu.pipeline_mode<synchronous>, transform_indices = @transform_2, window_bounds = array<i64: 8, 8>}, {pipeline_mode = #tpu.pipeline_mode<synchronous>, transform_indices = @transform_3, window_bounds = array<i64: 8, 8>}, {pipeline_mode = #tpu.pipeline_mode<synchronous>, transform_indices = @transform_4, window_bounds = array<i64: 32, 96>}, {pipeline_mode = #tpu.pipeline_mode<synchronous>, transform_indices = @transform_5, window_bounds = array<i64: 1, 96>}, {pipeline_mode = #tpu.pipeline_mode<synchronous>, transform_indices = @transform_6, window_bounds = array<i64: 32, 32>}, {pipeline_mode = #tpu.pipeline_mode<synchronous>, transform_indices = @transform_7, window_bounds = array<i64: 1, 32>}, {pipeline_mode = #tpu.pipeline_mode<synchronous>, transform_indices = @transform_8, window_bounds = array<i64: 32, 96>}, {pipeline_mode = #tpu.pipeline_mode<synchronous>, transform_indices = @transform_9, window_bounds = array<i64: 1, 96>}, {pipeline_mode = #tpu.pipeline_mode<synchronous>, transform_indices = @transform_10, window_bounds = array<i64: 32, 32>}, {pipeline_mode = #tpu.pipeline_mode<synchronous>, transform_indices = @transform_11, window_bounds = array<i64: 1, 32>}, {pipeline_mode = #tpu.pipeline_mode<synchronous>, transform_indices = @transform_12, window_bounds = array<i64: 32, 64>}, {pipeline_mode = #tpu.pipeline_mode<synchronous>, transform_indices = @transform_13, window_bounds = array<i64: 1, 64>}, {pipeline_mode = #tpu.pipeline_mode<synchronous>, transform_indices = @transform_14, window_bounds = array<i64: 64, 32>}, {pipeline_mode = #tpu.pipeline_mode<synchronous>, transform_indices = @transform_15, window_bounds = array<i64: 1, 32>}, {pipeline_mode = #tpu.pipeline_mode<synchronous>, transform_indices = @transform_16, window_bounds = array<i64: 3, 32>}, {pipeline_mode = #tpu.pipeline_mode<synchronous>, transform_indices = @transform_17, window_bounds = array<i64: 3, 32>}, {transform_indices = @transform_18, window_bounds = array<i64: 1, 8, 32>}, {transform_indices = @transform_19, window_bounds = array<i64: 1, 4, 8, 8>}, {transform_indices = @transform_20, window_bounds = array<i64: 1, 4, 8, 8>}]} {
    %c0 = arith.constant 0 : index
    %c0_0 = arith.constant 0 : index
    %c0_1 = arith.constant 0 : index
    %0 = vector.load %arg1[%c0, %c0_0, %c0_1] : memref<1x8x32xbf16, #tpu.memory_space<vmem>>, vector<1x8x32xbf16>
    %1 = vector.shape_cast %0 : vector<1x8x32xbf16> to vector<8x32xbf16>
    %c0_2 = arith.constant 0 : index
    %c0_3 = arith.constant 0 : index
    %c0_4 = arith.constant 0 : index
    %2 = vector.load %arg2[%c0_2, %c0_3, %c0_4] : memref<1x8x32xbf16, #tpu.memory_space<vmem>>, vector<1x8x32xbf16>
    %3 = vector.shape_cast %2 : vector<1x8x32xbf16> to vector<8x32xbf16>
    %c0_5 = arith.constant 0 : index
    %c0_6 = arith.constant 0 : index
    %4 = vector.load %arg17[%c0_5, %c0_6] : memref<3x32xf32, #tpu.memory_space<vmem>>, vector<3x32xf32>
    %c0_7 = arith.constant 0 : index
    %c0_8 = arith.constant 0 : index
    %5 = vector.load %arg18[%c0_7, %c0_8] : memref<3x32xf32, #tpu.memory_space<vmem>>, vector<3x32xf32>
    %c0_9 = arith.constant 0 : index
    %c0_10 = arith.constant 0 : index
    %6 = vector.load %arg5[%c0_9, %c0_10] : memref<32x96xbf16, #tpu.memory_space<vmem>>, vector<32x96xbf16>
    %c0_11 = arith.constant 0 : index
    %c0_12 = arith.constant 0 : index
    %7 = vector.load %arg6[%c0_11, %c0_12] : memref<1x96xf32, #tpu.memory_space<vmem>>, vector<1x96xf32>
    %cst = arith.constant dense<0.000000e+00> : vector<8x96xf32>
    %8 = tpu.matmul %1, %6, %cst {dimension_numbers = #tpu.dot_dimension_numbers<[1], [0], [0], [1], [0, 0, 1, 1], [], []>} : vector<8x32xbf16>, vector<32x96xbf16>, vector<8x96xf32> -> vector<8x96xf32>
    %9 = vector.broadcast %7 : vector<1x96xf32> to vector<8x96xf32>
    %10 = arith.addf %8, %9 : vector<8x96xf32>
    %11 = vector.extract_strided_slice %10 {offsets = [0, 0], sizes = [8, 32], strides = [1, 1]} : vector<8x96xf32> to vector<8x32xf32>
    %12 = vector.extract_strided_slice %10 {offsets = [0, 32], sizes = [8, 32], strides = [1, 1]} : vector<8x96xf32> to vector<8x32xf32>
    %13 = vector.extract_strided_slice %10 {offsets = [0, 64], sizes = [8, 32], strides = [1, 1]} : vector<8x96xf32> to vector<8x32xf32>
    %cst_13 = arith.constant 0.353553385 : f32
    %14 = vector.broadcast %cst_13 : f32 to vector<8x32xf32>
    %15 = arith.mulf %11, %14 : vector<8x32xf32>
    %16 = vector.shape_cast %15 : vector<8x32xf32> to vector<8x4x8xf32>
    %17 = tpu.transpose %16, [1, 0, 2] : vector<8x4x8xf32> -> vector<4x8x8xf32>
    %18 = arith.truncf %17 : vector<4x8x8xf32> to vector<4x8x8xbf16>
    %19 = vector.shape_cast %12 : vector<8x32xf32> to vector<8x4x8xf32>
    %20 = tpu.transpose %19, [1, 0, 2] : vector<8x4x8xf32> -> vector<4x8x8xf32>
    %21 = arith.truncf %20 : vector<4x8x8xf32> to vector<4x8x8xbf16>
    %22 = vector.shape_cast %13 : vector<8x32xf32> to vector<8x4x8xf32>
    %23 = tpu.transpose %22, [1, 0, 2] : vector<8x4x8xf32> -> vector<4x8x8xf32>
    %24 = arith.truncf %23 : vector<4x8x8xf32> to vector<4x8x8xbf16>
    %cst_14 = arith.constant dense<0.000000e+00> : vector<4x8x8xf32>
    %25 = tpu.matmul %18, %21, %cst_14 {dimension_numbers = #tpu.dot_dimension_numbers<[2], [2], [1], [1], [0, 0, 0, 1, 1, 1], [0], [0]>} : vector<4x8x8xbf16>, vector<4x8x8xbf16>, vector<4x8x8xf32> -> vector<4x8x8xf32>
    %c0_15 = arith.constant 0 : index
    %c0_16 = arith.constant 0 : index
    %26 = vector.load %arg3[%c0_15, %c0_16] : memref<8x8xf32, #tpu.memory_space<vmem>>, vector<8x8xf32>
    %27 = vector.shape_cast %26 : vector<8x8xf32> to vector<1x8x8xf32>
    %28 = vector.broadcast %27 : vector<1x8x8xf32> to vector<4x8x8xf32>
    %29 = arith.addf %25, %28 : vector<4x8x8xf32>
    %cst_17 = arith.constant dense<0xFF800000> : vector<4x8xf32>
    %30 = vector.multi_reduction <maximumf>, %29, %cst_17 [2] : vector<4x8x8xf32> to vector<4x8xf32>
    %31 = vector.shape_cast %30 : vector<4x8xf32> to vector<4x8x1xf32>
    %32 = vector.broadcast %31 : vector<4x8x1xf32> to vector<4x8x8xf32>
    %33 = arith.subf %29, %32 : vector<4x8x8xf32>
    %34 = math.exp %33 : vector<4x8x8xf32>
    %cst_18 = arith.constant dense<0.000000e+00> : vector<4x8xf32>
    %35 = vector.multi_reduction <add>, %34, %cst_18 [2] : vector<4x8x8xf32> to vector<4x8xf32>
    %36 = vector.shape_cast %35 : vector<4x8xf32> to vector<4x8x1xf32>
    %37 = tpu.reciprocal %36 : vector<4x8x1xf32> -> vector<4x8x1xf32>
    %38 = vector.broadcast %37 : vector<4x8x1xf32> to vector<4x8x8xf32>
    %39 = arith.mulf %34, %38 : vector<4x8x8xf32>
    %40 = arith.truncf %39 : vector<4x8x8xf32> to vector<4x8x8xbf16>
    %c0_19 = arith.constant 0 : index
    %c0_20 = arith.constant 0 : index
    %c0_21 = arith.constant 0 : index
    %c0_22 = arith.constant 0 : index
    %41 = vector.load %arg20[%c0_19, %c0_20, %c0_21, %c0_22] : memref<1x4x8x8xbf16, #tpu.memory_space<vmem>>, vector<1x4x8x8xbf16>
    %42 = vector.shape_cast %41 : vector<1x4x8x8xbf16> to vector<4x8x8xbf16>
    %43 = vector.shape_cast %40 : vector<4x8x8xbf16> to vector<1x4x8x8xbf16>
    tpu.vector_store %arg20[%c0_19, %c0_20, %c0_21, %c0_22], %43 {strides = array<i32>} : memref<1x4x8x8xbf16, #tpu.memory_space<vmem>>, vector<1x4x8x8xbf16>,
    %44 = arith.truncf %39 : vector<4x8x8xf32> to vector<4x8x8xbf16>
    %cst_23 = arith.constant dense<0.000000e+00> : vector<4x8x8xf32>
    %45 = tpu.matmul %44, %24, %cst_23 {dimension_numbers = #tpu.dot_dimension_numbers<[2], [1], [1], [2], [0, 0, 0, 1, 1, 2], [0], [0]>} : vector<4x8x8xbf16>, vector<4x8x8xbf16>, vector<4x8x8xf32> -> vector<4x8x8xf32>
    %46 = tpu.transpose %45, [1, 0, 2] : vector<4x8x8xf32> -> vector<8x4x8xf32>
    %47 = vector.shape_cast %46 : vector<8x4x8xf32> to vector<8x32xf32>
    %48 = arith.truncf %47 : vector<8x32xf32> to vector<8x32xbf16>
    %c0_24 = arith.constant 0 : index
    %c0_25 = arith.constant 0 : index
    %49 = vector.load %arg7[%c0_24, %c0_25] : memref<32x32xbf16, #tpu.memory_space<vmem>>, vector<32x32xbf16>
    %cst_26 = arith.constant dense<0.000000e+00> : vector<8x32xf32>
    %50 = tpu.matmul %48, %49, %cst_26 {dimension_numbers = #tpu.dot_dimension_numbers<[1], [0], [0], [1], [0, 0, 1, 1], [], []>} : vector<8x32xbf16>, vector<32x32xbf16>, vector<8x32xf32> -> vector<8x32xf32>
    %c0_27 = arith.constant 0 : index
    %c0_28 = arith.constant 0 : index
    %51 = vector.load %arg8[%c0_27, %c0_28] : memref<1x32xf32, #tpu.memory_space<vmem>>, vector<1x32xf32>
    %52 = vector.broadcast %51 : vector<1x32xf32> to vector<8x32xf32>
    %53 = arith.addf %50, %52 : vector<8x32xf32>
    %54 = arith.extf %1 : vector<8x32xbf16> to vector<8x32xf32>
    %55 = arith.addf %54, %53 : vector<8x32xf32>
    %56 = vector.extract_strided_slice %4 {offsets = [0, 0], sizes = [1, 32], strides = [1, 1]} : vector<3x32xf32> to vector<1x32xf32>
    %57 = vector.shape_cast %56 : vector<1x32xf32> to vector<32xf32>
    %58 = vector.extract_strided_slice %5 {offsets = [0, 0], sizes = [1, 32], strides = [1, 1]} : vector<3x32xf32> to vector<1x32xf32>
    %59 = vector.shape_cast %58 : vector<1x32xf32> to vector<32xf32>
    %cst_29 = arith.constant dense<0.000000e+00> : vector<8xf32>
    %60 = vector.multi_reduction <add>, %55, %cst_29 [1] : vector<8x32xf32> to vector<8xf32>
    %61 = vector.shape_cast %60 : vector<8xf32> to vector<8x1xf32>
    %cst_30 = arith.constant 3.200000e+01 : f32
    %62 = vector.broadcast %cst_30 : f32 to vector<8x1xf32>
    %63 = arith.divf %61, %62 : vector<8x1xf32>
    %64 = vector.broadcast %63 : vector<8x1xf32> to vector<8x32xf32>
    %65 = arith.subf %55, %64 : vector<8x32xf32>
    %66 = arith.mulf %65, %65 : vector<8x32xf32>
    %cst_31 = arith.constant dense<0.000000e+00> : vector<8xf32>
    %67 = vector.multi_reduction <add>, %66, %cst_31 [1] : vector<8x32xf32> to vector<8xf32>
    %68 = vector.shape_cast %67 : vector<8xf32> to vector<8x1xf32>
    %cst_32 = arith.constant 3.200000e+01 : f32
    %69 = vector.broadcast %cst_32 : f32 to vector<8x1xf32>
    %70 = arith.divf %68, %69 : vector<8x1xf32>
    %71 = vector.broadcast %63 : vector<8x1xf32> to vector<8x32xf32>
    %72 = arith.subf %55, %71 : vector<8x32xf32>
    %cst_33 = arith.constant 9.99999974E-6 : f32
    %73 = vector.broadcast %cst_33 : f32 to vector<8x1xf32>
    %74 = arith.addf %70, %73 : vector<8x1xf32>
    %75 = math.rsqrt %74 : vector<8x1xf32>
    %76 = vector.broadcast %75 : vector<8x1xf32> to vector<8x32xf32>
    %77 = arith.mulf %72, %76 : vector<8x32xf32>
    %78 = vector.shape_cast %57 : vector<32xf32> to vector<1x32xf32>
    %79 = vector.broadcast %78 : vector<1x32xf32> to vector<8x32xf32>
    %80 = arith.mulf %77, %79 : vector<8x32xf32>
    %81 = vector.shape_cast %59 : vector<32xf32> to vector<1x32xf32>
    %82 = vector.broadcast %81 : vector<1x32xf32> to vector<8x32xf32>
    %83 = arith.addf %80, %82 : vector<8x32xf32>
    %84 = arith.truncf %83 : vector<8x32xf32> to vector<8x32xbf16>
    %c0_34 = arith.constant 0 : index
    %c0_35 = arith.constant 0 : index
    %85 = vector.load %arg9[%c0_34, %c0_35] : memref<32x96xbf16, #tpu.memory_space<vmem>>, vector<32x96xbf16>
    %c0_36 = arith.constant 0 : index
    %c0_37 = arith.constant 0 : index
    %86 = vector.load %arg10[%c0_36, %c0_37] : memref<1x96xf32, #tpu.memory_space<vmem>>, vector<1x96xf32>
    %87 = vector.extract_strided_slice %85 {offsets = [0, 0], sizes = [32, 32], strides = [1, 1]} : vector<32x96xbf16> to vector<32x32xbf16>
    %cst_38 = arith.constant dense<0.000000e+00> : vector<8x32xf32>
    %88 = tpu.matmul %84, %87, %cst_38 {dimension_numbers = #tpu.dot_dimension_numbers<[1], [0], [0], [1], [0, 0, 1, 1], [], []>} : vector<8x32xbf16>, vector<32x32xbf16>, vector<8x32xf32> -> vector<8x32xf32>
    %89 = vector.extract_strided_slice %86 {offsets = [0, 0], sizes = [1, 32], strides = [1, 1]} : vector<1x96xf32> to vector<1x32xf32>
    %90 = vector.broadcast %89 : vector<1x32xf32> to vector<8x32xf32>
    %91 = arith.addf %88, %90 : vector<8x32xf32>
    %92 = vector.extract_strided_slice %85 {offsets = [0, 32], sizes = [32, 64], strides = [1, 1]} : vector<32x96xbf16> to vector<32x64xbf16>
    %cst_39 = arith.constant dense<0.000000e+00> : vector<8x64xf32>
    %93 = tpu.matmul %3, %92, %cst_39 {dimension_numbers = #tpu.dot_dimension_numbers<[1], [0], [0], [1], [0, 0, 1, 1], [], []>} : vector<8x32xbf16>, vector<32x64xbf16>, vector<8x64xf32> -> vector<8x64xf32>
    %94 = vector.extract_strided_slice %86 {offsets = [0, 32], sizes = [1, 64], strides = [1, 1]} : vector<1x96xf32> to vector<1x64xf32>
    %95 = vector.broadcast %94 : vector<1x64xf32> to vector<8x64xf32>
    %96 = arith.addf %93, %95 : vector<8x64xf32>
    %97 = vector.extract_strided_slice %96 {offsets = [0, 0], sizes = [8, 32], strides = [1, 1]} : vector<8x64xf32> to vector<8x32xf32>
    %98 = vector.extract_strided_slice %96 {offsets = [0, 32], sizes = [8, 32], strides = [1, 1]} : vector<8x64xf32> to vector<8x32xf32>
    %cst_40 = arith.constant 0.353553385 : f32
    %99 = vector.broadcast %cst_40 : f32 to vector<8x32xf32>
    %100 = arith.mulf %91, %99 : vector<8x32xf32>
    %101 = vector.shape_cast %100 : vector<8x32xf32> to vector<8x4x8xf32>
    %102 = tpu.transpose %101, [1, 0, 2] : vector<8x4x8xf32> -> vector<4x8x8xf32>
    %103 = arith.truncf %102 : vector<4x8x8xf32> to vector<4x8x8xbf16>
    %104 = vector.shape_cast %97 : vector<8x32xf32> to vector<8x4x8xf32>
    %105 = tpu.transpose %104, [1, 0, 2] : vector<8x4x8xf32> -> vector<4x8x8xf32>
    %106 = arith.truncf %105 : vector<4x8x8xf32> to vector<4x8x8xbf16>
    %107 = vector.shape_cast %98 : vector<8x32xf32> to vector<8x4x8xf32>
    %108 = tpu.transpose %107, [1, 0, 2] : vector<8x4x8xf32> -> vector<4x8x8xf32>
    %109 = arith.truncf %108 : vector<4x8x8xf32> to vector<4x8x8xbf16>
    %cst_41 = arith.constant dense<0.000000e+00> : vector<4x8x8xf32>
    %110 = tpu.matmul %103, %106, %cst_41 {dimension_numbers = #tpu.dot_dimension_numbers<[2], [2], [1], [1], [0, 0, 0, 1, 1, 1], [0], [0]>} : vector<4x8x8xbf16>, vector<4x8x8xbf16>, vector<4x8x8xf32> -> vector<4x8x8xf32>
    %c0_42 = arith.constant 0 : index
    %c0_43 = arith.constant 0 : index
    %111 = vector.load %arg4[%c0_42, %c0_43] : memref<8x8xf32, #tpu.memory_space<vmem>>, vector<8x8xf32>
    %112 = vector.shape_cast %111 : vector<8x8xf32> to vector<1x8x8xf32>
    %113 = vector.broadcast %112 : vector<1x8x8xf32> to vector<4x8x8xf32>
    %114 = arith.addf %110, %113 : vector<4x8x8xf32>
    %cst_44 = arith.constant dense<0xFF800000> : vector<4x8xf32>
    %115 = vector.multi_reduction <maximumf>, %114, %cst_44 [2] : vector<4x8x8xf32> to vector<4x8xf32>
    %116 = vector.shape_cast %115 : vector<4x8xf32> to vector<4x8x1xf32>
    %117 = vector.broadcast %116 : vector<4x8x1xf32> to vector<4x8x8xf32>
    %118 = arith.subf %114, %117 : vector<4x8x8xf32>
    %119 = math.exp %118 : vector<4x8x8xf32>
    %cst_45 = arith.constant dense<0.000000e+00> : vector<4x8xf32>
    %120 = vector.multi_reduction <add>, %119, %cst_45 [2] : vector<4x8x8xf32> to vector<4x8xf32>
    %121 = vector.shape_cast %120 : vector<4x8xf32> to vector<4x8x1xf32>
    %122 = tpu.reciprocal %121 : vector<4x8x1xf32> -> vector<4x8x1xf32>
    %123 = vector.broadcast %122 : vector<4x8x1xf32> to vector<4x8x8xf32>
    %124 = arith.mulf %119, %123 : vector<4x8x8xf32>
    %125 = arith.truncf %124 : vector<4x8x8xf32> to vector<4x8x8xbf16>
    %c0_46 = arith.constant 0 : index
    %c0_47 = arith.constant 0 : index
    %c0_48 = arith.constant 0 : index
    %c0_49 = arith.constant 0 : index
    %126 = vector.load %arg21[%c0_46, %c0_47, %c0_48, %c0_49] : memref<1x4x8x8xbf16, #tpu.memory_space<vmem>>, vector<1x4x8x8xbf16>
    %127 = vector.shape_cast %126 : vector<1x4x8x8xbf16> to vector<4x8x8xbf16>
    %128 = vector.shape_cast %125 : vector<4x8x8xbf16> to vector<1x4x8x8xbf16>
    tpu.vector_store %arg21[%c0_46, %c0_47, %c0_48, %c0_49], %128 {strides = array<i32>} : memref<1x4x8x8xbf16, #tpu.memory_space<vmem>>, vector<1x4x8x8xbf16>,
    %129 = arith.truncf %124 : vector<4x8x8xf32> to vector<4x8x8xbf16>
    %cst_50 = arith.constant dense<0.000000e+00> : vector<4x8x8xf32>
    %130 = tpu.matmul %129, %109, %cst_50 {dimension_numbers = #tpu.dot_dimension_numbers<[2], [1], [1], [2], [0, 0, 0, 1, 1, 2], [0], [0]>} : vector<4x8x8xbf16>, vector<4x8x8xbf16>, vector<4x8x8xf32> -> vector<4x8x8xf32>
    %131 = tpu.transpose %130, [1, 0, 2] : vector<4x8x8xf32> -> vector<8x4x8xf32>
    %132 = vector.shape_cast %131 : vector<8x4x8xf32> to vector<8x32xf32>
    %133 = arith.truncf %132 : vector<8x32xf32> to vector<8x32xbf16>
    %c0_51 = arith.constant 0 : index
    %c0_52 = arith.constant 0 : index
    %134 = vector.load %arg11[%c0_51, %c0_52] : memref<32x32xbf16, #tpu.memory_space<vmem>>, vector<32x32xbf16>
    %cst_53 = arith.constant dense<0.000000e+00> : vector<8x32xf32>
    %135 = tpu.matmul %133, %134, %cst_53 {dimension_numbers = #tpu.dot_dimension_numbers<[1], [0], [0], [1], [0, 0, 1, 1], [], []>} : vector<8x32xbf16>, vector<32x32xbf16>, vector<8x32xf32> -> vector<8x32xf32>
    %c0_54 = arith.constant 0 : index
    %c0_55 = arith.constant 0 : index
    %136 = vector.load %arg12[%c0_54, %c0_55] : memref<1x32xf32, #tpu.memory_space<vmem>>, vector<1x32xf32>
    %137 = vector.broadcast %136 : vector<1x32xf32> to vector<8x32xf32>
    %138 = arith.addf %135, %137 : vector<8x32xf32>
    %139 = arith.addf %83, %138 : vector<8x32xf32>
    %140 = vector.extract_strided_slice %4 {offsets = [1, 0], sizes = [1, 32], strides = [1, 1]} : vector<3x32xf32> to vector<1x32xf32>
    %141 = vector.shape_cast %140 : vector<1x32xf32> to vector<32xf32>
    %142 = vector.extract_strided_slice %5 {offsets = [1, 0], sizes = [1, 32], strides = [1, 1]} : vector<3x32xf32> to vector<1x32xf32>
    %143 = vector.shape_cast %142 : vector<1x32xf32> to vector<32xf32>
    %cst_56 = arith.constant dense<0.000000e+00> : vector<8xf32>
    %144 = vector.multi_reduction <add>, %139, %cst_56 [1] : vector<8x32xf32> to vector<8xf32>
    %145 = vector.shape_cast %144 : vector<8xf32> to vector<8x1xf32>
    %cst_57 = arith.constant 3.200000e+01 : f32
    %146 = vector.broadcast %cst_57 : f32 to vector<8x1xf32>
    %147 = arith.divf %145, %146 : vector<8x1xf32>
    %148 = vector.broadcast %147 : vector<8x1xf32> to vector<8x32xf32>
    %149 = arith.subf %139, %148 : vector<8x32xf32>
    %150 = arith.mulf %149, %149 : vector<8x32xf32>
    %cst_58 = arith.constant dense<0.000000e+00> : vector<8xf32>
    %151 = vector.multi_reduction <add>, %150, %cst_58 [1] : vector<8x32xf32> to vector<8xf32>
    %152 = vector.shape_cast %151 : vector<8xf32> to vector<8x1xf32>
    %cst_59 = arith.constant 3.200000e+01 : f32
    %153 = vector.broadcast %cst_59 : f32 to vector<8x1xf32>
    %154 = arith.divf %152, %153 : vector<8x1xf32>
    %155 = vector.broadcast %147 : vector<8x1xf32> to vector<8x32xf32>
    %156 = arith.subf %139, %155 : vector<8x32xf32>
    %cst_60 = arith.constant 9.99999974E-6 : f32
    %157 = vector.broadcast %cst_60 : f32 to vector<8x1xf32>
    %158 = arith.addf %154, %157 : vector<8x1xf32>
    %159 = math.rsqrt %158 : vector<8x1xf32>
    %160 = vector.broadcast %159 : vector<8x1xf32> to vector<8x32xf32>
    %161 = arith.mulf %156, %160 : vector<8x32xf32>
    %162 = vector.shape_cast %141 : vector<32xf32> to vector<1x32xf32>
    %163 = vector.broadcast %162 : vector<1x32xf32> to vector<8x32xf32>
    %164 = arith.mulf %161, %163 : vector<8x32xf32>
    %165 = vector.shape_cast %143 : vector<32xf32> to vector<1x32xf32>
    %166 = vector.broadcast %165 : vector<1x32xf32> to vector<8x32xf32>
    %167 = arith.addf %164, %166 : vector<8x32xf32>
    %168 = arith.truncf %167 : vector<8x32xf32> to vector<8x32xbf16>
    %c0_61 = arith.constant 0 : index
    %c0_62 = arith.constant 0 : index
    %169 = vector.load %arg13[%c0_61, %c0_62] : memref<32x64xbf16, #tpu.memory_space<vmem>>, vector<32x64xbf16>
    %cst_63 = arith.constant dense<0.000000e+00> : vector<8x64xf32>
    %170 = tpu.matmul %168, %169, %cst_63 {dimension_numbers = #tpu.dot_dimension_numbers<[1], [0], [0], [1], [0, 0, 1, 1], [], []>} : vector<8x32xbf16>, vector<32x64xbf16>, vector<8x64xf32> -> vector<8x64xf32>
    %c0_64 = arith.constant 0 : index
    %c0_65 = arith.constant 0 : index
    %171 = vector.load %arg14[%c0_64, %c0_65] : memref<1x64xf32, #tpu.memory_space<vmem>>, vector<1x64xf32>
    %172 = vector.broadcast %171 : vector<1x64xf32> to vector<8x64xf32>
    %173 = arith.addf %170, %172 : vector<8x64xf32>
    %cst_66 = arith.constant 0.000000e+00 : f32
    %174 = vector.broadcast %cst_66 : f32 to vector<8x64xf32>
    %175 = arith.maximumf %173, %174 : vector<8x64xf32>
    %176 = arith.truncf %175 : vector<8x64xf32> to vector<8x64xbf16>
    %c0_67 = arith.constant 0 : index
    %c0_68 = arith.constant 0 : index
    %177 = vector.load %arg15[%c0_67, %c0_68] : memref<64x32xbf16, #tpu.memory_space<vmem>>, vector<64x32xbf16>
    %cst_69 = arith.constant dense<0.000000e+00> : vector<8x32xf32>
    %178 = tpu.matmul %176, %177, %cst_69 {dimension_numbers = #tpu.dot_dimension_numbers<[1], [0], [0], [1], [0, 0, 1, 1], [], []>} : vector<8x64xbf16>, vector<64x32xbf16>, vector<8x32xf32> -> vector<8x32xf32>
    %c0_70 = arith.constant 0 : index
    %c0_71 = arith.constant 0 : index
    %179 = vector.load %arg16[%c0_70, %c0_71] : memref<1x32xf32, #tpu.memory_space<vmem>>, vector<1x32xf32>
    %180 = vector.broadcast %179 : vector<1x32xf32> to vector<8x32xf32>
    %181 = arith.addf %178, %180 : vector<8x32xf32>
    %182 = arith.addf %167, %181 : vector<8x32xf32>
    %183 = vector.extract_strided_slice %4 {offsets = [2, 0], sizes = [1, 32], strides = [1, 1]} : vector<3x32xf32> to vector<1x32xf32>
    %184 = vector.shape_cast %183 : vector<1x32xf32> to vector<32xf32>
    %185 = vector.extract_strided_slice %5 {offsets = [2, 0], sizes = [1, 32], strides = [1, 1]} : vector<3x32xf32> to vector<1x32xf32>
    %186 = vector.shape_cast %185 : vector<1x32xf32> to vector<32xf32>
    %cst_72 = arith.constant dense<0.000000e+00> : vector<8xf32>
    %187 = vector.multi_reduction <add>, %182, %cst_72 [1] : vector<8x32xf32> to vector<8xf32>
    %188 = vector.shape_cast %187 : vector<8xf32> to vector<8x1xf32>
    %cst_73 = arith.constant 3.200000e+01 : f32
    %189 = vector.broadcast %cst_73 : f32 to vector<8x1xf32>
    %190 = arith.divf %188, %189 : vector<8x1xf32>
    %191 = vector.broadcast %190 : vector<8x1xf32> to vector<8x32xf32>
    %192 = arith.subf %182, %191 : vector<8x32xf32>
    %193 = arith.mulf %192, %192 : vector<8x32xf32>
    %cst_74 = arith.constant dense<0.000000e+00> : vector<8xf32>
    %194 = vector.multi_reduction <add>, %193, %cst_74 [1] : vector<8x32xf32> to vector<8xf32>
    %195 = vector.shape_cast %194 : vector<8xf32> to vector<8x1xf32>
    %cst_75 = arith.constant 3.200000e+01 : f32
    %196 = vector.broadcast %cst_75 : f32 to vector<8x1xf32>
    %197 = arith.divf %195, %196 : vector<8x1xf32>
    %198 = vector.broadcast %190 : vector<8x1xf32> to vector<8x32xf32>
    %199 = arith.subf %182, %198 : vector<8x32xf32>
    %cst_76 = arith.constant 9.99999974E-6 : f32
    %200 = vector.broadcast %cst_76 : f32 to vector<8x1xf32>
    %201 = arith.addf %197, %200 : vector<8x1xf32>
    %202 = math.rsqrt %201 : vector<8x1xf32>
    %203 = vector.broadcast %202 : vector<8x1xf32> to vector<8x32xf32>
    %204 = arith.mulf %199, %203 : vector<8x32xf32>
    %205 = vector.shape_cast %184 : vector<32xf32> to vector<1x32xf32>
    %206 = vector.broadcast %205 : vector<1x32xf32> to vector<8x32xf32>
    %207 = arith.mulf %204, %206 : vector<8x32xf32>
    %208 = vector.shape_cast %186 : vector<32xf32> to vector<1x32xf32>
    %209 = vector.broadcast %208 : vector<1x32xf32> to vector<8x32xf32>
    %210 = arith.addf %207, %209 : vector<8x32xf32>
    %c0_77 = arith.constant 0 : index
    %c0_78 = arith.constant 0 : index
    %c0_79 = arith.constant 0 : index
    %211 = vector.load %arg19[%c0_77, %c0_78, %c0_79] : memref<1x8x32xf32, #tpu.memory_space<vmem>>, vector<1x8x32xf32>
    %212 = vector.shape_cast %211 : vector<1x8x32xf32> to vector<8x32xf32>
    %213 = vector.shape_cast %210 : vector<8x32xf32> to vector<1x8x32xf32>
    tpu.vector_store %arg19[%c0_77, %c0_78, %c0_79], %213 {strides = array<i32>} : memref<1x8x32xf32, #tpu.memory_space<vmem>>, vector<1x8x32xf32>,
    return
  }
  func.func @transform_0(%arg0: i32) -> (i32, i32, i32) {
    %c0_i32 = arith.constant 0 : i32
    %c0_i32_0 = arith.constant 0 : i32
    %c0_i32_1 = arith.constant 0 : i32
    return %arg0, %c0_i32, %c0_i32_0 : i32, i32, i32
  }
  func.func @transform_1(%arg0: i32) -> (i32, i32, i32) {
    %c0_i32 = arith.constant 0 : i32
    %c0_i32_0 = arith.constant 0 : i32
    %c0_i32_1 = arith.constant 0 : i32
    return %arg0, %c0_i32, %c0_i32_0 : i32, i32, i32
  }
  func.func @transform_2(%arg0: i32) -> (i32, i32) {
    %c0_i32 = arith.constant 0 : i32
    %c0_i32_0 = arith.constant 0 : i32
    %c0_i32_1 = arith.constant 0 : i32
    return %c0_i32, %c0_i32_0 : i32, i32
  }
  func.func @transform_3(%arg0: i32) -> (i32, i32) {
    %c0_i32 = arith.constant 0 : i32
    %c0_i32_0 = arith.constant 0 : i32
    %c0_i32_1 = arith.constant 0 : i32
    return %c0_i32, %c0_i32_0 : i32, i32
  }
  func.func @transform_4(%arg0: i32) -> (i32, i32) {
    %c0_i32 = arith.constant 0 : i32
    %c0_i32_0 = arith.constant 0 : i32
    %c0_i32_1 = arith.constant 0 : i32
    return %c0_i32, %c0_i32_0 : i32, i32
  }
  func.func @transform_5(%arg0: i32) -> (i32, i32) {
    %c0_i32 = arith.constant 0 : i32
    %c0_i32_0 = arith.constant 0 : i32
    %c0_i32_1 = arith.constant 0 : i32
    return %c0_i32, %c0_i32_0 : i32, i32
  }
  func.func @transform_6(%arg0: i32) -> (i32, i32) {
    %c0_i32 = arith.constant 0 : i32
    %c0_i32_0 = arith.constant 0 : i32
    %c0_i32_1 = arith.constant 0 : i32
    return %c0_i32, %c0_i32_0 : i32, i32
  }
  func.func @transform_7(%arg0: i32) -> (i32, i32) {
    %c0_i32 = arith.constant 0 : i32
    %c0_i32_0 = arith.constant 0 : i32
    %c0_i32_1 = arith.constant 0 : i32
    return %c0_i32, %c0_i32_0 : i32, i32
  }
  func.func @transform_8(%arg0: i32) -> (i32, i32) {
    %c0_i32 = arith.constant 0 : i32
    %c0_i32_0 = arith.constant 0 : i32
    %c0_i32_1 = arith.constant 0 : i32
    return %c0_i32, %c0_i32_0 : i32, i32
  }
  func.func @transform_9(%arg0: i32) -> (i32, i32) {
    %c0_i32 = arith.constant 0 : i32
    %c0_i32_0 = arith.constant 0 : i32
    %c0_i32_1 = arith.constant 0 : i32
    return %c0_i32, %c0_i32_0 : i32, i32
  }
  func.func @transform_10(%arg0: i32) -> (i32, i32) {
    %c0_i32 = arith.constant 0 : i32
    %c0_i32_0 = arith.constant 0 : i32
    %c0_i32_1 = arith.constant 0 : i32
    return %c0_i32, %c0_i32_0 : i32, i32
  }
  func.func @transform_11(%arg0: i32) -> (i32, i32) {
    %c0_i32 = arith.constant 0 : i32
    %c0_i32_0 = arith.constant 0 : i32
    %c0_i32_1 = arith.constant 0 : i32
    return %c0_i32, %c0_i32_0 : i32, i32
  }
  func.func @transform_12(%arg0: i32) -> (i32, i32) {
    %c0_i32 = arith.constant 0 : i32
    %c0_i32_0 = arith.constant 0 : i32
    %c0_i32_1 = arith.constant 0 : i32
    return %c0_i32, %c0_i32_0 : i32, i32
  }
  func.func @transform_13(%arg0: i32) -> (i32, i32) {
    %c0_i32 = arith.constant 0 : i32
    %c0_i32_0 = arith.constant 0 : i32
    %c0_i32_1 = arith.constant 0 : i32
    return %c0_i32, %c0_i32_0 : i32, i32
  }
  func.func @transform_14(%arg0: i32) -> (i32, i32) {
    %c0_i32 = arith.constant 0 : i32
    %c0_i32_0 = arith.constant 0 : i32
    %c0_i32_1 = arith.constant 0 : i32
    return %c0_i32, %c0_i32_0 : i32, i32
  }
  func.func @transform_15(%arg0: i32) -> (i32, i32) {
    %c0_i32 = arith.constant 0 : i32
    %c0_i32_0 = arith.constant 0 : i32
    %c0_i32_1 = arith.constant 0 : i32
    return %c0_i32, %c0_i32_0 : i32, i32
  }
  func.func @transform_16(%arg0: i32) -> (i32, i32) {
    %c0_i32 = arith.constant 0 : i32
    %c0_i32_0 = arith.constant 0 : i32
    %c0_i32_1 = arith.constant 0 : i32
    return %c0_i32, %c0_i32_0 : i32, i32
  }
  func.func @transform_17(%arg0: i32) -> (i32, i32) {
    %c0_i32 = arith.constant 0 : i32
    %c0_i32_0 = arith.constant 0 : i32
    %c0_i32_1 = arith.constant 0 : i32
    return %c0_i32, %c0_i32_0 : i32, i32
  }
  func.func @transform_18(%arg0: i32) -> (i32, i32, i32) {
    %c0_i32 = arith.constant 0 : i32
    %c0_i32_0 = arith.constant 0 : i32
    %c0_i32_1 = arith.constant 0 : i32
    return %arg0, %c0_i32, %c0_i32_0 : i32, i32, i32
  }
  func.func @transform_19(%arg0: i32) -> (i32, i32, i32, i32) {
    %c0_i32 = arith.constant 0 : i32
    %c0_i32_0 = arith.constant 0 : i32
    %c0_i32_1 = arith.constant 0 : i32
    %c0_i32_2 = arith.constant 0 : i32
    return %arg0, %c0_i32, %c0_i32_0, %c0_i32_1 : i32, i32, i32, i32
  }
  func.func @transform_20(%arg0: i32) -> (i32, i32, i32, i32) {
    %c0_i32 = arith.constant 0 : i32
    %c0_i32_0 = arith.constant 0 : i32
    %c0_i32_1 = arith.constant 0 : i32
    %c0_i32_2 = arith.constant 0 : i32
    return %arg0, %c0_i32, %c0_i32_0, %c0_i32_1 : i32, i32, i32, i32
  }
}

</mosaic_0001>

<llo_original>
// kernel: tpu_custom_call.1
$region0: #{tpu_custom_call.1}
  #allocation0 [shape = 'u32[]', space=smem, size = 0x4, offset = 0x4, fixed_abs, tag = 'smem constant byte address 0x4 - core index']
  #allocation1 [shape = 'u32[144,128]{1,0:T(1,128)}', space=vmem, size = 0x12000, scoped, tag = 'internal scratch']
  %s0 = inlined_call_operand.hbm [shape: bf16[2,8,32], index: 0, kind: input, shape index: {}]
  %s1 = inlined_call_operand.hbm [shape: bf16[2,8,32], index: 1, kind: input, shape index: {}]
  %s2 = inlined_call_operand.hbm [shape: f32[8,8], index: 2, kind: input, shape index: {}]
  %s3 = inlined_call_operand.hbm [shape: f32[8,8], index: 3, kind: input, shape index: {}]
  %s4 = inlined_call_operand.vmem [shape: bf16[32,96], index: 4, kind: input, shape index: {}]
  %s5 = inlined_call_operand.hbm [shape: f32[1,96], index: 5, kind: input, shape index: {}]
  %s6 = inlined_call_operand.vmem [shape: bf16[32,32], index: 6, kind: input, shape index: {}]
  %s7 = inlined_call_operand.hbm [shape: f32[1,32], index: 7, kind: input, shape index: {}]
  %s8 = inlined_call_operand.vmem [shape: bf16[32,96], index: 8, kind: input, shape index: {}]
  %s9 = inlined_call_operand.hbm [shape: f32[1,96], index: 9, kind: input, shape index: {}]
  %s10 = inlined_call_operand.vmem [shape: bf16[32,32], index: 10, kind: input, shape index: {}]
  %s11 = inlined_call_operand.hbm [shape: f32[1,32], index: 11, kind: input, shape index: {}]
  %s12 = inlined_call_operand.hbm [shape: bf16[32,64], index: 12, kind: input, shape index: {}]
  %s13 = inlined_call_operand.vmem [shape: f32[1,64], index: 13, kind: input, shape index: {}]
  %s14 = inlined_call_operand.vmem [shape: bf16[64,32], index: 14, kind: input, shape index: {}]
  %s15 = inlined_call_operand.vmem [shape: f32[1,32], index: 15, kind: input, shape index: {}]
  %s16 = inlined_call_operand.vmem [shape: f32[3,32], index: 16, kind: input, shape index: {}]
  %s17 = inlined_call_operand.vmem [shape: f32[3,32], index: 17, kind: input, shape index: {}]
  %s18 = inlined_call_operand.hbm [shape: f32[2,8,32], index: 18, kind: output, shape index: {0}]
  %s19 = inlined_call_operand.hbm [shape: bf16[2,4,8,8], index: 19, kind: output, shape index: {1}]
  %s20 = inlined_call_operand.hbm [shape: bf16[2,4,8,8], index: 20, kind: output, shape index: {2}]
  %21 = xla_tuple %s18, %s19, %s20
  %s22 = sld [smem:[#allocation0]]
  $region157: #{tpu_custom_call.1} parent=0
    _
  %s24 = ssub.s32 1, %s22
  %s25 = scalar_select 0, %s24, %s22
  $region1: #{tpu_custom_call.1} parent=0
    #allocation2 [shape = 'u8[4096]{0}', space=vmem, size = 0x1000, scoped, tag = 'input window, operand 0']
    #allocation3 [shape = 's32[2]{0}', space=sflag, size = 0x8, scoped, tag = 'scoped memory for tpu_custom_call.1']
    #allocation4 [shape = 's32[2]{0}', space=sflag, size = 0x8, scoped, tag = 'scoped memory for tpu_custom_call.1']
    #allocation5 [shape = 'u8[4096]{0}', space=vmem, size = 0x1000, scoped, tag = 'input window, operand 1']
    #allocation6 [shape = 's32[2]{0}', space=sflag, size = 0x8, scoped, tag = 'scoped memory for tpu_custom_call.1']
    #allocation7 [shape = 'u8[4096]{0}', space=vmem, size = 0x1000, scoped, tag = 'input window, operand 2, single buffered']
    #allocation8 [shape = 'u8[4096]{0}', space=vmem, size = 0x1000, scoped, tag = 'input window, operand 3, single buffered']
    #allocation9 [shape = 's32[1]{0}', space=sflag, size = 0x4, scoped, tag = 'scoped memory for tpu_custom_call.1']
    #allocation10 [shape = 'u8[512]{0}', space=vmem, size = 0x400, scoped, tag = 'input window, operand 5, single buffered']
    #allocation11 [shape = 'u8[512]{0}', space=vmem, size = 0x400, scoped, tag = 'input window, operand 7, single buffered']
    #allocation12 [shape = 's32[1]{0}', space=sflag, size = 0x4, scoped, tag = 'scoped memory for tpu_custom_call.1']
    #allocation13 [shape = 'u8[512]{0}', space=vmem, size = 0x400, scoped, tag = 'input window, operand 9, single buffered']
    #allocation14 [shape = 'u8[512]{0}', space=vmem, size = 0x400, scoped, tag = 'input window, operand 11, single buffered']
    #allocation15 [shape = 's32[1]{0}', space=sflag, size = 0x4, scoped, tag = 'scoped memory for tpu_custom_call.1']
    #allocation16 [shape = 'u8[8192]{0}', space=vmem, size = 0x2000, scoped, tag = 'input window, operand 12, single buffered']
    #allocation17 [shape = 'u8[8192]{0}', space=vmem, size = 0x2000, scoped, tag = 'output window, operand 0']
    #allocation18 [shape = 'u8[16384]{0}', space=vmem, size = 0x4000, scoped, tag = 'output window, operand 1']
    #allocation19 [shape = 's32[2]{0}', space=sflag, size = 0x8, scoped, tag = 'scoped memory for tpu_custom_call.1']
    #allocation20 [shape = 'u8[16384]{0}', space=vmem, size = 0x4000, scoped, tag = 'output window, operand 2']
    %26 = vsyncpa [#allocation3], 0
    %s27 = scalar_lea.sflag [#allocation3], 1
    %28 = vsyncpa %s27, 0
    %29 = vsyncpa [#allocation6], 0
    %s30 = scalar_lea.sflag [#allocation6], 1
    %31 = vsyncpa %s30, 0
    %32 = vsyncpa [#allocation9], 0
    %33 = vsyncpa [#allocation12], 0
    %34 = vsyncpa [#allocation15], 0
    %35 = vsyncpa [#allocation4], 0
    %s36 = scalar_lea.sflag [#allocation4], 1
    %37 = vsyncpa %s36, 0
    %38 = vsyncpa [#allocation19], 0
    %s39 = scalar_lea.sflag [#allocation19], 1
    %40 = vsyncpa %s39, 0
    loop: start=0, step=1, limit=4
    $region2: #{tpu_custom_call.1} parent=1 // loop_pre_header
      _
    $region3: #{tpu_custom_call.1} parent=1 // loop_header
      %s42 = sphi 0, %s46
      %p43 = scmp.ge.s32.totalorder %s42, 4
      %s52 = sphi 0, %s54
      %s55 = sphi 0, %s52
      %s56 = sphi 0, %s55
      %s72 = sphi 0, %s56
      %s78 = sphi 0, %s80
      %s81 = sphi 0, %s78
      %s82 = sphi 0, %s81
      %s98 = sphi 0, %s82
      %s102 = sphi 0, %s102
      %s104 = sphi 0, %s102
      %s105 = sphi 0, %s104
      %s119 = sphi 0, %s105
      %s123 = sphi 0, %s123
      %s125 = sphi 0, %s123
      %s126 = sphi 0, %s125
      %s140 = sphi 0, %s126
      %s144 = sphi 0, %s144
      %s146 = sphi 0, %s144
      %s147 = sphi 0, %s146
      %s161 = sphi 0, %s147
      %s165 = sphi 0, %s165
      %s167 = sphi 0, %s165
      %s168 = sphi 0, %s167
      %s182 = sphi 0, %s168
      %s186 = sphi 0, %s186
      %s188 = sphi 0, %s186
      %s189 = sphi 0, %s188
      %s203 = sphi 0, %s189
      %s207 = sphi 0, %s207
      %s209 = sphi 0, %s207
      %s210 = sphi 0, %s209
      %s224 = sphi 0, %s210
      %s228 = sphi 0, %s228
      %s230 = sphi 0, %s228
      %s231 = sphi 0, %s230
      %s245 = sphi 0, %s231
      %s249 = sphi 0, %s249
      %s251 = sphi 0, %s249
      %s252 = sphi 0, %s251
      %s266 = sphi 0, %s252
      %s270 = sphi 0, %s270
      %s272 = sphi 0, %s270
      %s273 = sphi 0, %s272
      %s287 = sphi 0, %s273
      %s291 = sphi 0, %s291
      %s293 = sphi 0, %s291
      %s294 = sphi 0, %s293
      %s308 = sphi 0, %s294
      %s312 = sphi 0, %s312
      %s314 = sphi 0, %s312
      %s315 = sphi 0, %s314
      %s329 = sphi 0, %s315
      %s333 = sphi 0, %s333
      %s335 = sphi 0, %s333
      %s336 = sphi 0, %s335
      %s350 = sphi 0, %s336
      %s354 = sphi 0, %s354
      %s356 = sphi 0, %s354
      %s357 = sphi 0, %s356
      %s371 = sphi 0, %s357
      %s375 = sphi 0, %s375
      %s377 = sphi 0, %s375
      %s378 = sphi 0, %s377
      %s392 = sphi 0, %s378
      %s396 = sphi 0, %s396
      %s398 = sphi 0, %s396
      %s399 = sphi 0, %s398
      %s413 = sphi 0, %s399
      %s417 = sphi 0, %s417
      %s419 = sphi 0, %s417
      %s420 = sphi 0, %s419
      %s434 = sphi 0, %s420
      %s440 = sphi 0, %s442
      %s443 = sphi 0, %s440
      %s444 = sphi 0, %s443
      %s460 = sphi 0, %s444
      %s466 = sphi 0, %s468
      %s469 = sphi 0, %s466
      %s470 = sphi 0, %s469
      %s486 = sphi 0, %s470
      %s492 = sphi 0, %s494
      %s495 = sphi 0, %s492
      %s496 = sphi 0, %s495
      %s512 = sphi 0, %s496
    $region4: #{tpu_custom_call.1} parent=1 // loop_header_branch
      %45 = sbr.rel (%p43) target = $region8
    $region5: #{tpu_custom_call.1} parent=1 // loop_body
      %s47 = ssub.s32 %s42, 1
      %s48 = ssub.s32 %s42, 2
      %s49 = sadd.s32 %s42, 1
      %s50 = ssub.s32 %s42, %s49
      %p51 = scmp.eq.s32.totalorder %s50, 0
      %s53 = sadd.s32 %s52, 1
      %s54 = scalar_select %p51, %s52, %s53
      %p57 = pneg %p51
      %p58 = scmp.eq.s32.totalorder %s42, 1
      %p59 = por %p57, %p58
      %p60 = scmp.ne.s32.totalorder %s52, %s55
      %p61 = scmp.eq.s32.totalorder %s42, 0
      %p62 = por %p60, %p61
      %p63 = scmp.ne.s32.totalorder %s52, %s55
      %p64 = scmp.eq.s32.totalorder %s47, 1
      %p65 = por %p63, %p64
      %p66 = scmp.ne.s32.totalorder %s55, %s56
      %p67 = scmp.eq.s32.totalorder %s47, 0
      %p68 = por %p66, %p67
      %p69 = scmp.ne.s32.totalorder %s55, %s56
      %p70 = scmp.eq.s32.totalorder %s48, 1
      %p71 = por %p69, %p70
      %p73 = scmp.ne.s32.totalorder %s56, %s72
      %p74 = scmp.eq.s32.totalorder %s48, 0
      %p75 = por %p73, %p74
      %s76 = ssub.s32 %s42, %s49
      %p77 = scmp.eq.s32.totalorder %s76, 0
      %s79 = sadd.s32 %s78, 1
      %s80 = scalar_select %p77, %s78, %s79
      %p83 = pneg %p77
      %p84 = scmp.eq.s32.totalorder %s42, 1
      %p85 = por %p83, %p84
      %p86 = scmp.ne.s32.totalorder %s78, %s81
      %p87 = scmp.eq.s32.totalorder %s42, 0
      %p88 = por %p86, %p87
      %p89 = scmp.ne.s32.totalorder %s78, %s81
      %p90 = scmp.eq.s32.totalorder %s47, 1
      %p91 = por %p89, %p90
      %p92 = scmp.ne.s32.totalorder %s81, %s82
      %p93 = scmp.eq.s32.totalorder %s47, 0
      %p94 = por %p92, %p93
      %p95 = scmp.ne.s32.totalorder %s81, %s82
      %p96 = scmp.eq.s32.totalorder %s48, 1
      %p97 = por %p95, %p96
      %p99 = scmp.ne.s32.totalorder %s82, %s98
      %p100 = scmp.eq.s32.totalorder %s48, 0
      %p101 = por %p99, %p100
      %s103 = sadd.s32 %s102, 1
      %p106 = scmp.eq.s32.totalorder %s42, 1
      %p107 = scmp.ne.s32.totalorder %s102, %s104
      %p108 = scmp.eq.s32.totalorder %s42, 0
      %p109 = por %p107, %p108
      %p110 = scmp.ne.s32.totalorder %s102, %s104
      %p111 = scmp.eq.s32.totalorder %s47, 1
      %p112 = por %p110, %p111
      %p113 = scmp.ne.s32.totalorder %s104, %s105
      %p114 = scmp.eq.s32.totalorder %s47, 0
      %p115 = por %p113, %p114
      %p116 = scmp.ne.s32.totalorder %s104, %s105
      %p117 = scmp.eq.s32.totalorder %s48, 1
      %p118 = por %p116, %p117
      %p120 = scmp.ne.s32.totalorder %s105, %s119
      %p121 = scmp.eq.s32.totalorder %s48, 0
      %p122 = por %p120, %p121
      %s124 = sadd.s32 %s123, 1
      %p127 = scmp.eq.s32.totalorder %s42, 1
      %p128 = scmp.ne.s32.totalorder %s123, %s125
      %p129 = scmp.eq.s32.totalorder %s42, 0
      %p130 = por %p128, %p129
      %p131 = scmp.ne.s32.totalorder %s123, %s125
      %p132 = scmp.eq.s32.totalorder %s47, 1
      %p133 = por %p131, %p132
      %p134 = scmp.ne.s32.totalorder %s125, %s126
      %p135 = scmp.eq.s32.totalorder %s47, 0
      %p136 = por %p134, %p135
      %p137 = scmp.ne.s32.totalorder %s125, %s126
      %p138 = scmp.eq.s32.totalorder %s48, 1
      %p139 = por %p137, %p138
      %p141 = scmp.ne.s32.totalorder %s126, %s140
      %p142 = scmp.eq.s32.totalorder %s48, 0
      %p143 = por %p141, %p142
      %s145 = sadd.s32 %s144, 1
      %p148 = scmp.eq.s32.totalorder %s42, 1
      %p149 = scmp.ne.s32.totalorder %s144, %s146
      %p150 = scmp.eq.s32.totalorder %s42, 0
      %p151 = por %p149, %p150
      %p152 = scmp.ne.s32.totalorder %s144, %s146
      %p153 = scmp.eq.s32.totalorder %s47, 1
      %p154 = por %p152, %p153
      %p155 = scmp.ne.s32.totalorder %s146, %s147
      %p156 = scmp.eq.s32.totalorder %s47, 0
      %p157 = por %p155, %p156
      %p158 = scmp.ne.s32.totalorder %s146, %s147
      %p159 = scmp.eq.s32.totalorder %s48, 1
      %p160 = por %p158, %p159
      %p162 = scmp.ne.s32.totalorder %s147, %s161
      %p163 = scmp.eq.s32.totalorder %s48, 0
      %p164 = por %p162, %p163
      %s166 = sadd.s32 %s165, 1
      %p169 = scmp.eq.s32.totalorder %s42, 1
      %p170 = scmp.ne.s32.totalorder %s165, %s167
      %p171 = scmp.eq.s32.totalorder %s42, 0
      %p172 = por %p170, %p171
      %p173 = scmp.ne.s32.totalorder %s165, %s167
      %p174 = scmp.eq.s32.totalorder %s47, 1
      %p175 = por %p173, %p174
      %p176 = scmp.ne.s32.totalorder %s167, %s168
      %p177 = scmp.eq.s32.totalorder %s47, 0
      %p178 = por %p176, %p177
      %p179 = scmp.ne.s32.totalorder %s167, %s168
      %p180 = scmp.eq.s32.totalorder %s48, 1
      %p181 = por %p179, %p180
      %p183 = scmp.ne.s32.totalorder %s168, %s182
      %p184 = scmp.eq.s32.totalorder %s48, 0
      %p185 = por %p183, %p184
      %s187 = sadd.s32 %s186, 1
      %p190 = scmp.eq.s32.totalorder %s42, 1
      %p191 = scmp.ne.s32.totalorder %s186, %s188
      %p192 = scmp.eq.s32.totalorder %s42, 0
      %p193 = por %p191, %p192
      %p194 = scmp.ne.s32.totalorder %s186, %s188
      %p195 = scmp.eq.s32.totalorder %s47, 1
      %p196 = por %p194, %p195
      %p197 = scmp.ne.s32.totalorder %s188, %s189
      %p198 = scmp.eq.s32.totalorder %s47, 0
      %p199 = por %p197, %p198
      %p200 = scmp.ne.s32.totalorder %s188, %s189
      %p201 = scmp.eq.s32.totalorder %s48, 1
      %p202 = por %p200, %p201
      %p204 = scmp.ne.s32.totalorder %s189, %s203
      %p205 = scmp.eq.s32.totalorder %s48, 0
      %p206 = por %p204, %p205
      %s208 = sadd.s32 %s207, 1
      %p211 = scmp.eq.s32.totalorder %s42, 1
      %p212 = scmp.ne.s32.totalorder %s207, %s209
      %p213 = scmp.eq.s32.totalorder %s42, 0
      %p214 = por %p212, %p213
      %p215 = scmp.ne.s32.totalorder %s207, %s209
      %p216 = scmp.eq.s32.totalorder %s47, 1
      %p217 = por %p215, %p216
      %p218 = scmp.ne.s32.totalorder %s209, %s210
      %p219 = scmp.eq.s32.totalorder %s47, 0
      %p220 = por %p218, %p219
      %p221 = scmp.ne.s32.totalorder %s209, %s210
      %p222 = scmp.eq.s32.totalorder %s48, 1
      %p223 = por %p221, %p222
      %p225 = scmp.ne.s32.totalorder %s210, %s224
      %p226 = scmp.eq.s32.totalorder %s48, 0
      %p227 = por %p225, %p226
      %s229 = sadd.s32 %s228, 1
      %p232 = scmp.eq.s32.totalorder %s42, 1
      %p233 = scmp.ne.s32.totalorder %s228, %s230
      %p234 = scmp.eq.s32.totalorder %s42, 0
      %p235 = por %p233, %p234
      %p236 = scmp.ne.s32.totalorder %s228, %s230
      %p237 = scmp.eq.s32.totalorder %s47, 1
      %p238 = por %p236, %p237
      %p239 = scmp.ne.s32.totalorder %s230, %s231
      %p240 = scmp.eq.s32.totalorder %s47, 0
      %p241 = por %p239, %p240
      %p242 = scmp.ne.s32.totalorder %s230, %s231
      %p243 = scmp.eq.s32.totalorder %s48, 1
      %p244 = por %p242, %p243
      %p246 = scmp.ne.s32.totalorder %s231, %s245
      %p247 = scmp.eq.s32.totalorder %s48, 0
      %p248 = por %p246, %p247
      %s250 = sadd.s32 %s249, 1
      %p253 = scmp.eq.s32.totalorder %s42, 1
      %p254 = scmp.ne.s32.totalorder %s249, %s251
      %p255 = scmp.eq.s32.totalorder %s42, 0
      %p256 = por %p254, %p255
      %p257 = scmp.ne.s32.totalorder %s249, %s251
      %p258 = scmp.eq.s32.totalorder %s47, 1
      %p259 = por %p257, %p258
      %p260 = scmp.ne.s32.totalorder %s251, %s252
      %p261 = scmp.eq.s32.totalorder %s47, 0
      %p262 = por %p260, %p261
      %p263 = scmp.ne.s32.totalorder %s251, %s252
      %p264 = scmp.eq.s32.totalorder %s48, 1
      %p265 = por %p263, %p264
      %p267 = scmp.ne.s32.totalorder %s252, %s266
      %p268 = scmp.eq.s32.totalorder %s48, 0
      %p269 = por %p267, %p268
      %s271 = sadd.s32 %s270, 1
      %p274 = scmp.eq.s32.totalorder %s42, 1
      %p275 = scmp.ne.s32.totalorder %s270, %s272
      %p276 = scmp.eq.s32.totalorder %s42, 0
      %p277 = por %p275, %p276
      %p278 = scmp.ne.s32.totalorder %s270, %s272
      %p279 = scmp.eq.s32.totalorder %s47, 1
      %p280 = por %p278, %p279
      %p281 = scmp.ne.s32.totalorder %s272, %s273
      %p282 = scmp.eq.s32.totalorder %s47, 0
      %p283 = por %p281, %p282
      %p284 = scmp.ne.s32.totalorder %s272, %s273
      %p285 = scmp.eq.s32.totalorder %s48, 1
      %p286 = por %p284, %p285
      %p288 = scmp.ne.s32.totalorder %s273, %s287
      %p289 = scmp.eq.s32.totalorder %s48, 0
      %p290 = por %p288, %p289
      %s292 = sadd.s32 %s291, 1
      %p295 = scmp.eq.s32.totalorder %s42, 1
      %p296 = scmp.ne.s32.totalorder %s291, %s293
      %p297 = scmp.eq.s32.totalorder %s42, 0
      %p298 = por %p296, %p297
      %p299 = scmp.ne.s32.totalorder %s291, %s293
      %p300 = scmp.eq.s32.totalorder %s47, 1
      %p301 = por %p299, %p300
      %p302 = scmp.ne.s32.totalorder %s293, %s294
      %p303 = scmp.eq.s32.totalorder %s47, 0
      %p304 = por %p302, %p303
      %p305 = scmp.ne.s32.totalorder %s293, %s294
      %p306 = scmp.eq.s32.totalorder %s48, 1
      %p307 = por %p305, %p306
      %p309 = scmp.ne.s32.totalorder %s294, %s308
      %p310 = scmp.eq.s32.totalorder %s48, 0
      %p311 = por %p309, %p310
      %s313 = sadd.s32 %s312, 1
      %p316 = scmp.eq.s32.totalorder %s42, 1
      %p317 = scmp.ne.s32.totalorder %s312, %s314
      %p318 = scmp.eq.s32.totalorder %s42, 0
      %p319 = por %p317, %p318
      %p320 = scmp.ne.s32.totalorder %s312, %s314
      %p321 = scmp.eq.s32.totalorder %s47, 1
      %p322 = por %p320, %p321
      %p323 = scmp.ne.s32.totalorder %s314, %s315
      %p324 = scmp.eq.s32.totalorder %s47, 0
      %p325 = por %p323, %p324
      %p326 = scmp.ne.s32.totalorder %s314, %s315
      %p327 = scmp.eq.s32.totalorder %s48, 1
      %p328 = por %p326, %p327
      %p330 = scmp.ne.s32.totalorder %s315, %s329
      %p331 = scmp.eq.s32.totalorder %s48, 0
      %p332 = por %p330, %p331
      %s334 = sadd.s32 %s333, 1
      %p337 = scmp.eq.s32.totalorder %s42, 1
      %p338 = scmp.ne.s32.totalorder %s333, %s335
      %p339 = scmp.eq.s32.totalorder %s42, 0
      %p340 = por %p338, %p339
      %p341 = scmp.ne.s32.totalorder %s333, %s335
      %p342 = scmp.eq.s32.totalorder %s47, 1
      %p343 = por %p341, %p342
      %p344 = scmp.ne.s32.totalorder %s335, %s336
      %p345 = scmp.eq.s32.totalorder %s47, 0
      %p346 = por %p344, %p345
      %p347 = scmp.ne.s32.totalorder %s335, %s336
      %p348 = scmp.eq.s32.totalorder %s48, 1
      %p349 = por %p347, %p348
      %p351 = scmp.ne.s32.totalorder %s336, %s350
      %p352 = scmp.eq.s32.totalorder %s48, 0
      %p353 = por %p351, %p352
      %s355 = sadd.s32 %s354, 1
      %p358 = scmp.eq.s32.totalorder %s42, 1
      %p359 = scmp.ne.s32.totalorder %s354, %s356
      %p360 = scmp.eq.s32.totalorder %s42, 0
      %p361 = por %p359, %p360
      %p362 = scmp.ne.s32.totalorder %s354, %s356
      %p363 = scmp.eq.s32.totalorder %s47, 1
      %p364 = por %p362, %p363
      %p365 = scmp.ne.s32.totalorder %s356, %s357
      %p366 = scmp.eq.s32.totalorder %s47, 0
      %p367 = por %p365, %p366
      %p368 = scmp.ne.s32.totalorder %s356, %s357
      %p369 = scmp.eq.s32.totalorder %s48, 1
      %p370 = por %p368, %p369
      %p372 = scmp.ne.s32.totalorder %s357, %s371
      %p373 = scmp.eq.s32.totalorder %s48, 0
      %p374 = por %p372, %p373
      %s376 = sadd.s32 %s375, 1
      %p379 = scmp.eq.s32.totalorder %s42, 1
      %p380 = scmp.ne.s32.totalorder %s375, %s377
      %p381 = scmp.eq.s32.totalorder %s42, 0
      %p382 = por %p380, %p381
      %p383 = scmp.ne.s32.totalorder %s375, %s377
      %p384 = scmp.eq.s32.totalorder %s47, 1
      %p385 = por %p383, %p384
      %p386 = scmp.ne.s32.totalorder %s377, %s378
      %p387 = scmp.eq.s32.totalorder %s47, 0
      %p388 = por %p386, %p387
      %p389 = scmp.ne.s32.totalorder %s377, %s378
      %p390 = scmp.eq.s32.totalorder %s48, 1
      %p391 = por %p389, %p390
      %p393 = scmp.ne.s32.totalorder %s378, %s392
      %p394 = scmp.eq.s32.totalorder %s48, 0
      %p395 = por %p393, %p394
      %s397 = sadd.s32 %s396, 1
      %p400 = scmp.eq.s32.totalorder %s42, 1
      %p401 = scmp.ne.s32.totalorder %s396, %s398
      %p402 = scmp.eq.s32.totalorder %s42, 0
      %p403 = por %p401, %p402
      %p404 = scmp.ne.s32.totalorder %s396, %s398
      %p405 = scmp.eq.s32.totalorder %s47, 1
      %p406 = por %p404, %p405
      %p407 = scmp.ne.s32.totalorder %s398, %s399
      %p408 = scmp.eq.s32.totalorder %s47, 0
      %p409 = por %p407, %p408
      %p410 = scmp.ne.s32.totalorder %s398, %s399
      %p411 = scmp.eq.s32.totalorder %s48, 1
      %p412 = por %p410, %p411
      %p414 = scmp.ne.s32.totalorder %s399, %s413
      %p415 = scmp.eq.s32.totalorder %s48, 0
      %p416 = por %p414, %p415
      %s418 = sadd.s32 %s417, 1
      %p421 = scmp.eq.s32.totalorder %s42, 1
      %p422 = scmp.ne.s32.totalorder %s417, %s419
      %p423 = scmp.eq.s32.totalorder %s42, 0
      %p424 = por %p422, %p423
      %p425 = scmp.ne.s32.totalorder %s417, %s419
      %p426 = scmp.eq.s32.totalorder %s47, 1
      %p427 = por %p425, %p426
      %p428 = scmp.ne.s32.totalorder %s419, %s420
      %p429 = scmp.eq.s32.totalorder %s47, 0
      %p430 = por %p428, %p429
      %p431 = scmp.ne.s32.totalorder %s419, %s420
      %p432 = scmp.eq.s32.totalorder %s48, 1
      %p433 = por %p431, %p432
      %p435 = scmp.ne.s32.totalorder %s420, %s434
      %p436 = scmp.eq.s32.totalorder %s48, 0
      %p437 = por %p435, %p436
      %s438 = ssub.s32 %s42, %s49
      %p439 = scmp.eq.s32.totalorder %s438, 0
      %s441 = sadd.s32 %s440, 1
      %s442 = scalar_select %p439, %s440, %s441
      %p445 = pneg %p439
      %p446 = scmp.eq.s32.totalorder %s42, 1
      %p447 = por %p445, %p446
      %p448 = scmp.ne.s32.totalorder %s440, %s443
      %p449 = scmp.eq.s32.totalorder %s42, 0
      %p450 = por %p448, %p449
      %p451 = scmp.ne.s32.totalorder %s440, %s443
      %p452 = scmp.eq.s32.totalorder %s47, 1
      %p453 = por %p451, %p452
      %p454 = scmp.ne.s32.totalorder %s443, %s444
      %p455 = scmp.eq.s32.totalorder %s47, 0
      %p456 = por %p454, %p455
      %p457 = scmp.ne.s32.totalorder %s443, %s444
      %p458 = scmp.eq.s32.totalorder %s48, 1
      %p459 = por %p457, %p458
      %p461 = scmp.ne.s32.totalorder %s444, %s460
      %p462 = scmp.eq.s32.totalorder %s48, 0
      %p463 = por %p461, %p462
      %s464 = ssub.s32 %s42, %s49
      %p465 = scmp.eq.s32.totalorder %s464, 0
      %s467 = sadd.s32 %s466, 1
      %s468 = scalar_select %p465, %s466, %s467
      %p471 = pneg %p465
      %p472 = scmp.eq.s32.totalorder %s42, 1
      %p473 = por %p471, %p472
      %p474 = scmp.ne.s32.totalorder %s466, %s469
      %p475 = scmp.eq.s32.totalorder %s42, 0
      %p476 = por %p474, %p475
      %p477 = scmp.ne.s32.totalorder %s466, %s469
      %p478 = scmp.eq.s32.totalorder %s47, 1
      %p479 = por %p477, %p478
      %p480 = scmp.ne.s32.totalorder %s469, %s470
      %p481 = scmp.eq.s32.totalorder %s47, 0
      %p482 = por %p480, %p481
      %p483 = scmp.ne.s32.totalorder %s469, %s470
      %p484 = scmp.eq.s32.totalorder %s48, 1
      %p485 = por %p483, %p484
      %p487 = scmp.ne.s32.totalorder %s470, %s486
      %p488 = scmp.eq.s32.totalorder %s48, 0
      %p489 = por %p487, %p488
      %s490 = ssub.s32 %s42, %s49
      %p491 = scmp.eq.s32.totalorder %s490, 0
      %s493 = sadd.s32 %s492, 1
      %s494 = scalar_select %p491, %s492, %s493
      %p497 = pneg %p491
      %p498 = scmp.eq.s32.totalorder %s42, 1
      %p499 = por %p497, %p498
      %p500 = scmp.ne.s32.totalorder %s492, %s495
      %p501 = scmp.eq.s32.totalorder %s42, 0
      %p502 = por %p500, %p501
      %p503 = scmp.ne.s32.totalorder %s492, %s495
      %p504 = scmp.eq.s32.totalorder %s47, 1
      %p505 = por %p503, %p504
      %p506 = scmp.ne.s32.totalorder %s495, %s496
      %p507 = scmp.eq.s32.totalorder %s47, 0
      %p508 = por %p506, %p507
      %p509 = scmp.ne.s32.totalorder %s495, %s496
      %p510 = scmp.eq.s32.totalorder %s48, 1
      %p511 = por %p509, %p510
      %p513 = scmp.ne.s32.totalorder %s496, %s512
      %p514 = scmp.eq.s32.totalorder %s48, 0
      %p515 = por %p513, %p514
      %p516 = scmp.le.s32.totalorder 1, %s42
      %p517 = scmp.lt.s32.totalorder %s42, 3
      %p518 = pnand %p516, %p517
      %p519 = pneg %p518
      // Predicated region
      $region9: #{tpu_custom_call.1} parent=5 // pred_check
        _
      $region10: #{tpu_custom_call.1} parent=5 // pred_check_branch
        %521 = sbr.rel (%p518) target = $region12
      $region11: #{tpu_custom_call.1} parent=5 // pred_region
        %s522 = ssub.s32 %s42, 1
        // Predicated region
        $region13: #{tpu_custom_call.1} parent=11 // pred_check
          %p523 = pneg %p115
        $region14: #{tpu_custom_call.1} parent=11 // pred_check_branch
          %525 = sbr.rel (%p523) target = $region16
        $region15: #{tpu_custom_call.1} parent=11 // pred_region
          %s527 = ssub.s32 128, 128
          %528 = vsyncadd [#allocation6], %s527
          %s530 = sshll.u32 [#allocation7], 4
          %s531 = int_to_ptr.vmem [resolvable:$true] %s530
          %533 = dma.hbm_to_vmem [thread:$0]  %s2, 128, %s531, [#allocation6]
        $region16: #{tpu_custom_call.1} parent=11 // pred_fallthru
          _
        // Predicated region
        $region17: #{tpu_custom_call.1} parent=11 // pred_check
          %p534 = pneg %p136
        $region18: #{tpu_custom_call.1} parent=11 // pred_check_branch
          %536 = sbr.rel (%p534) target = $region20
        $region19: #{tpu_custom_call.1} parent=11 // pred_region
          %s538 = ssub.s32 128, 128
          %539 = vsyncadd [#allocation9], %s538
          %s541 = sshll.u32 [#allocation8], 4
          %s542 = int_to_ptr.vmem [resolvable:$true] %s541
          %544 = dma.hbm_to_vmem [thread:$0]  %s3, 128, %s542, [#allocation9]
        $region20: #{tpu_custom_call.1} parent=11 // pred_fallthru
          _
        // Predicated region
        $region21: #{tpu_custom_call.1} parent=11 // pred_check
          %p545 = pneg %p157
        $region22: #{tpu_custom_call.1} parent=11 // pred_check_branch
          %547 = sbr.rel (%p545) target = $region24
        $region23: #{tpu_custom_call.1} parent=11 // pred_region
          _
        $region24: #{tpu_custom_call.1} parent=11 // pred_fallthru
          _
        // Predicated region
        $region25: #{tpu_custom_call.1} parent=11 // pred_check
          %p548 = pneg %p178
        $region26: #{tpu_custom_call.1} parent=11 // pred_check_branch
          %550 = sbr.rel (%p548) target = $region28
        $region27: #{tpu_custom_call.1} parent=11 // pred_region
          %s552 = ssub.s32 16, 16
          %553 = vsyncadd [#allocation9], %s552
          %s555 = sshll.u32 [#allocation10], 4
          %s556 = int_to_ptr.vmem [resolvable:$true] %s555
          %558 = dma.hbm_to_vmem [thread:$0]  %s5, 16, %s556, [#allocation9]
        $region28: #{tpu_custom_call.1} parent=11 // pred_fallthru
          _
        // Predicated region
        $region29: #{tpu_custom_call.1} parent=11 // pred_check
          %p559 = pneg %p199
        $region30: #{tpu_custom_call.1} parent=11 // pred_check_branch
          %561 = sbr.rel (%p559) target = $region32
        $region31: #{tpu_custom_call.1} parent=11 // pred_region
          _
        $region32: #{tpu_custom_call.1} parent=11 // pred_fallthru
          _
        // Predicated region
        $region33: #{tpu_custom_call.1} parent=11 // pred_check
          %p562 = pneg %p220
        $region34: #{tpu_custom_call.1} parent=11 // pred_check_branch
          %564 = sbr.rel (%p562) target = $region36
        $region35: #{tpu_custom_call.1} parent=11 // pred_region
          %s566 = ssub.s32 16, 16
          %567 = vsyncadd [#allocation12], %s566
          %s569 = sshll.u32 [#allocation11], 4
          %s570 = int_to_ptr.vmem [resolvable:$true] %s569
          %572 = dma.hbm_to_vmem [thread:$0]  %s7, 16, %s570, [#allocation12]
        $region36: #{tpu_custom_call.1} parent=11 // pred_fallthru
          _
        // Predicated region
        $region37: #{tpu_custom_call.1} parent=11 // pred_check
          %p573 = pneg %p241
        $region38: #{tpu_custom_call.1} parent=11 // pred_check_branch
          %575 = sbr.rel (%p573) target = $region40
        $region39: #{tpu_custom_call.1} parent=11 // pred_region
          _
        $region40: #{tpu_custom_call.1} parent=11 // pred_fallthru
          _
        // Predicated region
        $region41: #{tpu_custom_call.1} parent=11 // pred_check
          %p576 = pneg %p262
        $region42: #{tpu_custom_call.1} parent=11 // pred_check_branch
          %578 = sbr.rel (%p576) target = $region44
        $region43: #{tpu_custom_call.1} parent=11 // pred_region
          %s580 = ssub.s32 16, 16
          %581 = vsyncadd [#allocation12], %s580
          %s583 = sshll.u32 [#allocation13], 4
          %s584 = int_to_ptr.vmem [resolvable:$true] %s583
          %586 = dma.hbm_to_vmem [thread:$0]  %s9, 16, %s584, [#allocation12]
        $region44: #{tpu_custom_call.1} parent=11 // pred_fallthru
          _
        // Predicated region
        $region45: #{tpu_custom_call.1} parent=11 // pred_check
          %p587 = pneg %p283
        $region46: #{tpu_custom_call.1} parent=11 // pred_check_branch
          %589 = sbr.rel (%p587) target = $region48
        $region47: #{tpu_custom_call.1} parent=11 // pred_region
          _
        $region48: #{tpu_custom_call.1} parent=11 // pred_fallthru
          _
        // Predicated region
        $region49: #{tpu_custom_call.1} parent=11 // pred_check
          %p590 = pneg %p304
        $region50: #{tpu_custom_call.1} parent=11 // pred_check_branch
          %592 = sbr.rel (%p590) target = $region52
        $region51: #{tpu_custom_call.1} parent=11 // pred_region
          %s594 = ssub.s32 16, 16
          %595 = vsyncadd [#allocation15], %s594
          %s597 = sshll.u32 [#allocation14], 4
          %s598 = int_to_ptr.vmem [resolvable:$true] %s597
          %600 = dma.hbm_to_vmem [thread:$0]  %s11, 16, %s598, [#allocation15]
        $region52: #{tpu_custom_call.1} parent=11 // pred_fallthru
          _
        // Predicated region
        $region53: #{tpu_custom_call.1} parent=11 // pred_check
          %p601 = pneg %p325
        $region54: #{tpu_custom_call.1} parent=11 // pred_check_branch
          %603 = sbr.rel (%p601) target = $region56
        $region55: #{tpu_custom_call.1} parent=11 // pred_region
          %s605 = ssub.s32 256, 256
          %606 = vsyncadd [#allocation15], %s605
          %s607 = sshll.u32 [#allocation16], 4
          %s608 = int_to_ptr.vmem [resolvable:$true] %s607
          %613 = dma.hbm_to_vmem [thread:$0]  %s12, 256, %s608, [#allocation15], 64, 64, 4
        $region56: #{tpu_custom_call.1} parent=11 // pred_fallthru
          _
        // Predicated region
        $region57: #{tpu_custom_call.1} parent=11 // pred_check
          %p614 = pneg %p346
        $region58: #{tpu_custom_call.1} parent=11 // pred_check_branch
          %616 = sbr.rel (%p614) target = $region60
        $region59: #{tpu_custom_call.1} parent=11 // pred_region
          _
        $region60: #{tpu_custom_call.1} parent=11 // pred_fallthru
          _
        // Predicated region
        $region61: #{tpu_custom_call.1} parent=11 // pred_check
          %p617 = pneg %p367
        $region62: #{tpu_custom_call.1} parent=11 // pred_check_branch
          %619 = sbr.rel (%p617) target = $region64
        $region63: #{tpu_custom_call.1} parent=11 // pred_region
          _
        $region64: #{tpu_custom_call.1} parent=11 // pred_fallthru
          _
        // Predicated region
        $region65: #{tpu_custom_call.1} parent=11 // pred_check
          %p620 = pneg %p388
        $region66: #{tpu_custom_call.1} parent=11 // pred_check_branch
          %622 = sbr.rel (%p620) target = $region68
        $region67: #{tpu_custom_call.1} parent=11 // pred_region
          _
        $region68: #{tpu_custom_call.1} parent=11 // pred_fallthru
          _
        // Predicated region
        $region69: #{tpu_custom_call.1} parent=11 // pred_check
          %p623 = pneg %p409
        $region70: #{tpu_custom_call.1} parent=11 // pred_check_branch
          %625 = sbr.rel (%p623) target = $region72
        $region71: #{tpu_custom_call.1} parent=11 // pred_region
          _
        $region72: #{tpu_custom_call.1} parent=11 // pred_fallthru
          _
        // Predicated region
        $region73: #{tpu_custom_call.1} parent=11 // pred_check
          %p626 = pneg %p430
        $region74: #{tpu_custom_call.1} parent=11 // pred_check_branch
          %628 = sbr.rel (%p626) target = $region76
        $region75: #{tpu_custom_call.1} parent=11 // pred_region
          _
        $region76: #{tpu_custom_call.1} parent=11 // pred_fallthru
          _
      $region12: #{tpu_custom_call.1} parent=5 // pred_fallthru
        _
      %p629 = scmp.lt.s32.totalorder %s42, 2
      // Predicated region
      $region77: #{tpu_custom_call.1} parent=5 // pred_check
        %p630 = pneg %p629
      $region78: #{tpu_custom_call.1} parent=5 // pred_check_branch
        %632 = sbr.rel (%p630) target = $region80
      $region79: #{tpu_custom_call.1} parent=5 // pred_region
        // Predicated region
        $region81: #{tpu_custom_call.1} parent=79 // pred_check
          %p633 = pneg %p62
        $region82: #{tpu_custom_call.1} parent=79 // pred_check_branch
          %635 = sbr.rel (%p633) target = $region84
        $region83: #{tpu_custom_call.1} parent=79 // pred_region
          %s636 = sand.u32 %s52, 1
          %s637 = scalar_lea.sflag [#allocation3], %s636
          %s638 = sand.u32 %s52, 1
          %s639 = smul.addr %s638, 4
          %s640 = scalar_lea.vmem [#allocation2], %s639
          %s642 = ssub.s32 64, 64
          %643 = vsyncadd %s637, %s642
          %s644 = smul.addr %s42, 64
          %s645 = scalar_lea.hbm %s0, %s644
          %s647 = sshll.u32 %s640, 4
          %s648 = int_to_ptr.vmem [resolvable:$true] %s647
          %650 = dma.hbm_to_vmem [thread:$0]  %s645, 64, %s648, %s637
        $region84: #{tpu_custom_call.1} parent=79 // pred_fallthru
          _
        // Predicated region
        $region85: #{tpu_custom_call.1} parent=79 // pred_check
          %p651 = pneg %p88
        $region86: #{tpu_custom_call.1} parent=79 // pred_check_branch
          %653 = sbr.rel (%p651) target = $region88
        $region87: #{tpu_custom_call.1} parent=79 // pred_region
          %s654 = sand.u32 %s42, 1
          %s655 = scalar_lea.sflag [#allocation6], %s654
          %s656 = sand.u32 %s78, 1
          %s657 = smul.addr %s656, 4
          %s658 = scalar_lea.vmem [#allocation5], %s657
          %s660 = ssub.s32 64, 64
          %661 = vsyncadd %s655, %s660
          %s662 = smul.addr %s42, 64
          %s663 = scalar_lea.hbm %s1, %s662
          %s665 = sshll.u32 %s658, 4
          %s666 = int_to_ptr.vmem [resolvable:$true] %s665
          %668 = dma.hbm_to_vmem [thread:$0]  %s663, 64, %s666, %s655
        $region88: #{tpu_custom_call.1} parent=79 // pred_fallthru
          _
      $region80: #{tpu_custom_call.1} parent=5 // pred_fallthru
        _
      %p669 = scmp.le.s32.totalorder 1, %s42
      %p670 = scmp.lt.s32.totalorder %s42, 3
      %p671 = pnand %p669, %p670
      %p672 = pneg %p671
      // Predicated region
      $region89: #{tpu_custom_call.1} parent=5 // pred_check
        _
      $region90: #{tpu_custom_call.1} parent=5 // pred_check_branch
        %674 = sbr.rel (%p671) target = $region92
      $region91: #{tpu_custom_call.1} parent=5 // pred_region
        %s675 = ssub.s32 %s42, 1
        %s676 = sand.u32 %s55, 1
        %s677 = scalar_lea.sflag [#allocation3], %s676
        %s678 = sand.u32 %s55, 1
        %s679 = smul.addr %s678, 4
        %s680 = scalar_lea.vmem [#allocation2], %s679
        // Predicated region
        $region93: #{tpu_custom_call.1} parent=91 // pred_check
          %p681 = pneg %p68
        $region94: #{tpu_custom_call.1} parent=91 // pred_check_branch
          %683 = sbr.rel (%p681) target = $region96
        $region95: #{tpu_custom_call.1} parent=91 // pred_region
          %684 = dma.done %s677, 64
        $region96: #{tpu_custom_call.1} parent=91 // pred_fallthru
          _
        %s685 = sand.u32 %s47, 1
        %s686 = scalar_lea.sflag [#allocation6], %s685
        %s687 = sand.u32 %s81, 1
        %s688 = smul.addr %s687, 4
        %s689 = scalar_lea.vmem [#allocation5], %s688
        // Predicated region
        $region97: #{tpu_custom_call.1} parent=91 // pred_check
          %p690 = pneg %p94
        $region98: #{tpu_custom_call.1} parent=91 // pred_check_branch
          %692 = sbr.rel (%p690) target = $region100
        $region99: #{tpu_custom_call.1} parent=91 // pred_region
          %693 = dma.done %s686, 64
        $region100: #{tpu_custom_call.1} parent=91 // pred_fallthru
          _
        // Predicated region
        $region101: #{tpu_custom_call.1} parent=91 // pred_check
          %p694 = pneg %p115
        $region102: #{tpu_custom_call.1} parent=91 // pred_check_branch
          %696 = sbr.rel (%p694) target = $region104
        $region103: #{tpu_custom_call.1} parent=91 // pred_region
          %697 = dma.done [#allocation6], 128
        $region104: #{tpu_custom_call.1} parent=91 // pred_fallthru
          _
        // Predicated region
        $region105: #{tpu_custom_call.1} parent=91 // pred_check
          %p698 = pneg %p136
        $region106: #{tpu_custom_call.1} parent=91 // pred_check_branch
          %700 = sbr.rel (%p698) target = $region108
        $region107: #{tpu_custom_call.1} parent=91 // pred_region
          %701 = dma.done [#allocation9], 128
        $region108: #{tpu_custom_call.1} parent=91 // pred_fallthru
          _
        // Predicated region
        $region109: #{tpu_custom_call.1} parent=91 // pred_check
          %p702 = pneg %p178
        $region110: #{tpu_custom_call.1} parent=91 // pred_check_branch
          %704 = sbr.rel (%p702) target = $region112
        $region111: #{tpu_custom_call.1} parent=91 // pred_region
          %705 = dma.done [#allocation9], 16
        $region112: #{tpu_custom_call.1} parent=91 // pred_fallthru
          _
        // Predicated region
        $region113: #{tpu_custom_call.1} parent=91 // pred_check
          %p706 = pneg %p220
        $region114: #{tpu_custom_call.1} parent=91 // pred_check_branch
          %708 = sbr.rel (%p706) target = $region116
        $region115: #{tpu_custom_call.1} parent=91 // pred_region
          %709 = dma.done [#allocation12], 16
        $region116: #{tpu_custom_call.1} parent=91 // pred_fallthru
          _
        // Predicated region
        $region117: #{tpu_custom_call.1} parent=91 // pred_check
          %p710 = pneg %p262
        $region118: #{tpu_custom_call.1} parent=91 // pred_check_branch
          %712 = sbr.rel (%p710) target = $region120
        $region119: #{tpu_custom_call.1} parent=91 // pred_region
          %713 = dma.done [#allocation12], 16
        $region120: #{tpu_custom_call.1} parent=91 // pred_fallthru
          _
        // Predicated region
        $region121: #{tpu_custom_call.1} parent=91 // pred_check
          %p714 = pneg %p304
        $region122: #{tpu_custom_call.1} parent=91 // pred_check_branch
          %716 = sbr.rel (%p714) target = $region124
        $region123: #{tpu_custom_call.1} parent=91 // pred_region
          %717 = dma.done [#allocation15], 16
        $region124: #{tpu_custom_call.1} parent=91 // pred_fallthru
          _
        // Predicated region
        $region125: #{tpu_custom_call.1} parent=91 // pred_check
          %p718 = pneg %p325
        $region126: #{tpu_custom_call.1} parent=91 // pred_check_branch
          %720 = sbr.rel (%p718) target = $region128
        $region127: #{tpu_custom_call.1} parent=91 // pred_region
          %721 = dma.done [#allocation15], 256
        $region128: #{tpu_custom_call.1} parent=91 // pred_fallthru
          _
        %s722 = sand.u32 %s55, 1
        %s723 = scalar_lea.sflag [#allocation3], %s722
        %s724 = sand.u32 %s55, 1
        %s725 = smul.addr %s724, 4
        %s726 = scalar_lea.vmem [#allocation2], %s725
        %p727 = pneg %p68
        %p728 = pneg %p65
        %s729 = sand.u32 %s47, 1
        %s730 = scalar_lea.sflag [#allocation6], %s729
        %s731 = sand.u32 %s81, 1
        %s732 = smul.addr %s731, 4
        %s733 = scalar_lea.vmem [#allocation5], %s732
        %p734 = pneg %p94
        %p735 = pneg %p91
        %p736 = pneg %p115
        %p737 = pneg %p112
        %p738 = pneg %p136
        %p739 = pneg %p133
        %p740 = pneg %p157
        %p741 = pneg %p154
        %p742 = pneg %p178
        %p743 = pneg %p175
        %p744 = pneg %p199
        %p745 = pneg %p196
        %p746 = pneg %p220
        %p747 = pneg %p217
        %p748 = pneg %p241
        %p749 = pneg %p238
        %p750 = pneg %p262
        %p751 = pneg %p259
        %p752 = pneg %p283
        %p753 = pneg %p280
        %p754 = pneg %p304
        %p755 = pneg %p301
        %p756 = pneg %p325
        %p757 = pneg %p322
        %p758 = pneg %p346
        %p759 = pneg %p343
        %p760 = pneg %p367
        %p761 = pneg %p364
        %p762 = pneg %p388
        %p763 = pneg %p385
        %p764 = pneg %p409
        %p765 = pneg %p406
        %p766 = pneg %p430
        %p767 = pneg %p427
        %p768 = pneg %p456
        %p769 = pneg %p453
        %s770 = sand.u32 %s443, 1
        %s771 = scalar_lea.sflag [#allocation4], %s770
        %s772 = sand.u32 %s443, 1
        %s773 = smul.addr %s772, 8
        %s774 = scalar_lea.vmem [#allocation17], %s773
        %p775 = pneg %p482
        %p776 = pneg %p479
        %s777 = sand.u32 %s47, 1
        %s778 = scalar_lea.sflag [#allocation19], %s777
        %s779 = sand.u32 %s469, 1
        %s780 = smul.addr %s779, 16
        %s781 = scalar_lea.vmem [#allocation18], %s780
        %p782 = pneg %p508
        %p783 = pneg %p505
        %s784 = sand.u32 %s47, 1
        %s785 = scalar_lea.sflag [#allocation19], %s784
        %s786 = sand.u32 %s495, 1
        %s787 = smul.addr %s786, 16
        %s788 = scalar_lea.vmem [#allocation20], %s787
        %v790 = vld [vmem:[%s680] sm:$0xf]
        %v791 = vld [vmem:[%s689] sm:$0xf]
        %v792 = vld [vmem:[%s16] sm:$0x7]
        %v793 = vld [vmem:[%s17] sm:$0x7]
        %v794 = vld [vmem:[%s4] sm:$0xf]
        %v795 = vld [vmem:[%s4 + $0x4] sm:$0xf]
        %v796 = vld [vmem:[%s4 + $0x8] sm:$0xf]
        %v797 = vld [vmem:[%s4 + $0xc] sm:$0xf]
        %v798 = vld [vmem:[#allocation10] sm:$0x1]
        %v800 = vlaneseq
        %v801 = vshrl.u32 %v800, 7
        %v802 = vsub.s32 0, %v801
        %v803 = vrot.slane %v798, %v802
        %v809 = vunpack.c.l.b16 %v794
        %v810 = vunpack.c.l.b16 %v795
        %v811 = vunpack.c.l.b16 %v796
        %v812 = vunpack.c.l.b16 %v797
        %v813 = vpack.c.b16 %v810, %v809
        %v814 = vpack.c.b16 %v812, %v811
        %vm817 = vcmask 261120
        %v819 = vsel %vm817, %v790, 0
        %821 = vmatprep.subr.bf16.mxu0 0
        %822 = vmatpush1.bf16.msra.mxu0 0
        %823 = vmatprep.subr.bf16.mxu0 0
        %824 = vmatpush1.bf16.msra.mxu0 0
        %825 = vmatprep.subr.bf16.mxu0 0
        %826 = vmatpush1.bf16.msra.mxu0 0
        %827 = vmatprep.subr.bf16.mxu0 0
        %828 = vmatpush1.bf16.msra.mxu0 0
        %829 = vmatprep.subr.bf16.mxu0 0
        %830 = vmatpush1.bf16.msra.mxu0 0
        %831 = vmatprep.subr.bf16.mxu0 0
        %832 = vmatpush1.bf16.msra.mxu0 0
        %833 = vmatprep.subr.bf16.mxu0 0
        %834 = vmatpush1.bf16.msra.mxu0 %v814
        %835 = vmatprep.subr.bf16.mxu0 0
        %836 = vmatpush1.bf16.msra.mxu0 %v813
        %837 = vmatprep.subr.bf16.mxu0 0
        %838 = vmatpush2.bf16.msra.mxu0 0
        %839 = vmatprep.subr.bf16.mxu0 0
        %840 = vmatpush2.bf16.msra.mxu0 0
        %841 = vmatprep.subr.bf16.mxu0 0
        %842 = vmatpush2.bf16.msra.mxu0 0
        %843 = vmatprep.subr.bf16.mxu0 0
        %844 = vmatpush2.bf16.msra.mxu0 0
        %845 = vmatprep.subr.bf16.mxu0 0
        %846 = vmatpush2.bf16.msra.mxu0 0
        %847 = vmatprep.subr.bf16.mxu0 0
        %848 = vmatpush2.bf16.msra.mxu0 0
        %849 = vmatprep.subr.bf16.mxu0 0
        %850 = vmatpush2.bf16.msra.mxu0 0
        %851 = vmatprep.subr.bf16.mxu0 0
        %852 = vmatpush2.bf16.msra.mxu0 0
        %853 = vmatprep.mubr.bf16.mxu0 0
        %854 = vmatmul.mubr.bf16.gmra.mxu0 %v819
        %v855 = vpop.f32.mrf.mxu0
        %v856 = vadd.f32 %v803, %v855
        %v857 = vpop.f32.mrf.mxu0
        %v858 = vpop.f32.mrf.mxu0
        %v859 = vpop.f32.mrf.mxu0
        %860 = vdwg.mxu0
        %v861 = vmul.f32 %v856, 0.35355338
        %863 = vrot.lane.b32.xlu0 %v861, 120
        %v864 = vpop.permute.xlu0 %863
        %866 = vrot.lane.b32.xlu0 %v861, 112
        %v867 = vpop.permute.xlu0 %866
        %869 = vrot.lane.b32.xlu0 %v861, 104
        %v870 = vpop.permute.xlu0 %869
        %v872 = vcombine.low %v861, %v867
        %v873 = vcombine.high %v861, %v867
        %v875 = vunpack.c.l.s4 1983009808
        %v876 = vunpack.c.0.s8 %v875
        %v877 = vlaneseq
        %v878 = vshrl.u32 %v877, 7
        %v879 = vsub.s32 %v876, %v878
        %v880 = vrot.slane %v872, %v879
        %v882 = vunpack.c.l.s4 1983009808
        %v883 = vunpack.c.0.s8 %v882
        %v884 = vlaneseq
        %v885 = vshrl.u32 %v884, 7
        %v886 = vsub.s32 %v883, %v885
        %v887 = vrot.slane %v873, %v886
        %v888 = vcombine.low %v864, %v870
        %v889 = vcombine.high %v864, %v870
        %v891 = vunpack.c.l.s4 1983009808
        %v892 = vunpack.c.0.s8 %v891
        %v893 = vlaneseq
        %v894 = vshrl.u32 %v893, 7
        %v895 = vsub.s32 %v892, %v894
        %v896 = vrot.slane %v888, %v895
        %v898 = vunpack.c.l.s4 1983009808
        %v899 = vunpack.c.0.s8 %v898
        %v900 = vlaneseq
        %v901 = vshrl.u32 %v900, 7
        %v902 = vsub.s32 %v899, %v901
        %v903 = vrot.slane %v889, %v902
        %v904 = vcombine.low %v880, %v896
        %v905 = vcombine.high %v880, %v896
        %v907 = vunpack.c.l.s4 1934713408
        %v908 = vunpack.c.0.s8 %v907
        %v909 = vlaneseq
        %v910 = vshrl.u32 %v909, 7
        %v911 = vsub.s32 %v908, %v910
        %v912 = vrot.slane %v904, %v911
        %v914 = vunpack.c.l.s4 1934713408
        %v915 = vunpack.c.0.s8 %v914
        %v916 = vlaneseq
        %v917 = vshrl.u32 %v916, 7
        %v918 = vsub.s32 %v915, %v917
        %v919 = vrot.slane %v905, %v918
        %v920 = vcombine.low %v887, %v903
        %v921 = vcombine.high %v887, %v903
        %v923 = vunpack.c.l.s4 1934713408
        %v924 = vunpack.c.0.s8 %v923
        %v925 = vlaneseq
        %v926 = vshrl.u32 %v925, 7
        %v927 = vsub.s32 %v924, %v926
        %v928 = vrot.slane %v920, %v927
        %v930 = vunpack.c.l.s4 1934713408
        %v931 = vunpack.c.0.s8 %v930
        %v932 = vlaneseq
        %v933 = vshrl.u32 %v932, 7
        %v934 = vsub.s32 %v931, %v933
        %v935 = vrot.slane %v921, %v934
        %v936 = vcombine.high %v912, 0.0
        %v937 = vcombine.high %v919, 0.0
        %v938 = vcombine.high %v928, 0.0
        %v939 = vcombine.high %v935, 0.0
        %v940 = vcombine.low %v912, %v919
        %v942 = vunpack.c.l.s4 1983009808
        %v943 = vunpack.c.0.s8 %v942
        %v944 = vlaneseq
        %v945 = vshrl.u32 %v944, 7
        %v946 = vsub.s32 %v943, %v945
        %v947 = vrot.slane %v940, %v946
        %v948 = vcombine.low %v936, %v937
        %v950 = vunpack.c.l.s4 1983009808
        %v951 = vunpack.c.0.s8 %v950
        %v952 = vlaneseq
        %v953 = vshrl.u32 %v952, 7
        %v954 = vsub.s32 %v951, %v953
        %v955 = vrot.slane %v948, %v954
        %v956 = vcombine.low %v928, %v935
        %v958 = vunpack.c.l.s4 1983009808
        %v959 = vunpack.c.0.s8 %v958
        %v960 = vlaneseq
        %v961 = vshrl.u32 %v960, 7
        %v962 = vsub.s32 %v959, %v961
        %v963 = vrot.slane %v956, %v962
        %v964 = vcombine.low %v938, %v939
        %v966 = vunpack.c.l.s4 1983009808
        %v967 = vunpack.c.0.s8 %v966
        %v968 = vlaneseq
        %v969 = vshrl.u32 %v968, 7
        %v970 = vsub.s32 %v967, %v969
        %v971 = vrot.slane %v964, %v970
        %v972 = vcombine.low %v947, %v955
        %v973 = vcombine.high %v947, %v955
        %v975 = vunpack.c.l.s4 1934713408
        %v976 = vunpack.c.0.s8 %v975
        %v977 = vlaneseq
        %v978 = vshrl.u32 %v977, 7
        %v979 = vsub.s32 %v976, %v978
        %v980 = vrot.slane %v972, %v979
        %v982 = vunpack.c.l.s4 1934713408
        %v983 = vunpack.c.0.s8 %v982
        %v984 = vlaneseq
        %v985 = vshrl.u32 %v984, 7
        %v986 = vsub.s32 %v983, %v985
        %v987 = vrot.slane %v973, %v986
        %v988 = vcombine.low %v963, %v971
        %v989 = vcombine.high %v963, %v971
        %v991 = vunpack.c.l.s4 1934713408
        %v992 = vunpack.c.0.s8 %v991
        %v993 = vlaneseq
        %v994 = vshrl.u32 %v993, 7
        %v995 = vsub.s32 %v992, %v994
        %v996 = vrot.slane %v988, %v995
        %v998 = vunpack.c.l.s4 1934713408
        %v999 = vunpack.c.0.s8 %v998
        %v1000 = vlaneseq
        %v1001 = vshrl.u32 %v1000, 7
        %v1002 = vsub.s32 %v999, %v1001
        %v1003 = vrot.slane %v989, %v1002
        %v1004 = vcombine.low %v980, %v996
        %v1005 = vcombine.high %v980, %v996
        %v1006 = vcombine.low %v987, %v1003
        %v1007 = vcombine.high %v987, %v1003
        %v1008 = vpack.c.bf16 %v1004, %v1004
        %v1009 = vpack.c.bf16 %v1005, %v1005
        %v1010 = vpack.c.bf16 %v1006, %v1006
        %v1011 = vpack.c.bf16 %v1007, %v1007
        %1013 = vrot.lane.b32.xlu0 %v856, 120
        %v1014 = vpop.permute.xlu0 %1013
        %1015 = vrot.lane.b32.xlu0 %v856, 112
        %v1016 = vpop.permute.xlu0 %1015
        %1017 = vrot.lane.b32.xlu0 %v856, 104
        %v1018 = vpop.permute.xlu0 %1017
        %1019 = vrot.lane.b32.xlu0 %v856, 96
        %v1020 = vpop.permute.xlu0 %1019
        %1021 = vrot.lane.b32.xlu0 %v1014, 96
        %v1022 = vpop.permute.xlu0 %1021
        %1023 = vrot.lane.b32.xlu0 %v1016, 96
        %v1024 = vpop.permute.xlu0 %1023
        %1025 = vrot.lane.b32.xlu0 %v1018, 96
        %v1026 = vpop.permute.xlu0 %1025
        %v1031 = vcombine.low %v1020, %v1024
        %v1032 = vcombine.high %v1020, %v1024
        %v1034 = vunpack.c.l.s4 1983009808
        %v1035 = vunpack.c.0.s8 %v1034
        %v1036 = vlaneseq
        %v1037 = vshrl.u32 %v1036, 7
        %v1038 = vsub.s32 %v1035, %v1037
        %v1039 = vrot.slane %v1031, %v1038
        %v1041 = vunpack.c.l.s4 1983009808
        %v1042 = vunpack.c.0.s8 %v1041
        %v1043 = vlaneseq
        %v1044 = vshrl.u32 %v1043, 7
        %v1045 = vsub.s32 %v1042, %v1044
        %v1046 = vrot.slane %v1032, %v1045
        %v1047 = vcombine.low %v1022, %v1026
        %v1048 = vcombine.high %v1022, %v1026
        %v1050 = vunpack.c.l.s4 1983009808
        %v1051 = vunpack.c.0.s8 %v1050
        %v1052 = vlaneseq
        %v1053 = vshrl.u32 %v1052, 7
        %v1054 = vsub.s32 %v1051, %v1053
        %v1055 = vrot.slane %v1047, %v1054
        %v1057 = vunpack.c.l.s4 1983009808
        %v1058 = vunpack.c.0.s8 %v1057
        %v1059 = vlaneseq
        %v1060 = vshrl.u32 %v1059, 7
        %v1061 = vsub.s32 %v1058, %v1060
        %v1062 = vrot.slane %v1048, %v1061
        %v1063 = vcombine.low %v1039, %v1055
        %v1064 = vcombine.high %v1039, %v1055
        %v1066 = vunpack.c.l.s4 1934713408
        %v1067 = vunpack.c.0.s8 %v1066
        %v1068 = vlaneseq
        %v1069 = vshrl.u32 %v1068, 7
        %v1070 = vsub.s32 %v1067, %v1069
        %v1071 = vrot.slane %v1063, %v1070
        %v1073 = vunpack.c.l.s4 1934713408
        %v1074 = vunpack.c.0.s8 %v1073
        %v1075 = vlaneseq
        %v1076 = vshrl.u32 %v1075, 7
        %v1077 = vsub.s32 %v1074, %v1076
        %v1078 = vrot.slane %v1064, %v1077
        %v1079 = vcombine.low %v1046, %v1062
        %v1080 = vcombine.high %v1046, %v1062
        %v1082 = vunpack.c.l.s4 1934713408
        %v1083 = vunpack.c.0.s8 %v1082
        %v1084 = vlaneseq
        %v1085 = vshrl.u32 %v1084, 7
        %v1086 = vsub.s32 %v1083, %v1085
        %v1087 = vrot.slane %v1079, %v1086
        %v1089 = vunpack.c.l.s4 1934713408
        %v1090 = vunpack.c.0.s8 %v1089
        %v1091 = vlaneseq
        %v1092 = vshrl.u32 %v1091, 7
        %v1093 = vsub.s32 %v1090, %v1092
        %v1094 = vrot.slane %v1080, %v1093
        %v1095 = vcombine.high %v1071, 0.0
        %v1096 = vcombine.high %v1078, 0.0
        %v1097 = vcombine.high %v1087, 0.0
        %v1098 = vcombine.high %v1094, 0.0
        %v1099 = vcombine.low %v1071, %v1078
        %v1101 = vunpack.c.l.s4 1983009808
        %v1102 = vunpack.c.0.s8 %v1101
        %v1103 = vlaneseq
        %v1104 = vshrl.u32 %v1103, 7
        %v1105 = vsub.s32 %v1102, %v1104
        %v1106 = vrot.slane %v1099, %v1105
        %v1107 = vcombine.low %v1095, %v1096
        %v1109 = vunpack.c.l.s4 1983009808
        %v1110 = vunpack.c.0.s8 %v1109
        %v1111 = vlaneseq
        %v1112 = vshrl.u32 %v1111, 7
        %v1113 = vsub.s32 %v1110, %v1112
        %v1114 = vrot.slane %v1107, %v1113
        %v1115 = vcombine.low %v1087, %v1094
        %v1117 = vunpack.c.l.s4 1983009808
        %v1118 = vunpack.c.0.s8 %v1117
        %v1119 = vlaneseq
        %v1120 = vshrl.u32 %v1119, 7
        %v1121 = vsub.s32 %v1118, %v1120
        %v1122 = vrot.slane %v1115, %v1121
        %v1123 = vcombine.low %v1097, %v1098
        %v1125 = vunpack.c.l.s4 1983009808
        %v1126 = vunpack.c.0.s8 %v1125
        %v1127 = vlaneseq
        %v1128 = vshrl.u32 %v1127, 7
        %v1129 = vsub.s32 %v1126, %v1128
        %v1130 = vrot.slane %v1123, %v1129
        %v1131 = vcombine.low %v1106, %v1114
        %v1132 = vcombine.high %v1106, %v1114
        %v1134 = vunpack.c.l.s4 1934713408
        %v1135 = vunpack.c.0.s8 %v1134
        %v1136 = vlaneseq
        %v1137 = vshrl.u32 %v1136, 7
        %v1138 = vsub.s32 %v1135, %v1137
        %v1139 = vrot.slane %v1131, %v1138
        %v1141 = vunpack.c.l.s4 1934713408
        %v1142 = vunpack.c.0.s8 %v1141
        %v1143 = vlaneseq
        %v1144 = vshrl.u32 %v1143, 7
        %v1145 = vsub.s32 %v1142, %v1144
        %v1146 = vrot.slane %v1132, %v1145
        %v1147 = vcombine.low %v1122, %v1130
        %v1148 = vcombine.high %v1122, %v1130
        %v1150 = vunpack.c.l.s4 1934713408
        %v1151 = vunpack.c.0.s8 %v1150
        %v1152 = vlaneseq
        %v1153 = vshrl.u32 %v1152, 7
        %v1154 = vsub.s32 %v1151, %v1153
        %v1155 = vrot.slane %v1147, %v1154
        %v1157 = vunpack.c.l.s4 1934713408
        %v1158 = vunpack.c.0.s8 %v1157
        %v1159 = vlaneseq
        %v1160 = vshrl.u32 %v1159, 7
        %v1161 = vsub.s32 %v1158, %v1160
        %v1162 = vrot.slane %v1148, %v1161
        %v1163 = vcombine.low %v1139, %v1155
        %v1164 = vcombine.high %v1139, %v1155
        %v1165 = vcombine.low %v1146, %v1162
        %v1166 = vcombine.high %v1146, %v1162
        %v1167 = vpack.c.bf16 %v1163, %v1163
        %v1168 = vpack.c.bf16 %v1164, %v1164
        %v1169 = vpack.c.bf16 %v1165, %v1165
        %v1170 = vpack.c.bf16 %v1166, %v1166
        %1171 = vrot.lane.b32.xlu0 %v856, 64
        %v1172 = vpop.permute.xlu0 %1171
        %1173 = vrot.lane.b32.xlu0 %v1014, 64
        %v1174 = vpop.permute.xlu0 %1173
        %1175 = vrot.lane.b32.xlu0 %v1016, 64
        %v1176 = vpop.permute.xlu0 %1175
        %1177 = vrot.lane.b32.xlu0 %v1018, 64
        %v1178 = vpop.permute.xlu0 %1177
        %v1183 = vcombine.low %v1172, %v1176
        %v1184 = vcombine.high %v1172, %v1176
        %v1186 = vunpack.c.l.s4 1983009808
        %v1187 = vunpack.c.0.s8 %v1186
        %v1188 = vlaneseq
        %v1189 = vshrl.u32 %v1188, 7
        %v1190 = vsub.s32 %v1187, %v1189
        %v1191 = vrot.slane %v1183, %v1190
        %v1193 = vunpack.c.l.s4 1983009808
        %v1194 = vunpack.c.0.s8 %v1193
        %v1195 = vlaneseq
        %v1196 = vshrl.u32 %v1195, 7
        %v1197 = vsub.s32 %v1194, %v1196
        %v1198 = vrot.slane %v1184, %v1197
        %v1199 = vcombine.low %v1174, %v1178
        %v1200 = vcombine.high %v1174, %v1178
        %v1202 = vunpack.c.l.s4 1983009808
        %v1203 = vunpack.c.0.s8 %v1202
        %v1204 = vlaneseq
        %v1205 = vshrl.u32 %v1204, 7
        %v1206 = vsub.s32 %v1203, %v1205
        %v1207 = vrot.slane %v1199, %v1206
        %v1209 = vunpack.c.l.s4 1983009808
        %v1210 = vunpack.c.0.s8 %v1209
        %v1211 = vlaneseq
        %v1212 = vshrl.u32 %v1211, 7
        %v1213 = vsub.s32 %v1210, %v1212
        %v1214 = vrot.slane %v1200, %v1213
        %v1215 = vcombine.low %v1191, %v1207
        %v1216 = vcombine.high %v1191, %v1207
        %v1218 = vunpack.c.l.s4 1934713408
        %v1219 = vunpack.c.0.s8 %v1218
        %v1220 = vlaneseq
        %v1221 = vshrl.u32 %v1220, 7
        %v1222 = vsub.s32 %v1219, %v1221
        %v1223 = vrot.slane %v1215, %v1222
        %v1225 = vunpack.c.l.s4 1934713408
        %v1226 = vunpack.c.0.s8 %v1225
        %v1227 = vlaneseq
        %v1228 = vshrl.u32 %v1227, 7
        %v1229 = vsub.s32 %v1226, %v1228
        %v1230 = vrot.slane %v1216, %v1229
        %v1231 = vcombine.low %v1198, %v1214
        %v1232 = vcombine.high %v1198, %v1214
        %v1234 = vunpack.c.l.s4 1934713408
        %v1235 = vunpack.c.0.s8 %v1234
        %v1236 = vlaneseq
        %v1237 = vshrl.u32 %v1236, 7
        %v1238 = vsub.s32 %v1235, %v1237
        %v1239 = vrot.slane %v1231, %v1238
        %v1241 = vunpack.c.l.s4 1934713408
        %v1242 = vunpack.c.0.s8 %v1241
        %v1243 = vlaneseq
        %v1244 = vshrl.u32 %v1243, 7
        %v1245 = vsub.s32 %v1242, %v1244
        %v1246 = vrot.slane %v1232, %v1245
        %v1247 = vcombine.high %v1223, 0.0
        %v1248 = vcombine.high %v1230, 0.0
        %v1249 = vcombine.high %v1239, 0.0
        %v1250 = vcombine.high %v1246, 0.0
        %v1251 = vcombine.low %v1223, %v1230
        %v1253 = vunpack.c.l.s4 1983009808
        %v1254 = vunpack.c.0.s8 %v1253
        %v1255 = vlaneseq
        %v1256 = vshrl.u32 %v1255, 7
        %v1257 = vsub.s32 %v1254, %v1256
        %v1258 = vrot.slane %v1251, %v1257
        %v1259 = vcombine.low %v1247, %v1248
        %v1261 = vunpack.c.l.s4 1983009808
        %v1262 = vunpack.c.0.s8 %v1261
        %v1263 = vlaneseq
        %v1264 = vshrl.u32 %v1263, 7
        %v1265 = vsub.s32 %v1262, %v1264
        %v1266 = vrot.slane %v1259, %v1265
        %v1267 = vcombine.low %v1239, %v1246
        %v1269 = vunpack.c.l.s4 1983009808
        %v1270 = vunpack.c.0.s8 %v1269
        %v1271 = vlaneseq
        %v1272 = vshrl.u32 %v1271, 7
        %v1273 = vsub.s32 %v1270, %v1272
        %v1274 = vrot.slane %v1267, %v1273
        %v1275 = vcombine.low %v1249, %v1250
        %v1277 = vunpack.c.l.s4 1983009808
        %v1278 = vunpack.c.0.s8 %v1277
        %v1279 = vlaneseq
        %v1280 = vshrl.u32 %v1279, 7
        %v1281 = vsub.s32 %v1278, %v1280
        %v1282 = vrot.slane %v1275, %v1281
        %v1283 = vcombine.low %v1258, %v1266
        %v1284 = vcombine.high %v1258, %v1266
        %v1286 = vunpack.c.l.s4 1934713408
        %v1287 = vunpack.c.0.s8 %v1286
        %v1288 = vlaneseq
        %v1289 = vshrl.u32 %v1288, 7
        %v1290 = vsub.s32 %v1287, %v1289
        %v1291 = vrot.slane %v1283, %v1290
        %v1293 = vunpack.c.l.s4 1934713408
        %v1294 = vunpack.c.0.s8 %v1293
        %v1295 = vlaneseq
        %v1296 = vshrl.u32 %v1295, 7
        %v1297 = vsub.s32 %v1294, %v1296
        %v1298 = vrot.slane %v1284, %v1297
        %v1299 = vcombine.low %v1274, %v1282
        %v1300 = vcombine.high %v1274, %v1282
        %v1302 = vunpack.c.l.s4 1934713408
        %v1303 = vunpack.c.0.s8 %v1302
        %v1304 = vlaneseq
        %v1305 = vshrl.u32 %v1304, 7
        %v1306 = vsub.s32 %v1303, %v1305
        %v1307 = vrot.slane %v1299, %v1306
        %v1309 = vunpack.c.l.s4 1934713408
        %v1310 = vunpack.c.0.s8 %v1309
        %v1311 = vlaneseq
        %v1312 = vshrl.u32 %v1311, 7
        %v1313 = vsub.s32 %v1310, %v1312
        %v1314 = vrot.slane %v1300, %v1313
        %v1315 = vcombine.low %v1291, %v1307
        %v1316 = vcombine.high %v1291, %v1307
        %v1317 = vcombine.low %v1298, %v1314
        %v1318 = vcombine.high %v1298, %v1314
        %v1319 = vpack.c.bf16 %v1315, %v1315
        %v1320 = vpack.c.bf16 %v1316, %v1316
        %v1321 = vpack.c.bf16 %v1317, %v1317
        %v1322 = vpack.c.bf16 %v1318, %v1318
        %v1323 = vld [vmem:[#allocation7] sm:$0xff]
        %vm1324 = vcmask 64512
        %v1326 = vsel %vm1324, %v1008, 0
        %v1329 = vsel %vm1324, %v1167, 0
        %1331 = vmatprep.subr.bf16.mxu0 0
        %1332 = vmatpush1.bf16.xpose.msra.mxu0 0
        %1333 = vmatprep.subr.bf16.mxu0 0
        %1334 = vmatpush1.bf16.xpose.msra.mxu0 0
        %1335 = vmatprep.subr.bf16.mxu0 0
        %1336 = vmatpush1.bf16.xpose.msra.mxu0 0
        %1337 = vmatprep.subr.bf16.mxu0 0
        %1338 = vmatpush1.bf16.xpose.msra.mxu0 0
        %1339 = vmatprep.subr.bf16.mxu0 0
        %1340 = vmatpush1.bf16.xpose.msra.mxu0 0
        %1341 = vmatprep.subr.bf16.mxu0 0
        %1342 = vmatpush1.bf16.xpose.msra.mxu0 0
        %1343 = vmatprep.subr.bf16.mxu0 0
        %1344 = vmatpush1.bf16.xpose.msra.mxu0 0
        %1345 = vmatprep.subr.bf16.mxu0 0
        %1346 = vmatpush1.bf16.xpose.msra.mxu0 %v1329
        %1347 = vmatprep.subr.bf16.mxu0 0
        %1348 = vmatpush2.bf16.xpose.msra.mxu0 0
        %1349 = vmatprep.subr.bf16.mxu0 0
        %1350 = vmatpush2.bf16.xpose.msra.mxu0 0
        %1351 = vmatprep.subr.bf16.mxu0 0
        %1352 = vmatpush2.bf16.xpose.msra.mxu0 0
        %1353 = vmatprep.subr.bf16.mxu0 0
        %1354 = vmatpush2.bf16.xpose.msra.mxu0 0
        %1355 = vmatprep.subr.bf16.mxu0 0
        %1356 = vmatpush2.bf16.xpose.msra.mxu0 0
        %1357 = vmatprep.subr.bf16.mxu0 0
        %1358 = vmatpush2.bf16.xpose.msra.mxu0 0
        %1359 = vmatprep.subr.bf16.mxu0 0
        %1360 = vmatpush2.bf16.xpose.msra.mxu0 0
        %1361 = vmatprep.subr.bf16.mxu0 0
        %1362 = vmatpush2.bf16.xpose.msra.mxu0 0
        %1363 = vmatprep.mubr.bf16.mxu0 0
        %1364 = vmatmul.mubr.bf16.gmra.mxu0 %v1326
        %v1365 = vpop.f32.mrf.mxu0
        %v1366 = vadd.f32 %v1323, %v1365
        %v1367 = vpop.f32.mrf.mxu0
        %v1368 = vpop.f32.mrf.mxu0
        %v1369 = vpop.f32.mrf.mxu0
        %1370 = vdwg.mxu0
        %v1372 = vsel %vm1324, %v1009, 0
        %v1375 = vsel %vm1324, %v1168, 0
        %1377 = vmatprep.subr.bf16.mxu0 0
        %1378 = vmatpush1.bf16.xpose.msra.mxu0 0
        %1379 = vmatprep.subr.bf16.mxu0 0
        %1380 = vmatpush1.bf16.xpose.msra.mxu0 0
        %1381 = vmatprep.subr.bf16.mxu0 0
        %1382 = vmatpush1.bf16.xpose.msra.mxu0 0
        %1383 = vmatprep.subr.bf16.mxu0 0
        %1384 = vmatpush1.bf16.xpose.msra.mxu0 0
        %1385 = vmatprep.subr.bf16.mxu0 0
        %1386 = vmatpush1.bf16.xpose.msra.mxu0 0
        %1387 = vmatprep.subr.bf16.mxu0 0
        %1388 = vmatpush1.bf16.xpose.msra.mxu0 0
        %1389 = vmatprep.subr.bf16.mxu0 0
        %1390 = vmatpush1.bf16.xpose.msra.mxu0 0
        %1391 = vmatprep.subr.bf16.mxu0 0
        %1392 = vmatpush1.bf16.xpose.msra.mxu0 %v1375
        %1393 = vmatprep.subr.bf16.mxu0 0
        %1394 = vmatpush2.bf16.xpose.msra.mxu0 0
        %1395 = vmatprep.subr.bf16.mxu0 0
        %1396 = vmatpush2.bf16.xpose.msra.mxu0 0
        %1397 = vmatprep.subr.bf16.mxu0 0
        %1398 = vmatpush2.bf16.xpose.msra.mxu0 0
        %1399 = vmatprep.subr.bf16.mxu0 0
        %1400 = vmatpush2.bf16.xpose.msra.mxu0 0
        %1401 = vmatprep.subr.bf16.mxu0 0
        %1402 = vmatpush2.bf16.xpose.msra.mxu0 0
        %1403 = vmatprep.subr.bf16.mxu0 0
        %1404 = vmatpush2.bf16.xpose.msra.mxu0 0
        %1405 = vmatprep.subr.bf16.mxu0 0
        %1406 = vmatpush2.bf16.xpose.msra.mxu0 0
        %1407 = vmatprep.subr.bf16.mxu0 0
        %1408 = vmatpush2.bf16.xpose.msra.mxu0 0
        %1409 = vmatprep.mubr.bf16.mxu0 0
        %1410 = vmatmul.mubr.bf16.gmra.mxu0 %v1372
        %v1411 = vpop.f32.mrf.mxu0
        %v1412 = vadd.f32 %v1323, %v1411
        %v1413 = vpop.f32.mrf.mxu0
        %v1414 = vpop.f32.mrf.mxu0
        %v1415 = vpop.f32.mrf.mxu0
        %1416 = vdwg.mxu0
        %v1418 = vsel %vm1324, %v1010, 0
        %v1421 = vsel %vm1324, %v1169, 0
        %1423 = vmatprep.subr.bf16.mxu0 0
        %1424 = vmatpush1.bf16.xpose.msra.mxu0 0
        %1425 = vmatprep.subr.bf16.mxu0 0
        %1426 = vmatpush1.bf16.xpose.msra.mxu0 0
        %1427 = vmatprep.subr.bf16.mxu0 0
        %1428 = vmatpush1.bf16.xpose.msra.mxu0 0
        %1429 = vmatprep.subr.bf16.mxu0 0
        %1430 = vmatpush1.bf16.xpose.msra.mxu0 0
        %1431 = vmatprep.subr.bf16.mxu0 0
        %1432 = vmatpush1.bf16.xpose.msra.mxu0 0
        %1433 = vmatprep.subr.bf16.mxu0 0
        %1434 = vmatpush1.bf16.xpose.msra.mxu0 0
        %1435 = vmatprep.subr.bf16.mxu0 0
        %1436 = vmatpush1.bf16.xpose.msra.mxu0 0
        %1437 = vmatprep.subr.bf16.mxu0 0
        %1438 = vmatpush1.bf16.xpose.msra.mxu0 %v1421
        %1439 = vmatprep.subr.bf16.mxu0 0
        %1440 = vmatpush2.bf16.xpose.msra.mxu0 0
        %1441 = vmatprep.subr.bf16.mxu0 0
        %1442 = vmatpush2.bf16.xpose.msra.mxu0 0
        %1443 = vmatprep.subr.bf16.mxu0 0
        %1444 = vmatpush2.bf16.xpose.msra.mxu0 0
        %1445 = vmatprep.subr.bf16.mxu0 0
        %1446 = vmatpush2.bf16.xpose.msra.mxu0 0
        %1447 = vmatprep.subr.bf16.mxu0 0
        %1448 = vmatpush2.bf16.xpose.msra.mxu0 0
        %1449 = vmatprep.subr.bf16.mxu0 0
        %1450 = vmatpush2.bf16.xpose.msra.mxu0 0
        %1451 = vmatprep.subr.bf16.mxu0 0
        %1452 = vmatpush2.bf16.xpose.msra.mxu0 0
        %1453 = vmatprep.subr.bf16.mxu0 0
        %1454 = vmatpush2.bf16.xpose.msra.mxu0 0
        %1455 = vmatprep.mubr.bf16.mxu0 0
        %1456 = vmatmul.mubr.bf16.gmra.mxu0 %v1418
        %v1457 = vpop.f32.mrf.mxu0
        %v1458 = vadd.f32 %v1323, %v1457
        %v1459 = vpop.f32.mrf.mxu0
        %v1460 = vpop.f32.mrf.mxu0
        %v1461 = vpop.f32.mrf.mxu0
        %1462 = vdwg.mxu0
        %v1464 = vsel %vm1324, %v1011, 0
        %v1467 = vsel %vm1324, %v1170, 0
        %1469 = vmatprep.subr.bf16.mxu0 0
        %1470 = vmatpush1.bf16.xpose.msra.mxu0 0
        %1471 = vmatprep.subr.bf16.mxu0 0
        %1472 = vmatpush1.bf16.xpose.msra.mxu0 0
        %1473 = vmatprep.subr.bf16.mxu0 0
        %1474 = vmatpush1.bf16.xpose.msra.mxu0 0
        %1475 = vmatprep.subr.bf16.mxu0 0
        %1476 = vmatpush1.bf16.xpose.msra.mxu0 0
        %1477 = vmatprep.subr.bf16.mxu0 0
        %1478 = vmatpush1.bf16.xpose.msra.mxu0 0
        %1479 = vmatprep.subr.bf16.mxu0 0
        %1480 = vmatpush1.bf16.xpose.msra.mxu0 0
        %1481 = vmatprep.subr.bf16.mxu0 0
        %1482 = vmatpush1.bf16.xpose.msra.mxu0 0
        %1483 = vmatprep.subr.bf16.mxu0 0
        %1484 = vmatpush1.bf16.xpose.msra.mxu0 %v1467
        %1485 = vmatprep.subr.bf16.mxu0 0
        %1486 = vmatpush2.bf16.xpose.msra.mxu0 0
        %1487 = vmatprep.subr.bf16.mxu0 0
        %1488 = vmatpush2.bf16.xpose.msra.mxu0 0
        %1489 = vmatprep.subr.bf16.mxu0 0
        %1490 = vmatpush2.bf16.xpose.msra.mxu0 0
        %1491 = vmatprep.subr.bf16.mxu0 0
        %1492 = vmatpush2.bf16.xpose.msra.mxu0 0
        %1493 = vmatprep.subr.bf16.mxu0 0
        %1494 = vmatpush2.bf16.xpose.msra.mxu0 0
        %1495 = vmatprep.subr.bf16.mxu0 0
        %1496 = vmatpush2.bf16.xpose.msra.mxu0 0
        %1497 = vmatprep.subr.bf16.mxu0 0
        %1498 = vmatpush2.bf16.xpose.msra.mxu0 0
        %1499 = vmatprep.subr.bf16.mxu0 0
        %1500 = vmatpush2.bf16.xpose.msra.mxu0 0
        %1501 = vmatprep.mubr.bf16.mxu0 0
        %1502 = vmatmul.mubr.bf16.gmra.mxu0 %v1464
        %v1503 = vpop.f32.mrf.mxu0
        %v1504 = vadd.f32 %v1323, %v1503
        %v1505 = vpop.f32.mrf.mxu0
        %v1506 = vpop.f32.mrf.mxu0
        %v1507 = vpop.f32.mrf.mxu0
        %1508 = vdwg.mxu0
        %v1509 = vsel %vm1324, %v1366, -inf
        %1510 = vmax.xlane.f32.xlu0 %v1509
        %v1511 = vpop.xlane.xlu0 %1510
        %v1512 = vsel %vm1324, %v1412, -inf
        %1513 = vmax.xlane.f32.xlu0 %v1512
        %v1514 = vpop.xlane.xlu0 %1513
        %v1515 = vsel %vm1324, %v1458, -inf
        %1516 = vmax.xlane.f32.xlu0 %v1515
        %v1517 = vpop.xlane.xlu0 %1516
        %v1518 = vsel %vm1324, %v1504, -inf
        %1519 = vmax.xlane.f32.xlu0 %v1518
        %v1520 = vpop.xlane.xlu0 %1519
        %v1521 = vsub.f32 %v1366, %v1511
        %v1522 = vsub.f32 %v1412, %v1514
        %v1523 = vsub.f32 %v1458, %v1517
        %v1524 = vsub.f32 %v1504, %v1520
        %v1525 = vmul.f32 %v1521, 1.442695
        %v1526 = vpow.pop %v1525
        %v1527 = vmul.f32 %v1522, 1.442695
        %v1528 = vpow.pop %v1527
        %v1529 = vmul.f32 %v1523, 1.442695
        %v1530 = vpow.pop %v1529
        %v1531 = vmul.f32 %v1524, 1.442695
        %v1532 = vpow.pop %v1531
        %v1533 = vsel %vm1324, %v1526, 0.0
        %1534 = vadd.xlane.f32.xlu0 %v1533
        %v1535 = vpop.xlane.xlu0 %1534
        %v1536 = vsel %vm1324, %v1528, 0.0
        %1537 = vadd.xlane.f32.xlu0 %v1536
        %v1538 = vpop.xlane.xlu0 %1537
        %v1539 = vsel %vm1324, %v1530, 0.0
        %1540 = vadd.xlane.f32.xlu0 %v1539
        %v1541 = vpop.xlane.xlu0 %1540
        %v1542 = vsel %vm1324, %v1532, 0.0
        %1543 = vadd.xlane.f32.xlu0 %v1542
        %v1544 = vpop.xlane.xlu0 %1543
        %v1545 = vrcp.pop %v1535
        %v1546 = vrcp.pop %v1538
        %v1547 = vrcp.pop %v1541
        %v1548 = vrcp.pop %v1544
        %v1549 = vmul.f32 %v1526, %v1545
        %v1550 = vmul.f32 %v1528, %v1546
        %v1551 = vmul.f32 %v1530, %v1547
        %v1552 = vmul.f32 %v1532, %v1548
        %v1553 = vpack.c.bf16 %v1549, %v1549
        %v1554 = vpack.c.bf16 %v1550, %v1550
        %v1555 = vpack.c.bf16 %v1551, %v1551
        %v1556 = vpack.c.bf16 %v1552, %v1552
        %vm1557 = vcmask 60416
        %1558 = vst.msk [vmem:[%s781] sm:$0xf] %vm1557, %v1553
        %1559 = vst.msk [vmem:[%s781 + $0x4] sm:$0xf] %vm1557, %v1554
        %1560 = vst.msk [vmem:[%s781 + $0x8] sm:$0xf] %vm1557, %v1555
        %1561 = vst.msk [vmem:[%s781 + $0xc] sm:$0xf] %vm1557, %v1556
        %v1563 = vsel %vm1324, %v1553, 0
        %vm1565 = vcmask 1043456
        %v1567 = vsel %vm1565, %v1319, 0
        %1569 = vmatprep.subr.bf16.mxu0 0
        %1570 = vmatpush1.bf16.msra.mxu0 0
        %1571 = vmatprep.subr.bf16.mxu0 0
        %1572 = vmatpush1.bf16.msra.mxu0 0
        %1573 = vmatprep.subr.bf16.mxu0 0
        %1574 = vmatpush1.bf16.msra.mxu0 0
        %1575 = vmatprep.subr.bf16.mxu0 0
        %1576 = vmatpush1.bf16.msra.mxu0 0
        %1577 = vmatprep.subr.bf16.mxu0 0
        %1578 = vmatpush1.bf16.msra.mxu0 0
        %1579 = vmatprep.subr.bf16.mxu0 0
        %1580 = vmatpush1.bf16.msra.mxu0 0
        %1581 = vmatprep.subr.bf16.mxu0 0
        %1582 = vmatpush1.bf16.msra.mxu0 0
        %1583 = vmatprep.subr.bf16.mxu0 0
        %1584 = vmatpush1.bf16.msra.mxu0 %v1567
        %1585 = vmatprep.subr.bf16.mxu0 0
        %1586 = vmatpush2.bf16.msra.mxu0 0
        %1587 = vmatprep.subr.bf16.mxu0 0
        %1588 = vmatpush2.bf16.msra.mxu0 0
        %1589 = vmatprep.subr.bf16.mxu0 0
        %1590 = vmatpush2.bf16.msra.mxu0 0
        %1591 = vmatprep.subr.bf16.mxu0 0
        %1592 = vmatpush2.bf16.msra.mxu0 0
        %1593 = vmatprep.subr.bf16.mxu0 0
        %1594 = vmatpush2.bf16.msra.mxu0 0
        %1595 = vmatprep.subr.bf16.mxu0 0
        %1596 = vmatpush2.bf16.msra.mxu0 0
        %1597 = vmatprep.subr.bf16.mxu0 0
        %1598 = vmatpush2.bf16.msra.mxu0 0
        %1599 = vmatprep.subr.bf16.mxu0 0
        %1600 = vmatpush2.bf16.msra.mxu0 0
        %1601 = vmatprep.mubr.bf16.mxu0 0
        %1602 = vmatmul.mubr.bf16.gmra.mxu0 %v1563
        %v1603 = vpop.f32.mrf.mxu0
        %v1604 = vadd.f32 0.0, %v1603
        %v1605 = vpop.f32.mrf.mxu0
        %v1606 = vpop.f32.mrf.mxu0
        %v1607 = vpop.f32.mrf.mxu0
        %1608 = vdwg.mxu0
        %v1610 = vsel %vm1324, %v1554, 0
        %v1613 = vsel %vm1565, %v1320, 0
        %1615 = vmatprep.subr.bf16.mxu0 0
        %1616 = vmatpush1.bf16.msra.mxu0 0
        %1617 = vmatprep.subr.bf16.mxu0 0
        %1618 = vmatpush1.bf16.msra.mxu0 0
        %1619 = vmatprep.subr.bf16.mxu0 0
        %1620 = vmatpush1.bf16.msra.mxu0 0
        %1621 = vmatprep.subr.bf16.mxu0 0
        %1622 = vmatpush1.bf16.msra.mxu0 0
        %1623 = vmatprep.subr.bf16.mxu0 0
        %1624 = vmatpush1.bf16.msra.mxu0 0
        %1625 = vmatprep.subr.bf16.mxu0 0
        %1626 = vmatpush1.bf16.msra.mxu0 0
        %1627 = vmatprep.subr.bf16.mxu0 0
        %1628 = vmatpush1.bf16.msra.mxu0 0
        %1629 = vmatprep.subr.bf16.mxu0 0
        %1630 = vmatpush1.bf16.msra.mxu0 %v1613
        %1631 = vmatprep.subr.bf16.mxu0 0
        %1632 = vmatpush2.bf16.msra.mxu0 0
        %1633 = vmatprep.subr.bf16.mxu0 0
        %1634 = vmatpush2.bf16.msra.mxu0 0
        %1635 = vmatprep.subr.bf16.mxu0 0
        %1636 = vmatpush2.bf16.msra.mxu0 0
        %1637 = vmatprep.subr.bf16.mxu0 0
        %1638 = vmatpush2.bf16.msra.mxu0 0
        %1639 = vmatprep.subr.bf16.mxu0 0
        %1640 = vmatpush2.bf16.msra.mxu0 0
        %1641 = vmatprep.subr.bf16.mxu0 0
        %1642 = vmatpush2.bf16.msra.mxu0 0
        %1643 = vmatprep.subr.bf16.mxu0 0
        %1644 = vmatpush2.bf16.msra.mxu0 0
        %1645 = vmatprep.subr.bf16.mxu0 0
        %1646 = vmatpush2.bf16.msra.mxu0 0
        %1647 = vmatprep.mubr.bf16.mxu0 0
        %1648 = vmatmul.mubr.bf16.gmra.mxu0 %v1610
        %v1649 = vpop.f32.mrf.mxu0
        %v1650 = vadd.f32 0.0, %v1649
        %v1651 = vpop.f32.mrf.mxu0
        %v1652 = vpop.f32.mrf.mxu0
        %v1653 = vpop.f32.mrf.mxu0
        %1654 = vdwg.mxu0
        %v1656 = vsel %vm1324, %v1555, 0
        %v1659 = vsel %vm1565, %v1321, 0
        %1661 = vmatprep.subr.bf16.mxu0 0
        %1662 = vmatpush1.bf16.msra.mxu0 0
        %1663 = vmatprep.subr.bf16.mxu0 0
        %1664 = vmatpush1.bf16.msra.mxu0 0
        %1665 = vmatprep.subr.bf16.mxu0 0
        %1666 = vmatpush1.bf16.msra.mxu0 0
        %1667 = vmatprep.subr.bf16.mxu0 0
        %1668 = vmatpush1.bf16.msra.mxu0 0
        %1669 = vmatprep.subr.bf16.mxu0 0
        %1670 = vmatpush1.bf16.msra.mxu0 0
        %1671 = vmatprep.subr.bf16.mxu0 0
        %1672 = vmatpush1.bf16.msra.mxu0 0
        %1673 = vmatprep.subr.bf16.mxu0 0
        %1674 = vmatpush1.bf16.msra.mxu0 0
        %1675 = vmatprep.subr.bf16.mxu0 0
        %1676 = vmatpush1.bf16.msra.mxu0 %v1659
        %1677 = vmatprep.subr.bf16.mxu0 0
        %1678 = vmatpush2.bf16.msra.mxu0 0
        %1679 = vmatprep.subr.bf16.mxu0 0
        %1680 = vmatpush2.bf16.msra.mxu0 0
        %1681 = vmatprep.subr.bf16.mxu0 0
        %1682 = vmatpush2.bf16.msra.mxu0 0
        %1683 = vmatprep.subr.bf16.mxu0 0
        %1684 = vmatpush2.bf16.msra.mxu0 0
        %1685 = vmatprep.subr.bf16.mxu0 0
        %1686 = vmatpush2.bf16.msra.mxu0 0
        %1687 = vmatprep.subr.bf16.mxu0 0
        %1688 = vmatpush2.bf16.msra.mxu0 0
        %1689 = vmatprep.subr.bf16.mxu0 0
        %1690 = vmatpush2.bf16.msra.mxu0 0
        %1691 = vmatprep.subr.bf16.mxu0 0
        %1692 = vmatpush2.bf16.msra.mxu0 0
        %1693 = vmatprep.mubr.bf16.mxu0 0
        %1694 = vmatmul.mubr.bf16.gmra.mxu0 %v1656
        %v1695 = vpop.f32.mrf.mxu0
        %v1696 = vadd.f32 0.0, %v1695
        %v1697 = vpop.f32.mrf.mxu0
        %v1698 = vpop.f32.mrf.mxu0
        %v1699 = vpop.f32.mrf.mxu0
        %1700 = vdwg.mxu0
        %v1702 = vsel %vm1324, %v1556, 0
        %v1705 = vsel %vm1565, %v1322, 0
        %1707 = vmatprep.subr.bf16.mxu0 0
        %1708 = vmatpush1.bf16.msra.mxu0 0
        %1709 = vmatprep.subr.bf16.mxu0 0
        %1710 = vmatpush1.bf16.msra.mxu0 0
        %1711 = vmatprep.subr.bf16.mxu0 0
        %1712 = vmatpush1.bf16.msra.mxu0 0
        %1713 = vmatprep.subr.bf16.mxu0 0
        %1714 = vmatpush1.bf16.msra.mxu0 0
        %1715 = vmatprep.subr.bf16.mxu0 0
        %1716 = vmatpush1.bf16.msra.mxu0 0
        %1717 = vmatprep.subr.bf16.mxu0 0
        %1718 = vmatpush1.bf16.msra.mxu0 0
        %1719 = vmatprep.subr.bf16.mxu0 0
        %1720 = vmatpush1.bf16.msra.mxu0 0
        %1721 = vmatprep.subr.bf16.mxu0 0
        %1722 = vmatpush1.bf16.msra.mxu0 %v1705
        %1723 = vmatprep.subr.bf16.mxu0 0
        %1724 = vmatpush2.bf16.msra.mxu0 0
        %1725 = vmatprep.subr.bf16.mxu0 0
        %1726 = vmatpush2.bf16.msra.mxu0 0
        %1727 = vmatprep.subr.bf16.mxu0 0
        %1728 = vmatpush2.bf16.msra.mxu0 0
        %1729 = vmatprep.subr.bf16.mxu0 0
        %1730 = vmatpush2.bf16.msra.mxu0 0
        %1731 = vmatprep.subr.bf16.mxu0 0
        %1732 = vmatpush2.bf16.msra.mxu0 0
        %1733 = vmatprep.subr.bf16.mxu0 0
        %1734 = vmatpush2.bf16.msra.mxu0 0
        %1735 = vmatprep.subr.bf16.mxu0 0
        %1736 = vmatpush2.bf16.msra.mxu0 0
        %1737 = vmatprep.subr.bf16.mxu0 0
        %1738 = vmatpush2.bf16.msra.mxu0 0
        %1739 = vmatprep.mubr.bf16.mxu0 0
        %1740 = vmatmul.mubr.bf16.gmra.mxu0 %v1702
        %v1741 = vpop.f32.mrf.mxu0
        %v1742 = vadd.f32 0.0, %v1741
        %v1743 = vpop.f32.mrf.mxu0
        %v1744 = vpop.f32.mrf.mxu0
        %v1745 = vpop.f32.mrf.mxu0
        %1746 = vdwg.mxu0
        %v1747 = vcombine.low %v1604, %v1696
        %v1748 = vcombine.high %v1604, %v1696
        %v1750 = vunpack.c.l.s4 1983009808
        %v1751 = vunpack.c.0.s8 %v1750
        %v1752 = vlaneseq
        %v1753 = vshrl.u32 %v1752, 7
        %v1754 = vsub.s32 %v1751, %v1753
        %v1755 = vrot.slane %v1747, %v1754
        %v1757 = vunpack.c.l.s4 1983009808
        %v1758 = vunpack.c.0.s8 %v1757
        %v1759 = vlaneseq
        %v1760 = vshrl.u32 %v1759, 7
        %v1761 = vsub.s32 %v1758, %v1760
        %v1762 = vrot.slane %v1748, %v1761
        %v1763 = vcombine.low %v1650, %v1742
        %v1764 = vcombine.high %v1650, %v1742
        %v1766 = vunpack.c.l.s4 1983009808
        %v1767 = vunpack.c.0.s8 %v1766
        %v1768 = vlaneseq
        %v1769 = vshrl.u32 %v1768, 7
        %v1770 = vsub.s32 %v1767, %v1769
        %v1771 = vrot.slane %v1763, %v1770
        %v1773 = vunpack.c.l.s4 1983009808
        %v1774 = vunpack.c.0.s8 %v1773
        %v1775 = vlaneseq
        %v1776 = vshrl.u32 %v1775, 7
        %v1777 = vsub.s32 %v1774, %v1776
        %v1778 = vrot.slane %v1764, %v1777
        %v1779 = vcombine.low %v1755, %v1771
        %v1780 = vcombine.high %v1755, %v1771
        %v1782 = vunpack.c.l.s4 1934713408
        %v1783 = vunpack.c.0.s8 %v1782
        %v1784 = vlaneseq
        %v1785 = vshrl.u32 %v1784, 7
        %v1786 = vsub.s32 %v1783, %v1785
        %v1787 = vrot.slane %v1779, %v1786
        %v1789 = vunpack.c.l.s4 1934713408
        %v1790 = vunpack.c.0.s8 %v1789
        %v1791 = vlaneseq
        %v1792 = vshrl.u32 %v1791, 7
        %v1793 = vsub.s32 %v1790, %v1792
        %v1794 = vrot.slane %v1780, %v1793
        %v1795 = vcombine.low %v1762, %v1778
        %v1796 = vcombine.high %v1762, %v1778
        %v1798 = vunpack.c.l.s4 1934713408
        %v1799 = vunpack.c.0.s8 %v1798
        %v1800 = vlaneseq
        %v1801 = vshrl.u32 %v1800, 7
        %v1802 = vsub.s32 %v1799, %v1801
        %v1803 = vrot.slane %v1795, %v1802
        %v1805 = vunpack.c.l.s4 1934713408
        %v1806 = vunpack.c.0.s8 %v1805
        %v1807 = vlaneseq
        %v1808 = vshrl.u32 %v1807, 7
        %v1809 = vsub.s32 %v1806, %v1808
        %v1810 = vrot.slane %v1796, %v1809
        %v1811 = vcombine.high %v1787, 0.0
        %v1812 = vcombine.high %v1794, 0.0
        %v1813 = vcombine.high %v1803, 0.0
        %v1814 = vcombine.high %v1810, 0.0
        %v1815 = vcombine.low %v1787, %v1794
        %v1817 = vunpack.c.l.s4 1983009808
        %v1818 = vunpack.c.0.s8 %v1817
        %v1819 = vlaneseq
        %v1820 = vshrl.u32 %v1819, 7
        %v1821 = vsub.s32 %v1818, %v1820
        %v1822 = vrot.slane %v1815, %v1821
        %v1823 = vcombine.low %v1811, %v1812
        %v1825 = vunpack.c.l.s4 1983009808
        %v1826 = vunpack.c.0.s8 %v1825
        %v1827 = vlaneseq
        %v1828 = vshrl.u32 %v1827, 7
        %v1829 = vsub.s32 %v1826, %v1828
        %v1830 = vrot.slane %v1823, %v1829
        %v1831 = vcombine.low %v1803, %v1810
        %v1833 = vunpack.c.l.s4 1983009808
        %v1834 = vunpack.c.0.s8 %v1833
        %v1835 = vlaneseq
        %v1836 = vshrl.u32 %v1835, 7
        %v1837 = vsub.s32 %v1834, %v1836
        %v1838 = vrot.slane %v1831, %v1837
        %v1839 = vcombine.low %v1813, %v1814
        %v1841 = vunpack.c.l.s4 1983009808
        %v1842 = vunpack.c.0.s8 %v1841
        %v1843 = vlaneseq
        %v1844 = vshrl.u32 %v1843, 7
        %v1845 = vsub.s32 %v1842, %v1844
        %v1846 = vrot.slane %v1839, %v1845
        %v1847 = vcombine.low %v1822, %v1830
        %v1848 = vcombine.high %v1822, %v1830
        %v1850 = vunpack.c.l.s4 1934713408
        %v1851 = vunpack.c.0.s8 %v1850
        %v1852 = vlaneseq
        %v1853 = vshrl.u32 %v1852, 7
        %v1854 = vsub.s32 %v1851, %v1853
        %v1855 = vrot.slane %v1847, %v1854
        %v1857 = vunpack.c.l.s4 1934713408
        %v1858 = vunpack.c.0.s8 %v1857
        %v1859 = vlaneseq
        %v1860 = vshrl.u32 %v1859, 7
        %v1861 = vsub.s32 %v1858, %v1860
        %v1862 = vrot.slane %v1848, %v1861
        %v1863 = vcombine.low %v1838, %v1846
        %v1864 = vcombine.high %v1838, %v1846
        %v1866 = vunpack.c.l.s4 1934713408
        %v1867 = vunpack.c.0.s8 %v1866
        %v1868 = vlaneseq
        %v1869 = vshrl.u32 %v1868, 7
        %v1870 = vsub.s32 %v1867, %v1869
        %v1871 = vrot.slane %v1863, %v1870
        %v1873 = vunpack.c.l.s4 1934713408
        %v1874 = vunpack.c.0.s8 %v1873
        %v1875 = vlaneseq
        %v1876 = vshrl.u32 %v1875, 7
        %v1877 = vsub.s32 %v1874, %v1876
        %v1878 = vrot.slane %v1864, %v1877
        %v1879 = vcombine.low %v1855, %v1871
        %v1880 = vcombine.high %v1855, %v1871
        %v1881 = vcombine.low %v1862, %v1878
        %v1882 = vcombine.high %v1862, %v1878
        %1884 = vrot.lane.b32.xlu0 %v1880, 8
        %v1885 = vpop.permute.xlu0 %1884
        %1888 = vrot.lane.b32.xlu0 %v1881, 16
        %v1889 = vpop.permute.xlu0 %1888
        %1892 = vrot.lane.b32.xlu0 %v1882, 24
        %v1893 = vpop.permute.xlu0 %1892
        %v1895 = vsel %vm1324, %v1879, %v1885
        %vm1896 = vcmask 130048
        %v1897 = vsel %vm1896, %v1895, %v1889
        %vm1898 = vcmask 195584
        %v1899 = vsel %vm1898, %v1897, %v1893
        %v1900 = vpack.c.bf16 %v1899, %v1899
        %v1901 = vld [vmem:[%s6] sm:$0xf]
        %v1902 = vld [vmem:[%s6 + $0x4] sm:$0xf]
        %v1903 = vld [vmem:[%s6 + $0x8] sm:$0xf]
        %v1904 = vld [vmem:[%s6 + $0xc] sm:$0xf]
        %v1905 = vld [vmem:[#allocation11] sm:$0x1]
        %v1907 = vlaneseq
        %v1908 = vshrl.u32 %v1907, 7
        %v1909 = vsub.s32 0, %v1908
        %v1910 = vrot.slane %v1905, %v1909
        %v1916 = vunpack.c.l.b16 %v1901
        %v1917 = vunpack.c.l.b16 %v1902
        %v1918 = vunpack.c.l.b16 %v1903
        %v1919 = vunpack.c.l.b16 %v1904
        %v1920 = vpack.c.b16 %v1917, %v1916
        %v1921 = vpack.c.b16 %v1919, %v1918
        %v1925 = vsel %vm817, %v1900, 0
        %1927 = vmatprep.subr.bf16.mxu0 0
        %1928 = vmatpush1.bf16.msra.mxu0 0
        %1929 = vmatprep.subr.bf16.mxu0 0
        %1930 = vmatpush1.bf16.msra.mxu0 0
        %1931 = vmatprep.subr.bf16.mxu0 0
        %1932 = vmatpush1.bf16.msra.mxu0 0
        %1933 = vmatprep.subr.bf16.mxu0 0
        %1934 = vmatpush1.bf16.msra.mxu0 0
        %1935 = vmatprep.subr.bf16.mxu0 0
        %1936 = vmatpush1.bf16.msra.mxu0 0
        %1937 = vmatprep.subr.bf16.mxu0 0
        %1938 = vmatpush1.bf16.msra.mxu0 0
        %1939 = vmatprep.subr.bf16.mxu0 0
        %1940 = vmatpush1.bf16.msra.mxu0 %v1921
        %1941 = vmatprep.subr.bf16.mxu0 0
        %1942 = vmatpush1.bf16.msra.mxu0 %v1920
        %1943 = vmatprep.subr.bf16.mxu0 0
        %1944 = vmatpush2.bf16.msra.mxu0 0
        %1945 = vmatprep.subr.bf16.mxu0 0
        %1946 = vmatpush2.bf16.msra.mxu0 0
        %1947 = vmatprep.subr.bf16.mxu0 0
        %1948 = vmatpush2.bf16.msra.mxu0 0
        %1949 = vmatprep.subr.bf16.mxu0 0
        %1950 = vmatpush2.bf16.msra.mxu0 0
        %1951 = vmatprep.subr.bf16.mxu0 0
        %1952 = vmatpush2.bf16.msra.mxu0 0
        %1953 = vmatprep.subr.bf16.mxu0 0
        %1954 = vmatpush2.bf16.msra.mxu0 0
        %1955 = vmatprep.subr.bf16.mxu0 0
        %1956 = vmatpush2.bf16.msra.mxu0 0
        %1957 = vmatprep.subr.bf16.mxu0 0
        %1958 = vmatpush2.bf16.msra.mxu0 0
        %1959 = vmatprep.mubr.bf16.mxu0 0
        %1960 = vmatmul.mubr.bf16.gmra.mxu0 %v1925
        %v1961 = vpop.f32.mrf.mxu0
        %v1962 = vadd.f32 %v1910, %v1961
        %v1963 = vpop.f32.mrf.mxu0
        %v1964 = vpop.f32.mrf.mxu0
        %v1965 = vpop.f32.mrf.mxu0
        %1966 = vdwg.mxu0
        %v1967 = vunpack.c.l.bf16 %v790
        %v1968 = vadd.f32 %v1967, %v1962
        %v1969 = vsel %vm817, %v1968, 0.0
        %1970 = vadd.xlane.f32.xlu0 %v1969
        %v1971 = vpop.xlane.xlu0 %1970
        %v1972 = vrcp.pop 32.0
        %v1973 = vmul.f32 %v1971, %v1972
        %v1974 = vsub.f32 %v1968, %v1973
        %v1975 = vmul.f32 %v1974, %v1974
        %v1976 = vsel %vm817, %v1975, 0.0
        %1977 = vadd.xlane.f32.xlu0 %v1976
        %v1978 = vpop.xlane.xlu0 %1977
        %v1979 = vmul.f32 %v1978, %v1972
        %v1980 = vadd.f32 %v1979, 1e-05
        %v1981 = vrsqrt.pop %v1980
        %v1982 = vmul.f32 %v1974, %v1981
        %v1983 = vlaneseq
        %v1984 = vshrl.u32 %v1983, 7
        %v1985 = vsub.s32 0, %v1984
        %v1986 = vrot.slane %v792, %v1985
        %v1987 = vmul.f32 %v1982, %v1986
        %v1988 = vlaneseq
        %v1989 = vshrl.u32 %v1988, 7
        %v1990 = vsub.s32 0, %v1989
        %v1991 = vrot.slane %v793, %v1990
        %v1992 = vadd.f32 %v1987, %v1991
        %v1993 = vpack.c.bf16 %v1992, %v1992
        %v1994 = vld [vmem:[%s8] sm:$0xf]
        %v1995 = vld [vmem:[%s8 + $0x4] sm:$0xf]
        %v1996 = vld [vmem:[%s8 + $0x8] sm:$0xf]
        %v1997 = vld [vmem:[%s8 + $0xc] sm:$0xf]
        %v1998 = vld [vmem:[#allocation13] sm:$0x1]
        %v2000 = vlaneseq
        %v2001 = vshrl.u32 %v2000, 7
        %v2002 = vsub.s32 0, %v2001
        %v2003 = vrot.slane %v1998, %v2002
        %v2009 = vunpack.c.l.b16 %v1994
        %v2010 = vunpack.c.l.b16 %v1995
        %v2011 = vunpack.c.l.b16 %v1996
        %v2012 = vunpack.c.l.b16 %v1997
        %v2013 = vpack.c.b16 %v2010, %v2009
        %v2014 = vpack.c.b16 %v2012, %v2011
        %v2018 = vsel %vm817, %v1993, 0
        %2020 = vmatprep.subr.bf16.mxu0 0
        %2021 = vmatpush1.bf16.msra.mxu0 0
        %2022 = vmatprep.subr.bf16.mxu0 0
        %2023 = vmatpush1.bf16.msra.mxu0 0
        %2024 = vmatprep.subr.bf16.mxu0 0
        %2025 = vmatpush1.bf16.msra.mxu0 0
        %2026 = vmatprep.subr.bf16.mxu0 0
        %2027 = vmatpush1.bf16.msra.mxu0 0
        %2028 = vmatprep.subr.bf16.mxu0 0
        %2029 = vmatpush1.bf16.msra.mxu0 0
        %2030 = vmatprep.subr.bf16.mxu0 0
        %2031 = vmatpush1.bf16.msra.mxu0 0
        %2032 = vmatprep.subr.bf16.mxu0 0
        %2033 = vmatpush1.bf16.msra.mxu0 %v2014
        %2034 = vmatprep.subr.bf16.mxu0 0
        %2035 = vmatpush1.bf16.msra.mxu0 %v2013
        %2036 = vmatprep.subr.bf16.mxu0 0
        %2037 = vmatpush2.bf16.msra.mxu0 0
        %2038 = vmatprep.subr.bf16.mxu0 0
        %2039 = vmatpush2.bf16.msra.mxu0 0
        %2040 = vmatprep.subr.bf16.mxu0 0
        %2041 = vmatpush2.bf16.msra.mxu0 0
        %2042 = vmatprep.subr.bf16.mxu0 0
        %2043 = vmatpush2.bf16.msra.mxu0 0
        %2044 = vmatprep.subr.bf16.mxu0 0
        %2045 = vmatpush2.bf16.msra.mxu0 0
        %2046 = vmatprep.subr.bf16.mxu0 0
        %2047 = vmatpush2.bf16.msra.mxu0 0
        %2048 = vmatprep.subr.bf16.mxu0 0
        %2049 = vmatpush2.bf16.msra.mxu0 0
        %2050 = vmatprep.subr.bf16.mxu0 0
        %2051 = vmatpush2.bf16.msra.mxu0 0
        %2052 = vmatprep.mubr.bf16.mxu0 0
        %2053 = vmatmul.mubr.bf16.gmra.mxu0 %v2018
        %v2054 = vpop.f32.mrf.mxu0
        %v2055 = vadd.f32 %v2003, %v2054
        %v2056 = vpop.f32.mrf.mxu0
        %v2057 = vpop.f32.mrf.mxu0
        %v2058 = vpop.f32.mrf.mxu0
        %2059 = vdwg.mxu0
        %2060 = vrot.lane.b32.xlu0 %v2013, 96
        %v2061 = vpop.permute.xlu0 %2060
        %2062 = vrot.lane.b32.xlu0 %v2014, 96
        %v2063 = vpop.permute.xlu0 %2062
        %2066 = vrot.lane.b32.xlu0 %v2003, 96
        %v2067 = vpop.permute.xlu0 %2066
        %v2070 = vsel %vm817, %v791, 0
        %2072 = vmatprep.subr.bf16.mxu0 0
        %2073 = vmatpush1.bf16.msra.mxu0 0
        %2074 = vmatprep.subr.bf16.mxu0 0
        %2075 = vmatpush1.bf16.msra.mxu0 0
        %2076 = vmatprep.subr.bf16.mxu0 0
        %2077 = vmatpush1.bf16.msra.mxu0 0
        %2078 = vmatprep.subr.bf16.mxu0 0
        %2079 = vmatpush1.bf16.msra.mxu0 0
        %2080 = vmatprep.subr.bf16.mxu0 0
        %2081 = vmatpush1.bf16.msra.mxu0 0
        %2082 = vmatprep.subr.bf16.mxu0 0
        %2083 = vmatpush1.bf16.msra.mxu0 0
        %2084 = vmatprep.subr.bf16.mxu0 0
        %2085 = vmatpush1.bf16.msra.mxu0 %v2063
        %2086 = vmatprep.subr.bf16.mxu0 0
        %2087 = vmatpush1.bf16.msra.mxu0 %v2061
        %2088 = vmatprep.subr.bf16.mxu0 0
        %2089 = vmatpush2.bf16.msra.mxu0 0
        %2090 = vmatprep.subr.bf16.mxu0 0
        %2091 = vmatpush2.bf16.msra.mxu0 0
        %2092 = vmatprep.subr.bf16.mxu0 0
        %2093 = vmatpush2.bf16.msra.mxu0 0
        %2094 = vmatprep.subr.bf16.mxu0 0
        %2095 = vmatpush2.bf16.msra.mxu0 0
        %2096 = vmatprep.subr.bf16.mxu0 0
        %2097 = vmatpush2.bf16.msra.mxu0 0
        %2098 = vmatprep.subr.bf16.mxu0 0
        %2099 = vmatpush2.bf16.msra.mxu0 0
        %2100 = vmatprep.subr.bf16.mxu0 0
        %2101 = vmatpush2.bf16.msra.mxu0 0
        %2102 = vmatprep.subr.bf16.mxu0 0
        %2103 = vmatpush2.bf16.msra.mxu0 0
        %2104 = vmatprep.mubr.bf16.mxu0 0
        %2105 = vmatmul.mubr.bf16.gmra.mxu0 %v2070
        %v2106 = vpop.f32.mrf.mxu0
        %v2107 = vadd.f32 %v2067, %v2106
        %v2108 = vpop.f32.mrf.mxu0
        %v2109 = vpop.f32.mrf.mxu0
        %v2110 = vpop.f32.mrf.mxu0
        %2111 = vdwg.mxu0
        %v2112 = vmul.f32 %v2055, 0.35355338
        %2114 = vrot.lane.b32.xlu0 %v2112, 120
        %v2115 = vpop.permute.xlu0 %2114
        %2117 = vrot.lane.b32.xlu0 %v2112, 112
        %v2118 = vpop.permute.xlu0 %2117
        %2120 = vrot.lane.b32.xlu0 %v2112, 104
        %v2121 = vpop.permute.xlu0 %2120
        %v2123 = vcombine.low %v2112, %v2118
        %v2124 = vcombine.high %v2112, %v2118
        %v2126 = vunpack.c.l.s4 1983009808
        %v2127 = vunpack.c.0.s8 %v2126
        %v2128 = vlaneseq
        %v2129 = vshrl.u32 %v2128, 7
        %v2130 = vsub.s32 %v2127, %v2129
        %v2131 = vrot.slane %v2123, %v2130
        %v2133 = vunpack.c.l.s4 1983009808
        %v2134 = vunpack.c.0.s8 %v2133
        %v2135 = vlaneseq
        %v2136 = vshrl.u32 %v2135, 7
        %v2137 = vsub.s32 %v2134, %v2136
        %v2138 = vrot.slane %v2124, %v2137
        %v2139 = vcombine.low %v2115, %v2121
        %v2140 = vcombine.high %v2115, %v2121
        %v2142 = vunpack.c.l.s4 1983009808
        %v2143 = vunpack.c.0.s8 %v2142
        %v2144 = vlaneseq
        %v2145 = vshrl.u32 %v2144, 7
        %v2146 = vsub.s32 %v2143, %v2145
        %v2147 = vrot.slane %v2139, %v2146
        %v2149 = vunpack.c.l.s4 1983009808
        %v2150 = vunpack.c.0.s8 %v2149
        %v2151 = vlaneseq
        %v2152 = vshrl.u32 %v2151, 7
        %v2153 = vsub.s32 %v2150, %v2152
        %v2154 = vrot.slane %v2140, %v2153
        %v2155 = vcombine.low %v2131, %v2147
        %v2156 = vcombine.high %v2131, %v2147
        %v2158 = vunpack.c.l.s4 1934713408
        %v2159 = vunpack.c.0.s8 %v2158
        %v2160 = vlaneseq
        %v2161 = vshrl.u32 %v2160, 7
        %v2162 = vsub.s32 %v2159, %v2161
        %v2163 = vrot.slane %v2155, %v2162
        %v2165 = vunpack.c.l.s4 1934713408
        %v2166 = vunpack.c.0.s8 %v2165
        %v2167 = vlaneseq
        %v2168 = vshrl.u32 %v2167, 7
        %v2169 = vsub.s32 %v2166, %v2168
        %v2170 = vrot.slane %v2156, %v2169
        %v2171 = vcombine.low %v2138, %v2154
        %v2172 = vcombine.high %v2138, %v2154
        %v2174 = vunpack.c.l.s4 1934713408
        %v2175 = vunpack.c.0.s8 %v2174
        %v2176 = vlaneseq
        %v2177 = vshrl.u32 %v2176, 7
        %v2178 = vsub.s32 %v2175, %v2177
        %v2179 = vrot.slane %v2171, %v2178
        %v2181 = vunpack.c.l.s4 1934713408
        %v2182 = vunpack.c.0.s8 %v2181
        %v2183 = vlaneseq
        %v2184 = vshrl.u32 %v2183, 7
        %v2185 = vsub.s32 %v2182, %v2184
        %v2186 = vrot.slane %v2172, %v2185
        %v2187 = vcombine.high %v2163, 0.0
        %v2188 = vcombine.high %v2170, 0.0
        %v2189 = vcombine.high %v2179, 0.0
        %v2190 = vcombine.high %v2186, 0.0
        %v2191 = vcombine.low %v2163, %v2170
        %v2193 = vunpack.c.l.s4 1983009808
        %v2194 = vunpack.c.0.s8 %v2193
        %v2195 = vlaneseq
        %v2196 = vshrl.u32 %v2195, 7
        %v2197 = vsub.s32 %v2194, %v2196
        %v2198 = vrot.slane %v2191, %v2197
        %v2199 = vcombine.low %v2187, %v2188
        %v2201 = vunpack.c.l.s4 1983009808
        %v2202 = vunpack.c.0.s8 %v2201
        %v2203 = vlaneseq
        %v2204 = vshrl.u32 %v2203, 7
        %v2205 = vsub.s32 %v2202, %v2204
        %v2206 = vrot.slane %v2199, %v2205
        %v2207 = vcombine.low %v2179, %v2186
        %v2209 = vunpack.c.l.s4 1983009808
        %v2210 = vunpack.c.0.s8 %v2209
        %v2211 = vlaneseq
        %v2212 = vshrl.u32 %v2211, 7
        %v2213 = vsub.s32 %v2210, %v2212
        %v2214 = vrot.slane %v2207, %v2213
        %v2215 = vcombine.low %v2189, %v2190
        %v2217 = vunpack.c.l.s4 1983009808
        %v2218 = vunpack.c.0.s8 %v2217
        %v2219 = vlaneseq
        %v2220 = vshrl.u32 %v2219, 7
        %v2221 = vsub.s32 %v2218, %v2220
        %v2222 = vrot.slane %v2215, %v2221
        %v2223 = vcombine.low %v2198, %v2206
        %v2224 = vcombine.high %v2198, %v2206
        %v2226 = vunpack.c.l.s4 1934713408
        %v2227 = vunpack.c.0.s8 %v2226
        %v2228 = vlaneseq
        %v2229 = vshrl.u32 %v2228, 7
        %v2230 = vsub.s32 %v2227, %v2229
        %v2231 = vrot.slane %v2223, %v2230
        %v2233 = vunpack.c.l.s4 1934713408
        %v2234 = vunpack.c.0.s8 %v2233
        %v2235 = vlaneseq
        %v2236 = vshrl.u32 %v2235, 7
        %v2237 = vsub.s32 %v2234, %v2236
        %v2238 = vrot.slane %v2224, %v2237
        %v2239 = vcombine.low %v2214, %v2222
        %v2240 = vcombine.high %v2214, %v2222
        %v2242 = vunpack.c.l.s4 1934713408
        %v2243 = vunpack.c.0.s8 %v2242
        %v2244 = vlaneseq
        %v2245 = vshrl.u32 %v2244, 7
        %v2246 = vsub.s32 %v2243, %v2245
        %v2247 = vrot.slane %v2239, %v2246
        %v2249 = vunpack.c.l.s4 1934713408
        %v2250 = vunpack.c.0.s8 %v2249
        %v2251 = vlaneseq
        %v2252 = vshrl.u32 %v2251, 7
        %v2253 = vsub.s32 %v2250, %v2252
        %v2254 = vrot.slane %v2240, %v2253
        %v2255 = vcombine.low %v2231, %v2247
        %v2256 = vcombine.high %v2231, %v2247
        %v2257 = vcombine.low %v2238, %v2254
        %v2258 = vcombine.high %v2238, %v2254
        %v2259 = vpack.c.bf16 %v2255, %v2255
        %v2260 = vpack.c.bf16 %v2256, %v2256
        %v2261 = vpack.c.bf16 %v2257, %v2257
        %v2262 = vpack.c.bf16 %v2258, %v2258
        %2264 = vrot.lane.b32.xlu0 %v2107, 120
        %v2265 = vpop.permute.xlu0 %2264
        %2267 = vrot.lane.b32.xlu0 %v2107, 112
        %v2268 = vpop.permute.xlu0 %2267
        %2270 = vrot.lane.b32.xlu0 %v2107, 104
        %v2271 = vpop.permute.xlu0 %2270
        %v2273 = vcombine.low %v2107, %v2268
        %v2274 = vcombine.high %v2107, %v2268
        %v2276 = vunpack.c.l.s4 1983009808
        %v2277 = vunpack.c.0.s8 %v2276
        %v2278 = vlaneseq
        %v2279 = vshrl.u32 %v2278, 7
        %v2280 = vsub.s32 %v2277, %v2279
        %v2281 = vrot.slane %v2273, %v2280
        %v2283 = vunpack.c.l.s4 1983009808
        %v2284 = vunpack.c.0.s8 %v2283
        %v2285 = vlaneseq
        %v2286 = vshrl.u32 %v2285, 7
        %v2287 = vsub.s32 %v2284, %v2286
        %v2288 = vrot.slane %v2274, %v2287
        %v2289 = vcombine.low %v2265, %v2271
        %v2290 = vcombine.high %v2265, %v2271
        %v2292 = vunpack.c.l.s4 1983009808
        %v2293 = vunpack.c.0.s8 %v2292
        %v2294 = vlaneseq
        %v2295 = vshrl.u32 %v2294, 7
        %v2296 = vsub.s32 %v2293, %v2295
        %v2297 = vrot.slane %v2289, %v2296
        %v2299 = vunpack.c.l.s4 1983009808
        %v2300 = vunpack.c.0.s8 %v2299
        %v2301 = vlaneseq
        %v2302 = vshrl.u32 %v2301, 7
        %v2303 = vsub.s32 %v2300, %v2302
        %v2304 = vrot.slane %v2290, %v2303
        %v2305 = vcombine.low %v2281, %v2297
        %v2306 = vcombine.high %v2281, %v2297
        %v2308 = vunpack.c.l.s4 1934713408
        %v2309 = vunpack.c.0.s8 %v2308
        %v2310 = vlaneseq
        %v2311 = vshrl.u32 %v2310, 7
        %v2312 = vsub.s32 %v2309, %v2311
        %v2313 = vrot.slane %v2305, %v2312
        %v2315 = vunpack.c.l.s4 1934713408
        %v2316 = vunpack.c.0.s8 %v2315
        %v2317 = vlaneseq
        %v2318 = vshrl.u32 %v2317, 7
        %v2319 = vsub.s32 %v2316, %v2318
        %v2320 = vrot.slane %v2306, %v2319
        %v2321 = vcombine.low %v2288, %v2304
        %v2322 = vcombine.high %v2288, %v2304
        %v2324 = vunpack.c.l.s4 1934713408
        %v2325 = vunpack.c.0.s8 %v2324
        %v2326 = vlaneseq
        %v2327 = vshrl.u32 %v2326, 7
        %v2328 = vsub.s32 %v2325, %v2327
        %v2329 = vrot.slane %v2321, %v2328
        %v2331 = vunpack.c.l.s4 1934713408
        %v2332 = vunpack.c.0.s8 %v2331
        %v2333 = vlaneseq
        %v2334 = vshrl.u32 %v2333, 7
        %v2335 = vsub.s32 %v2332, %v2334
        %v2336 = vrot.slane %v2322, %v2335
        %v2337 = vcombine.high %v2313, 0.0
        %v2338 = vcombine.high %v2320, 0.0
        %v2339 = vcombine.high %v2329, 0.0
        %v2340 = vcombine.high %v2336, 0.0
        %v2341 = vcombine.low %v2313, %v2320
        %v2343 = vunpack.c.l.s4 1983009808
        %v2344 = vunpack.c.0.s8 %v2343
        %v2345 = vlaneseq
        %v2346 = vshrl.u32 %v2345, 7
        %v2347 = vsub.s32 %v2344, %v2346
        %v2348 = vrot.slane %v2341, %v2347
        %v2349 = vcombine.low %v2337, %v2338
        %v2351 = vunpack.c.l.s4 1983009808
        %v2352 = vunpack.c.0.s8 %v2351
        %v2353 = vlaneseq
        %v2354 = vshrl.u32 %v2353, 7
        %v2355 = vsub.s32 %v2352, %v2354
        %v2356 = vrot.slane %v2349, %v2355
        %v2357 = vcombine.low %v2329, %v2336
        %v2359 = vunpack.c.l.s4 1983009808
        %v2360 = vunpack.c.0.s8 %v2359
        %v2361 = vlaneseq
        %v2362 = vshrl.u32 %v2361, 7
        %v2363 = vsub.s32 %v2360, %v2362
        %v2364 = vrot.slane %v2357, %v2363
        %v2365 = vcombine.low %v2339, %v2340
        %v2367 = vunpack.c.l.s4 1983009808
        %v2368 = vunpack.c.0.s8 %v2367
        %v2369 = vlaneseq
        %v2370 = vshrl.u32 %v2369, 7
        %v2371 = vsub.s32 %v2368, %v2370
        %v2372 = vrot.slane %v2365, %v2371
        %v2373 = vcombine.low %v2348, %v2356
        %v2374 = vcombine.high %v2348, %v2356
        %v2376 = vunpack.c.l.s4 1934713408
        %v2377 = vunpack.c.0.s8 %v2376
        %v2378 = vlaneseq
        %v2379 = vshrl.u32 %v2378, 7
        %v2380 = vsub.s32 %v2377, %v2379
        %v2381 = vrot.slane %v2373, %v2380
        %v2383 = vunpack.c.l.s4 1934713408
        %v2384 = vunpack.c.0.s8 %v2383
        %v2385 = vlaneseq
        %v2386 = vshrl.u32 %v2385, 7
        %v2387 = vsub.s32 %v2384, %v2386
        %v2388 = vrot.slane %v2374, %v2387
        %v2389 = vcombine.low %v2364, %v2372
        %v2390 = vcombine.high %v2364, %v2372
        %v2392 = vunpack.c.l.s4 1934713408
        %v2393 = vunpack.c.0.s8 %v2392
        %v2394 = vlaneseq
        %v2395 = vshrl.u32 %v2394, 7
        %v2396 = vsub.s32 %v2393, %v2395
        %v2397 = vrot.slane %v2389, %v2396
        %v2399 = vunpack.c.l.s4 1934713408
        %v2400 = vunpack.c.0.s8 %v2399
        %v2401 = vlaneseq
        %v2402 = vshrl.u32 %v2401, 7
        %v2403 = vsub.s32 %v2400, %v2402
        %v2404 = vrot.slane %v2390, %v2403
        %v2405 = vcombine.low %v2381, %v2397
        %v2406 = vcombine.high %v2381, %v2397
        %v2407 = vcombine.low %v2388, %v2404
        %v2408 = vcombine.high %v2388, %v2404
        %v2409 = vpack.c.bf16 %v2405, %v2405
        %v2410 = vpack.c.bf16 %v2406, %v2406
        %v2411 = vpack.c.bf16 %v2407, %v2407
        %v2412 = vpack.c.bf16 %v2408, %v2408
        %2413 = vrot.lane.b32.xlu0 %v2107, 96
        %v2414 = vpop.permute.xlu0 %2413
        %2415 = vrot.lane.b32.xlu0 %v2265, 96
        %v2416 = vpop.permute.xlu0 %2415
        %2417 = vrot.lane.b32.xlu0 %v2268, 96
        %v2418 = vpop.permute.xlu0 %2417
        %2419 = vrot.lane.b32.xlu0 %v2271, 96
        %v2420 = vpop.permute.xlu0 %2419
        %v2425 = vcombine.low %v2414, %v2418
        %v2426 = vcombine.high %v2414, %v2418
        %v2428 = vunpack.c.l.s4 1983009808
        %v2429 = vunpack.c.0.s8 %v2428
        %v2430 = vlaneseq
        %v2431 = vshrl.u32 %v2430, 7
        %v2432 = vsub.s32 %v2429, %v2431
        %v2433 = vrot.slane %v2425, %v2432
        %v2435 = vunpack.c.l.s4 1983009808
        %v2436 = vunpack.c.0.s8 %v2435
        %v2437 = vlaneseq
        %v2438 = vshrl.u32 %v2437, 7
        %v2439 = vsub.s32 %v2436, %v2438
        %v2440 = vrot.slane %v2426, %v2439
        %v2441 = vcombine.low %v2416, %v2420
        %v2442 = vcombine.high %v2416, %v2420
        %v2444 = vunpack.c.l.s4 1983009808
        %v2445 = vunpack.c.0.s8 %v2444
        %v2446 = vlaneseq
        %v2447 = vshrl.u32 %v2446, 7
        %v2448 = vsub.s32 %v2445, %v2447
        %v2449 = vrot.slane %v2441, %v2448
        %v2451 = vunpack.c.l.s4 1983009808
        %v2452 = vunpack.c.0.s8 %v2451
        %v2453 = vlaneseq
        %v2454 = vshrl.u32 %v2453, 7
        %v2455 = vsub.s32 %v2452, %v2454
        %v2456 = vrot.slane %v2442, %v2455
        %v2457 = vcombine.low %v2433, %v2449
        %v2458 = vcombine.high %v2433, %v2449
        %v2460 = vunpack.c.l.s4 1934713408
        %v2461 = vunpack.c.0.s8 %v2460
        %v2462 = vlaneseq
        %v2463 = vshrl.u32 %v2462, 7
        %v2464 = vsub.s32 %v2461, %v2463
        %v2465 = vrot.slane %v2457, %v2464
        %v2467 = vunpack.c.l.s4 1934713408
        %v2468 = vunpack.c.0.s8 %v2467
        %v2469 = vlaneseq
        %v2470 = vshrl.u32 %v2469, 7
        %v2471 = vsub.s32 %v2468, %v2470
        %v2472 = vrot.slane %v2458, %v2471
        %v2473 = vcombine.low %v2440, %v2456
        %v2474 = vcombine.high %v2440, %v2456
        %v2476 = vunpack.c.l.s4 1934713408
        %v2477 = vunpack.c.0.s8 %v2476
        %v2478 = vlaneseq
        %v2479 = vshrl.u32 %v2478, 7
        %v2480 = vsub.s32 %v2477, %v2479
        %v2481 = vrot.slane %v2473, %v2480
        %v2483 = vunpack.c.l.s4 1934713408
        %v2484 = vunpack.c.0.s8 %v2483
        %v2485 = vlaneseq
        %v2486 = vshrl.u32 %v2485, 7
        %v2487 = vsub.s32 %v2484, %v2486
        %v2488 = vrot.slane %v2474, %v2487
        %v2489 = vcombine.high %v2465, 0.0
        %v2490 = vcombine.high %v2472, 0.0
        %v2491 = vcombine.high %v2481, 0.0
        %v2492 = vcombine.high %v2488, 0.0
        %v2493 = vcombine.low %v2465, %v2472
        %v2495 = vunpack.c.l.s4 1983009808
        %v2496 = vunpack.c.0.s8 %v2495
        %v2497 = vlaneseq
        %v2498 = vshrl.u32 %v2497, 7
        %v2499 = vsub.s32 %v2496, %v2498
        %v2500 = vrot.slane %v2493, %v2499
        %v2501 = vcombine.low %v2489, %v2490
        %v2503 = vunpack.c.l.s4 1983009808
        %v2504 = vunpack.c.0.s8 %v2503
        %v2505 = vlaneseq
        %v2506 = vshrl.u32 %v2505, 7
        %v2507 = vsub.s32 %v2504, %v2506
        %v2508 = vrot.slane %v2501, %v2507
        %v2509 = vcombine.low %v2481, %v2488
        %v2511 = vunpack.c.l.s4 1983009808
        %v2512 = vunpack.c.0.s8 %v2511
        %v2513 = vlaneseq
        %v2514 = vshrl.u32 %v2513, 7
        %v2515 = vsub.s32 %v2512, %v2514
        %v2516 = vrot.slane %v2509, %v2515
        %v2517 = vcombine.low %v2491, %v2492
        %v2519 = vunpack.c.l.s4 1983009808
        %v2520 = vunpack.c.0.s8 %v2519
        %v2521 = vlaneseq
        %v2522 = vshrl.u32 %v2521, 7
        %v2523 = vsub.s32 %v2520, %v2522
        %v2524 = vrot.slane %v2517, %v2523
        %v2525 = vcombine.low %v2500, %v2508
        %v2526 = vcombine.high %v2500, %v2508
        %v2528 = vunpack.c.l.s4 1934713408
        %v2529 = vunpack.c.0.s8 %v2528
        %v2530 = vlaneseq
        %v2531 = vshrl.u32 %v2530, 7
        %v2532 = vsub.s32 %v2529, %v2531
        %v2533 = vrot.slane %v2525, %v2532
        %v2535 = vunpack.c.l.s4 1934713408
        %v2536 = vunpack.c.0.s8 %v2535
        %v2537 = vlaneseq
        %v2538 = vshrl.u32 %v2537, 7
        %v2539 = vsub.s32 %v2536, %v2538
        %v2540 = vrot.slane %v2526, %v2539
        %v2541 = vcombine.low %v2516, %v2524
        %v2542 = vcombine.high %v2516, %v2524
        %v2544 = vunpack.c.l.s4 1934713408
        %v2545 = vunpack.c.0.s8 %v2544
        %v2546 = vlaneseq
        %v2547 = vshrl.u32 %v2546, 7
        %v2548 = vsub.s32 %v2545, %v2547
        %v2549 = vrot.slane %v2541, %v2548
        %v2551 = vunpack.c.l.s4 1934713408
        %v2552 = vunpack.c.0.s8 %v2551
        %v2553 = vlaneseq
        %v2554 = vshrl.u32 %v2553, 7
        %v2555 = vsub.s32 %v2552, %v2554
        %v2556 = vrot.slane %v2542, %v2555
        %v2557 = vcombine.low %v2533, %v2549
        %v2558 = vcombine.high %v2533, %v2549
        %v2559 = vcombine.low %v2540, %v2556
        %v2560 = vcombine.high %v2540, %v2556
        %v2561 = vpack.c.bf16 %v2557, %v2557
        %v2562 = vpack.c.bf16 %v2558, %v2558
        %v2563 = vpack.c.bf16 %v2559, %v2559
        %v2564 = vpack.c.bf16 %v2560, %v2560
        %v2565 = vld [vmem:[#allocation8] sm:$0xff]
        %v2567 = vsel %vm1324, %v2259, 0
        %v2570 = vsel %vm1324, %v2409, 0
        %2572 = vmatprep.subr.bf16.mxu0 0
        %2573 = vmatpush1.bf16.xpose.msra.mxu0 0
        %2574 = vmatprep.subr.bf16.mxu0 0
        %2575 = vmatpush1.bf16.xpose.msra.mxu0 0
        %2576 = vmatprep.subr.bf16.mxu0 0
        %2577 = vmatpush1.bf16.xpose.msra.mxu0 0
        %2578 = vmatprep.subr.bf16.mxu0 0
        %2579 = vmatpush1.bf16.xpose.msra.mxu0 0
        %2580 = vmatprep.subr.bf16.mxu0 0
        %2581 = vmatpush1.bf16.xpose.msra.mxu0 0
        %2582 = vmatprep.subr.bf16.mxu0 0
        %2583 = vmatpush1.bf16.xpose.msra.mxu0 0
        %2584 = vmatprep.subr.bf16.mxu0 0
        %2585 = vmatpush1.bf16.xpose.msra.mxu0 0
        %2586 = vmatprep.subr.bf16.mxu0 0
        %2587 = vmatpush1.bf16.xpose.msra.mxu0 %v2570
        %2588 = vmatprep.subr.bf16.mxu0 0
        %2589 = vmatpush2.bf16.xpose.msra.mxu0 0
        %2590 = vmatprep.subr.bf16.mxu0 0
        %2591 = vmatpush2.bf16.xpose.msra.mxu0 0
        %2592 = vmatprep.subr.bf16.mxu0 0
        %2593 = vmatpush2.bf16.xpose.msra.mxu0 0
        %2594 = vmatprep.subr.bf16.mxu0 0
        %2595 = vmatpush2.bf16.xpose.msra.mxu0 0
        %2596 = vmatprep.subr.bf16.mxu0 0
        %2597 = vmatpush2.bf16.xpose.msra.mxu0 0
        %2598 = vmatprep.subr.bf16.mxu0 0
        %2599 = vmatpush2.bf16.xpose.msra.mxu0 0
        %2600 = vmatprep.subr.bf16.mxu0 0
        %2601 = vmatpush2.bf16.xpose.msra.mxu0 0
        %2602 = vmatprep.subr.bf16.mxu0 0
        %2603 = vmatpush2.bf16.xpose.msra.mxu0 0
        %2604 = vmatprep.mubr.bf16.mxu0 0
        %2605 = vmatmul.mubr.bf16.gmra.mxu0 %v2567
        %v2606 = vpop.f32.mrf.mxu0
        %v2607 = vadd.f32 %v2565, %v2606
        %v2608 = vpop.f32.mrf.mxu0
        %v2609 = vpop.f32.mrf.mxu0
        %v2610 = vpop.f32.mrf.mxu0
        %2611 = vdwg.mxu0
        %v2613 = vsel %vm1324, %v2260, 0
        %v2616 = vsel %vm1324, %v2410, 0
        %2618 = vmatprep.subr.bf16.mxu0 0
        %2619 = vmatpush1.bf16.xpose.msra.mxu0 0
        %2620 = vmatprep.subr.bf16.mxu0 0
        %2621 = vmatpush1.bf16.xpose.msra.mxu0 0
        %2622 = vmatprep.subr.bf16.mxu0 0
        %2623 = vmatpush1.bf16.xpose.msra.mxu0 0
        %2624 = vmatprep.subr.bf16.mxu0 0
        %2625 = vmatpush1.bf16.xpose.msra.mxu0 0
        %2626 = vmatprep.subr.bf16.mxu0 0
        %2627 = vmatpush1.bf16.xpose.msra.mxu0 0
        %2628 = vmatprep.subr.bf16.mxu0 0
        %2629 = vmatpush1.bf16.xpose.msra.mxu0 0
        %2630 = vmatprep.subr.bf16.mxu0 0
        %2631 = vmatpush1.bf16.xpose.msra.mxu0 0
        %2632 = vmatprep.subr.bf16.mxu0 0
        %2633 = vmatpush1.bf16.xpose.msra.mxu0 %v2616
        %2634 = vmatprep.subr.bf16.mxu0 0
        %2635 = vmatpush2.bf16.xpose.msra.mxu0 0
        %2636 = vmatprep.subr.bf16.mxu0 0
        %2637 = vmatpush2.bf16.xpose.msra.mxu0 0
        %2638 = vmatprep.subr.bf16.mxu0 0
        %2639 = vmatpush2.bf16.xpose.msra.mxu0 0
        %2640 = vmatprep.subr.bf16.mxu0 0
        %2641 = vmatpush2.bf16.xpose.msra.mxu0 0
        %2642 = vmatprep.subr.bf16.mxu0 0
        %2643 = vmatpush2.bf16.xpose.msra.mxu0 0
        %2644 = vmatprep.subr.bf16.mxu0 0
        %2645 = vmatpush2.bf16.xpose.msra.mxu0 0
        %2646 = vmatprep.subr.bf16.mxu0 0
        %2647 = vmatpush2.bf16.xpose.msra.mxu0 0
        %2648 = vmatprep.subr.bf16.mxu0 0
        %2649 = vmatpush2.bf16.xpose.msra.mxu0 0
        %2650 = vmatprep.mubr.bf16.mxu0 0
        %2651 = vmatmul.mubr.bf16.gmra.mxu0 %v2613
        %v2652 = vpop.f32.mrf.mxu0
        %v2653 = vadd.f32 %v2565, %v2652
        %v2654 = vpop.f32.mrf.mxu0
        %v2655 = vpop.f32.mrf.mxu0
        %v2656 = vpop.f32.mrf.mxu0
        %2657 = vdwg.mxu0
        %v2659 = vsel %vm1324, %v2261, 0
        %v2662 = vsel %vm1324, %v2411, 0
        %2664 = vmatprep.subr.bf16.mxu0 0
        %2665 = vmatpush1.bf16.xpose.msra.mxu0 0
        %2666 = vmatprep.subr.bf16.mxu0 0
        %2667 = vmatpush1.bf16.xpose.msra.mxu0 0
        %2668 = vmatprep.subr.bf16.mxu0 0
        %2669 = vmatpush1.bf16.xpose.msra.mxu0 0
        %2670 = vmatprep.subr.bf16.mxu0 0
        %2671 = vmatpush1.bf16.xpose.msra.mxu0 0
        %2672 = vmatprep.subr.bf16.mxu0 0
        %2673 = vmatpush1.bf16.xpose.msra.mxu0 0
        %2674 = vmatprep.subr.bf16.mxu0 0
        %2675 = vmatpush1.bf16.xpose.msra.mxu0 0
        %2676 = vmatprep.subr.bf16.mxu0 0
        %2677 = vmatpush1.bf16.xpose.msra.mxu0 0
        %2678 = vmatprep.subr.bf16.mxu0 0
        %2679 = vmatpush1.bf16.xpose.msra.mxu0 %v2662
        %2680 = vmatprep.subr.bf16.mxu0 0
        %2681 = vmatpush2.bf16.xpose.msra.mxu0 0
        %2682 = vmatprep.subr.bf16.mxu0 0
        %2683 = vmatpush2.bf16.xpose.msra.mxu0 0
        %2684 = vmatprep.subr.bf16.mxu0 0
        %2685 = vmatpush2.bf16.xpose.msra.mxu0 0
        %2686 = vmatprep.subr.bf16.mxu0 0
        %2687 = vmatpush2.bf16.xpose.msra.mxu0 0
        %2688 = vmatprep.subr.bf16.mxu0 0
        %2689 = vmatpush2.bf16.xpose.msra.mxu0 0
        %2690 = vmatprep.subr.bf16.mxu0 0
        %2691 = vmatpush2.bf16.xpose.msra.mxu0 0
        %2692 = vmatprep.subr.bf16.mxu0 0
        %2693 = vmatpush2.bf16.xpose.msra.mxu0 0
        %2694 = vmatprep.subr.bf16.mxu0 0
        %2695 = vmatpush2.bf16.xpose.msra.mxu0 0
        %2696 = vmatprep.mubr.bf16.mxu0 0
        %2697 = vmatmul.mubr.bf16.gmra.mxu0 %v2659
        %v2698 = vpop.f32.mrf.mxu0
        %v2699 = vadd.f32 %v2565, %v2698
        %v2700 = vpop.f32.mrf.mxu0
        %v2701 = vpop.f32.mrf.mxu0
        %v2702 = vpop.f32.mrf.mxu0
        %2703 = vdwg.mxu0
        %v2705 = vsel %vm1324, %v2262, 0
        %v2708 = vsel %vm1324, %v2412, 0
        %2710 = vmatprep.subr.bf16.mxu0 0
        %2711 = vmatpush1.bf16.xpose.msra.mxu0 0
        %2712 = vmatprep.subr.bf16.mxu0 0
        %2713 = vmatpush1.bf16.xpose.msra.mxu0 0
        %2714 = vmatprep.subr.bf16.mxu0 0
        %2715 = vmatpush1.bf16.xpose.msra.mxu0 0
        %2716 = vmatprep.subr.bf16.mxu0 0
        %2717 = vmatpush1.bf16.xpose.msra.mxu0 0
        %2718 = vmatprep.subr.bf16.mxu0 0
        %2719 = vmatpush1.bf16.xpose.msra.mxu0 0
        %2720 = vmatprep.subr.bf16.mxu0 0
        %2721 = vmatpush1.bf16.xpose.msra.mxu0 0
        %2722 = vmatprep.subr.bf16.mxu0 0
        %2723 = vmatpush1.bf16.xpose.msra.mxu0 0
        %2724 = vmatprep.subr.bf16.mxu0 0
        %2725 = vmatpush1.bf16.xpose.msra.mxu0 %v2708
        %2726 = vmatprep.subr.bf16.mxu0 0
        %2727 = vmatpush2.bf16.xpose.msra.mxu0 0
        %2728 = vmatprep.subr.bf16.mxu0 0
        %2729 = vmatpush2.bf16.xpose.msra.mxu0 0
        %2730 = vmatprep.subr.bf16.mxu0 0
        %2731 = vmatpush2.bf16.xpose.msra.mxu0 0
        %2732 = vmatprep.subr.bf16.mxu0 0
        %2733 = vmatpush2.bf16.xpose.msra.mxu0 0
        %2734 = vmatprep.subr.bf16.mxu0 0
        %2735 = vmatpush2.bf16.xpose.msra.mxu0 0
        %2736 = vmatprep.subr.bf16.mxu0 0
        %2737 = vmatpush2.bf16.xpose.msra.mxu0 0
        %2738 = vmatprep.subr.bf16.mxu0 0
        %2739 = vmatpush2.bf16.xpose.msra.mxu0 0
        %2740 = vmatprep.subr.bf16.mxu0 0
        %2741 = vmatpush2.bf16.xpose.msra.mxu0 0
        %2742 = vmatprep.mubr.bf16.mxu0 0
        %2743 = vmatmul.mubr.bf16.gmra.mxu0 %v2705
        %v2744 = vpop.f32.mrf.mxu0
        %v2745 = vadd.f32 %v2565, %v2744
        %v2746 = vpop.f32.mrf.mxu0
        %v2747 = vpop.f32.mrf.mxu0
        %v2748 = vpop.f32.mrf.mxu0
        %2749 = vdwg.mxu0
        %v2750 = vsel %vm1324, %v2607, -inf
        %2751 = vmax.xlane.f32.xlu0 %v2750
        %v2752 = vpop.xlane.xlu0 %2751
        %v2753 = vsel %vm1324, %v2653, -inf
        %2754 = vmax.xlane.f32.xlu0 %v2753
        %v2755 = vpop.xlane.xlu0 %2754
        %v2756 = vsel %vm1324, %v2699, -inf
        %2757 = vmax.xlane.f32.xlu0 %v2756
        %v2758 = vpop.xlane.xlu0 %2757
        %v2759 = vsel %vm1324, %v2745, -inf
        %2760 = vmax.xlane.f32.xlu0 %v2759
        %v2761 = vpop.xlane.xlu0 %2760
        %v2762 = vsub.f32 %v2607, %v2752
        %v2763 = vsub.f32 %v2653, %v2755
        %v2764 = vsub.f32 %v2699, %v2758
        %v2765 = vsub.f32 %v2745, %v2761
        %v2766 = vmul.f32 %v2762, 1.442695
        %v2767 = vpow.pop %v2766
        %v2768 = vmul.f32 %v2763, 1.442695
        %v2769 = vpow.pop %v2768
        %v2770 = vmul.f32 %v2764, 1.442695
        %v2771 = vpow.pop %v2770
        %v2772 = vmul.f32 %v2765, 1.442695
        %v2773 = vpow.pop %v2772
        %v2774 = vsel %vm1324, %v2767, 0.0
        %2775 = vadd.xlane.f32.xlu0 %v2774
        %v2776 = vpop.xlane.xlu0 %2775
        %v2777 = vsel %vm1324, %v2769, 0.0
        %2778 = vadd.xlane.f32.xlu0 %v2777
        %v2779 = vpop.xlane.xlu0 %2778
        %v2780 = vsel %vm1324, %v2771, 0.0
        %2781 = vadd.xlane.f32.xlu0 %v2780
        %v2782 = vpop.xlane.xlu0 %2781
        %v2783 = vsel %vm1324, %v2773, 0.0
        %2784 = vadd.xlane.f32.xlu0 %v2783
        %v2785 = vpop.xlane.xlu0 %2784
        %v2786 = vrcp.pop %v2776
        %v2787 = vrcp.pop %v2779
        %v2788 = vrcp.pop %v2782
        %v2789 = vrcp.pop %v2785
        %v2790 = vmul.f32 %v2767, %v2786
        %v2791 = vmul.f32 %v2769, %v2787
        %v2792 = vmul.f32 %v2771, %v2788
        %v2793 = vmul.f32 %v2773, %v2789
        %v2794 = vpack.c.bf16 %v2790, %v2790
        %v2795 = vpack.c.bf16 %v2791, %v2791
        %v2796 = vpack.c.bf16 %v2792, %v2792
        %v2797 = vpack.c.bf16 %v2793, %v2793
        %2798 = vst.msk [vmem:[%s788] sm:$0xf] %vm1557, %v2794
        %2799 = vst.msk [vmem:[%s788 + $0x4] sm:$0xf] %vm1557, %v2795
        %2800 = vst.msk [vmem:[%s788 + $0x8] sm:$0xf] %vm1557, %v2796
        %2801 = vst.msk [vmem:[%s788 + $0xc] sm:$0xf] %vm1557, %v2797
        %v2803 = vsel %vm1324, %v2794, 0
        %v2806 = vsel %vm1565, %v2561, 0
        %2808 = vmatprep.subr.bf16.mxu0 0
        %2809 = vmatpush1.bf16.msra.mxu0 0
        %2810 = vmatprep.subr.bf16.mxu0 0
        %2811 = vmatpush1.bf16.msra.mxu0 0
        %2812 = vmatprep.subr.bf16.mxu0 0
        %2813 = vmatpush1.bf16.msra.mxu0 0
        %2814 = vmatprep.subr.bf16.mxu0 0
        %2815 = vmatpush1.bf16.msra.mxu0 0
        %2816 = vmatprep.subr.bf16.mxu0 0
        %2817 = vmatpush1.bf16.msra.mxu0 0
        %2818 = vmatprep.subr.bf16.mxu0 0
        %2819 = vmatpush1.bf16.msra.mxu0 0
        %2820 = vmatprep.subr.bf16.mxu0 0
        %2821 = vmatpush1.bf16.msra.mxu0 0
        %2822 = vmatprep.subr.bf16.mxu0 0
        %2823 = vmatpush1.bf16.msra.mxu0 %v2806
        %2824 = vmatprep.subr.bf16.mxu0 0
        %2825 = vmatpush2.bf16.msra.mxu0 0
        %2826 = vmatprep.subr.bf16.mxu0 0
        %2827 = vmatpush2.bf16.msra.mxu0 0
        %2828 = vmatprep.subr.bf16.mxu0 0
        %2829 = vmatpush2.bf16.msra.mxu0 0
        %2830 = vmatprep.subr.bf16.mxu0 0
        %2831 = vmatpush2.bf16.msra.mxu0 0
        %2832 = vmatprep.subr.bf16.mxu0 0
        %2833 = vmatpush2.bf16.msra.mxu0 0
        %2834 = vmatprep.subr.bf16.mxu0 0
        %2835 = vmatpush2.bf16.msra.mxu0 0
        %2836 = vmatprep.subr.bf16.mxu0 0
        %2837 = vmatpush2.bf16.msra.mxu0 0
        %2838 = vmatprep.subr.bf16.mxu0 0
        %2839 = vmatpush2.bf16.msra.mxu0 0
        %2840 = vmatprep.mubr.bf16.mxu0 0
        %2841 = vmatmul.mubr.bf16.gmra.mxu0 %v2803
        %v2842 = vpop.f32.mrf.mxu0
        %v2843 = vadd.f32 0.0, %v2842
        %v2844 = vpop.f32.mrf.mxu0
        %v2845 = vpop.f32.mrf.mxu0
        %v2846 = vpop.f32.mrf.mxu0
        %2847 = vdwg.mxu0
        %v2849 = vsel %vm1324, %v2795, 0
        %v2852 = vsel %vm1565, %v2562, 0
        %2854 = vmatprep.subr.bf16.mxu0 0
        %2855 = vmatpush1.bf16.msra.mxu0 0
        %2856 = vmatprep.subr.bf16.mxu0 0
        %2857 = vmatpush1.bf16.msra.mxu0 0
        %2858 = vmatprep.subr.bf16.mxu0 0
        %2859 = vmatpush1.bf16.msra.mxu0 0
        %2860 = vmatprep.subr.bf16.mxu0 0
        %2861 = vmatpush1.bf16.msra.mxu0 0
        %2862 = vmatprep.subr.bf16.mxu0 0
        %2863 = vmatpush1.bf16.msra.mxu0 0
        %2864 = vmatprep.subr.bf16.mxu0 0
        %2865 = vmatpush1.bf16.msra.mxu0 0
        %2866 = vmatprep.subr.bf16.mxu0 0
        %2867 = vmatpush1.bf16.msra.mxu0 0
        %2868 = vmatprep.subr.bf16.mxu0 0
        %2869 = vmatpush1.bf16.msra.mxu0 %v2852
        %2870 = vmatprep.subr.bf16.mxu0 0
        %2871 = vmatpush2.bf16.msra.mxu0 0
        %2872 = vmatprep.subr.bf16.mxu0 0
        %2873 = vmatpush2.bf16.msra.mxu0 0
        %2874 = vmatprep.subr.bf16.mxu0 0
        %2875 = vmatpush2.bf16.msra.mxu0 0
        %2876 = vmatprep.subr.bf16.mxu0 0
        %2877 = vmatpush2.bf16.msra.mxu0 0
        %2878 = vmatprep.subr.bf16.mxu0 0
        %2879 = vmatpush2.bf16.msra.mxu0 0
        %2880 = vmatprep.subr.bf16.mxu0 0
        %2881 = vmatpush2.bf16.msra.mxu0 0
        %2882 = vmatprep.subr.bf16.mxu0 0
        %2883 = vmatpush2.bf16.msra.mxu0 0
        %2884 = vmatprep.subr.bf16.mxu0 0
        %2885 = vmatpush2.bf16.msra.mxu0 0
        %2886 = vmatprep.mubr.bf16.mxu0 0
        %2887 = vmatmul.mubr.bf16.gmra.mxu0 %v2849
        %v2888 = vpop.f32.mrf.mxu0
        %v2889 = vadd.f32 0.0, %v2888
        %v2890 = vpop.f32.mrf.mxu0
        %v2891 = vpop.f32.mrf.mxu0
        %v2892 = vpop.f32.mrf.mxu0
        %2893 = vdwg.mxu0
        %v2895 = vsel %vm1324, %v2796, 0
        %v2898 = vsel %vm1565, %v2563, 0
        %2900 = vmatprep.subr.bf16.mxu0 0
        %2901 = vmatpush1.bf16.msra.mxu0 0
        %2902 = vmatprep.subr.bf16.mxu0 0
        %2903 = vmatpush1.bf16.msra.mxu0 0
        %2904 = vmatprep.subr.bf16.mxu0 0
        %2905 = vmatpush1.bf16.msra.mxu0 0
        %2906 = vmatprep.subr.bf16.mxu0 0
        %2907 = vmatpush1.bf16.msra.mxu0 0
        %2908 = vmatprep.subr.bf16.mxu0 0
        %2909 = vmatpush1.bf16.msra.mxu0 0
        %2910 = vmatprep.subr.bf16.mxu0 0
        %2911 = vmatpush1.bf16.msra.mxu0 0
        %2912 = vmatprep.subr.bf16.mxu0 0
        %2913 = vmatpush1.bf16.msra.mxu0 0
        %2914 = vmatprep.subr.bf16.mxu0 0
        %2915 = vmatpush1.bf16.msra.mxu0 %v2898
        %2916 = vmatprep.subr.bf16.mxu0 0
        %2917 = vmatpush2.bf16.msra.mxu0 0
        %2918 = vmatprep.subr.bf16.mxu0 0
        %2919 = vmatpush2.bf16.msra.mxu0 0
        %2920 = vmatprep.subr.bf16.mxu0 0
        %2921 = vmatpush2.bf16.msra.mxu0 0
        %2922 = vmatprep.subr.bf16.mxu0 0
        %2923 = vmatpush2.bf16.msra.mxu0 0
        %2924 = vmatprep.subr.bf16.mxu0 0
        %2925 = vmatpush2.bf16.msra.mxu0 0
        %2926 = vmatprep.subr.bf16.mxu0 0
        %2927 = vmatpush2.bf16.msra.mxu0 0
        %2928 = vmatprep.subr.bf16.mxu0 0
        %2929 = vmatpush2.bf16.msra.mxu0 0
        %2930 = vmatprep.subr.bf16.mxu0 0
        %2931 = vmatpush2.bf16.msra.mxu0 0
        %2932 = vmatprep.mubr.bf16.mxu0 0
        %2933 = vmatmul.mubr.bf16.gmra.mxu0 %v2895
        %v2934 = vpop.f32.mrf.mxu0
        %v2935 = vadd.f32 0.0, %v2934
        %v2936 = vpop.f32.mrf.mxu0
        %v2937 = vpop.f32.mrf.mxu0
        %v2938 = vpop.f32.mrf.mxu0
        %2939 = vdwg.mxu0
        %v2941 = vsel %vm1324, %v2797, 0
        %v2944 = vsel %vm1565, %v2564, 0
        %2946 = vmatprep.subr.bf16.mxu0 0
        %2947 = vmatpush1.bf16.msra.mxu0 0
        %2948 = vmatprep.subr.bf16.mxu0 0
        %2949 = vmatpush1.bf16.msra.mxu0 0
        %2950 = vmatprep.subr.bf16.mxu0 0
        %2951 = vmatpush1.bf16.msra.mxu0 0
        %2952 = vmatprep.subr.bf16.mxu0 0
        %2953 = vmatpush1.bf16.msra.mxu0 0
        %2954 = vmatprep.subr.bf16.mxu0 0
        %2955 = vmatpush1.bf16.msra.mxu0 0
        %2956 = vmatprep.subr.bf16.mxu0 0
        %2957 = vmatpush1.bf16.msra.mxu0 0
        %2958 = vmatprep.subr.bf16.mxu0 0
        %2959 = vmatpush1.bf16.msra.mxu0 0
        %2960 = vmatprep.subr.bf16.mxu0 0
        %2961 = vmatpush1.bf16.msra.mxu0 %v2944
        %2962 = vmatprep.subr.bf16.mxu0 0
        %2963 = vmatpush2.bf16.msra.mxu0 0
        %2964 = vmatprep.subr.bf16.mxu0 0
        %2965 = vmatpush2.bf16.msra.mxu0 0
        %2966 = vmatprep.subr.bf16.mxu0 0
        %2967 = vmatpush2.bf16.msra.mxu0 0
        %2968 = vmatprep.subr.bf16.mxu0 0
        %2969 = vmatpush2.bf16.msra.mxu0 0
        %2970 = vmatprep.subr.bf16.mxu0 0
        %2971 = vmatpush2.bf16.msra.mxu0 0
        %2972 = vmatprep.subr.bf16.mxu0 0
        %2973 = vmatpush2.bf16.msra.mxu0 0
        %2974 = vmatprep.subr.bf16.mxu0 0
        %2975 = vmatpush2.bf16.msra.mxu0 0
        %2976 = vmatprep.subr.bf16.mxu0 0
        %2977 = vmatpush2.bf16.msra.mxu0 0
        %2978 = vmatprep.mubr.bf16.mxu0 0
        %2979 = vmatmul.mubr.bf16.gmra.mxu0 %v2941
        %v2980 = vpop.f32.mrf.mxu0
        %v2981 = vadd.f32 0.0, %v2980
        %v2982 = vpop.f32.mrf.mxu0
        %v2983 = vpop.f32.mrf.mxu0
        %v2984 = vpop.f32.mrf.mxu0
        %2985 = vdwg.mxu0
        %v2986 = vcombine.low %v2843, %v2935
        %v2987 = vcombine.high %v2843, %v2935
        %v2989 = vunpack.c.l.s4 1983009808
        %v2990 = vunpack.c.0.s8 %v2989
        %v2991 = vlaneseq
        %v2992 = vshrl.u32 %v2991, 7
        %v2993 = vsub.s32 %v2990, %v2992
        %v2994 = vrot.slane %v2986, %v2993
        %v2996 = vunpack.c.l.s4 1983009808
        %v2997 = vunpack.c.0.s8 %v2996
        %v2998 = vlaneseq
        %v2999 = vshrl.u32 %v2998, 7
        %v3000 = vsub.s32 %v2997, %v2999
        %v3001 = vrot.slane %v2987, %v3000
        %v3002 = vcombine.low %v2889, %v2981
        %v3003 = vcombine.high %v2889, %v2981
        %v3005 = vunpack.c.l.s4 1983009808
        %v3006 = vunpack.c.0.s8 %v3005
        %v3007 = vlaneseq
        %v3008 = vshrl.u32 %v3007, 7
        %v3009 = vsub.s32 %v3006, %v3008
        %v3010 = vrot.slane %v3002, %v3009
        %v3012 = vunpack.c.l.s4 1983009808
        %v3013 = vunpack.c.0.s8 %v3012
        %v3014 = vlaneseq
        %v3015 = vshrl.u32 %v3014, 7
        %v3016 = vsub.s32 %v3013, %v3015
        %v3017 = vrot.slane %v3003, %v3016
        %v3018 = vcombine.low %v2994, %v3010
        %v3019 = vcombine.high %v2994, %v3010
        %v3021 = vunpack.c.l.s4 1934713408
        %v3022 = vunpack.c.0.s8 %v3021
        %v3023 = vlaneseq
        %v3024 = vshrl.u32 %v3023, 7
        %v3025 = vsub.s32 %v3022, %v3024
        %v3026 = vrot.slane %v3018, %v3025
        %v3028 = vunpack.c.l.s4 1934713408
        %v3029 = vunpack.c.0.s8 %v3028
        %v3030 = vlaneseq
        %v3031 = vshrl.u32 %v3030, 7
        %v3032 = vsub.s32 %v3029, %v3031
        %v3033 = vrot.slane %v3019, %v3032
        %v3034 = vcombine.low %v3001, %v3017
        %v3035 = vcombine.high %v3001, %v3017
        %v3037 = vunpack.c.l.s4 1934713408
        %v3038 = vunpack.c.0.s8 %v3037
        %v3039 = vlaneseq
        %v3040 = vshrl.u32 %v3039, 7
        %v3041 = vsub.s32 %v3038, %v3040
        %v3042 = vrot.slane %v3034, %v3041
        %v3044 = vunpack.c.l.s4 1934713408
        %v3045 = vunpack.c.0.s8 %v3044
        %v3046 = vlaneseq
        %v3047 = vshrl.u32 %v3046, 7
        %v3048 = vsub.s32 %v3045, %v3047
        %v3049 = vrot.slane %v3035, %v3048
        %v3050 = vcombine.high %v3026, 0.0
        %v3051 = vcombine.high %v3033, 0.0
        %v3052 = vcombine.high %v3042, 0.0
        %v3053 = vcombine.high %v3049, 0.0
        %v3054 = vcombine.low %v3026, %v3033
        %v3056 = vunpack.c.l.s4 1983009808
        %v3057 = vunpack.c.0.s8 %v3056
        %v3058 = vlaneseq
        %v3059 = vshrl.u32 %v3058, 7
        %v3060 = vsub.s32 %v3057, %v3059
        %v3061 = vrot.slane %v3054, %v3060
        %v3062 = vcombine.low %v3050, %v3051
        %v3064 = vunpack.c.l.s4 1983009808
        %v3065 = vunpack.c.0.s8 %v3064
        %v3066 = vlaneseq
        %v3067 = vshrl.u32 %v3066, 7
        %v3068 = vsub.s32 %v3065, %v3067
        %v3069 = vrot.slane %v3062, %v3068
        %v3070 = vcombine.low %v3042, %v3049
        %v3072 = vunpack.c.l.s4 1983009808
        %v3073 = vunpack.c.0.s8 %v3072
        %v3074 = vlaneseq
        %v3075 = vshrl.u32 %v3074, 7
        %v3076 = vsub.s32 %v3073, %v3075
        %v3077 = vrot.slane %v3070, %v3076
        %v3078 = vcombine.low %v3052, %v3053
        %v3080 = vunpack.c.l.s4 1983009808
        %v3081 = vunpack.c.0.s8 %v3080
        %v3082 = vlaneseq
        %v3083 = vshrl.u32 %v3082, 7
        %v3084 = vsub.s32 %v3081, %v3083
        %v3085 = vrot.slane %v3078, %v3084
        %v3086 = vcombine.low %v3061, %v3069
        %v3087 = vcombine.high %v3061, %v3069
        %v3089 = vunpack.c.l.s4 1934713408
        %v3090 = vunpack.c.0.s8 %v3089
        %v3091 = vlaneseq
        %v3092 = vshrl.u32 %v3091, 7
        %v3093 = vsub.s32 %v3090, %v3092
        %v3094 = vrot.slane %v3086, %v3093
        %v3096 = vunpack.c.l.s4 1934713408
        %v3097 = vunpack.c.0.s8 %v3096
        %v3098 = vlaneseq
        %v3099 = vshrl.u32 %v3098, 7
        %v3100 = vsub.s32 %v3097, %v3099
        %v3101 = vrot.slane %v3087, %v3100
        %v3102 = vcombine.low %v3077, %v3085
        %v3103 = vcombine.high %v3077, %v3085
        %v3105 = vunpack.c.l.s4 1934713408
        %v3106 = vunpack.c.0.s8 %v3105
        %v3107 = vlaneseq
        %v3108 = vshrl.u32 %v3107, 7
        %v3109 = vsub.s32 %v3106, %v3108
        %v3110 = vrot.slane %v3102, %v3109
        %v3112 = vunpack.c.l.s4 1934713408
        %v3113 = vunpack.c.0.s8 %v3112
        %v3114 = vlaneseq
        %v3115 = vshrl.u32 %v3114, 7
        %v3116 = vsub.s32 %v3113, %v3115
        %v3117 = vrot.slane %v3103, %v3116
        %v3118 = vcombine.low %v3094, %v3110
        %v3119 = vcombine.high %v3094, %v3110
        %v3120 = vcombine.low %v3101, %v3117
        %v3121 = vcombine.high %v3101, %v3117
        %3123 = vrot.lane.b32.xlu0 %v3119, 8
        %v3124 = vpop.permute.xlu0 %3123
        %3127 = vrot.lane.b32.xlu0 %v3120, 16
        %v3128 = vpop.permute.xlu0 %3127
        %3131 = vrot.lane.b32.xlu0 %v3121, 24
        %v3132 = vpop.permute.xlu0 %3131
        %v3134 = vsel %vm1324, %v3118, %v3124
        %v3135 = vsel %vm1896, %v3134, %v3128
        %v3136 = vsel %vm1898, %v3135, %v3132
        %v3137 = vpack.c.bf16 %v3136, %v3136
        %v3138 = vld [vmem:[%s10] sm:$0xf]
        %v3139 = vld [vmem:[%s10 + $0x4] sm:$0xf]
        %v3140 = vld [vmem:[%s10 + $0x8] sm:$0xf]
        %v3141 = vld [vmem:[%s10 + $0xc] sm:$0xf]
        %v3142 = vld [vmem:[#allocation14] sm:$0x1]
        %v3144 = vlaneseq
        %v3145 = vshrl.u32 %v3144, 7
        %v3146 = vsub.s32 0, %v3145
        %v3147 = vrot.slane %v3142, %v3146
        %v3153 = vunpack.c.l.b16 %v3138
        %v3154 = vunpack.c.l.b16 %v3139
        %v3155 = vunpack.c.l.b16 %v3140
        %v3156 = vunpack.c.l.b16 %v3141
        %v3157 = vpack.c.b16 %v3154, %v3153
        %v3158 = vpack.c.b16 %v3156, %v3155
        %v3162 = vsel %vm817, %v3137, 0
        %3164 = vmatprep.subr.bf16.mxu0 0
        %3165 = vmatpush1.bf16.msra.mxu0 0
        %3166 = vmatprep.subr.bf16.mxu0 0
        %3167 = vmatpush1.bf16.msra.mxu0 0
        %3168 = vmatprep.subr.bf16.mxu0 0
        %3169 = vmatpush1.bf16.msra.mxu0 0
        %3170 = vmatprep.subr.bf16.mxu0 0
        %3171 = vmatpush1.bf16.msra.mxu0 0
        %3172 = vmatprep.subr.bf16.mxu0 0
        %3173 = vmatpush1.bf16.msra.mxu0 0
        %3174 = vmatprep.subr.bf16.mxu0 0
        %3175 = vmatpush1.bf16.msra.mxu0 0
        %3176 = vmatprep.subr.bf16.mxu0 0
        %3177 = vmatpush1.bf16.msra.mxu0 %v3158
        %3178 = vmatprep.subr.bf16.mxu0 0
        %3179 = vmatpush1.bf16.msra.mxu0 %v3157
        %3180 = vmatprep.subr.bf16.mxu0 0
        %3181 = vmatpush2.bf16.msra.mxu0 0
        %3182 = vmatprep.subr.bf16.mxu0 0
        %3183 = vmatpush2.bf16.msra.mxu0 0
        %3184 = vmatprep.subr.bf16.mxu0 0
        %3185 = vmatpush2.bf16.msra.mxu0 0
        %3186 = vmatprep.subr.bf16.mxu0 0
        %3187 = vmatpush2.bf16.msra.mxu0 0
        %3188 = vmatprep.subr.bf16.mxu0 0
        %3189 = vmatpush2.bf16.msra.mxu0 0
        %3190 = vmatprep.subr.bf16.mxu0 0
        %3191 = vmatpush2.bf16.msra.mxu0 0
        %3192 = vmatprep.subr.bf16.mxu0 0
        %3193 = vmatpush2.bf16.msra.mxu0 0
        %3194 = vmatprep.subr.bf16.mxu0 0
        %3195 = vmatpush2.bf16.msra.mxu0 0
        %3196 = vmatprep.mubr.bf16.mxu0 0
        %3197 = vmatmul.mubr.bf16.gmra.mxu0 %v3162
        %v3198 = vpop.f32.mrf.mxu0
        %v3199 = vadd.f32 %v3147, %v3198
        %v3200 = vpop.f32.mrf.mxu0
        %v3201 = vpop.f32.mrf.mxu0
        %v3202 = vpop.f32.mrf.mxu0
        %3203 = vdwg.mxu0
        %v3204 = vadd.f32 %v1992, %v3199
        %v3205 = vsel %vm817, %v3204, 0.0
        %3206 = vadd.xlane.f32.xlu0 %v3205
        %v3207 = vpop.xlane.xlu0 %3206
        %v3208 = vmul.f32 %v3207, %v1972
        %v3209 = vsub.f32 %v3204, %v3208
        %v3210 = vmul.f32 %v3209, %v3209
        %v3211 = vsel %vm817, %v3210, 0.0
        %3212 = vadd.xlane.f32.xlu0 %v3211
        %v3213 = vpop.xlane.xlu0 %3212
        %v3214 = vmul.f32 %v3213, %v1972
        %v3215 = vadd.f32 %v3214, 1e-05
        %v3216 = vrsqrt.pop %v3215
        %v3217 = vmul.f32 %v3209, %v3216
        %v3218 = vlaneseq
        %v3219 = vshrl.u32 %v3218, 7
        %v3220 = vsub.s32 1, %v3219
        %v3221 = vrot.slane %v792, %v3220
        %v3222 = vmul.f32 %v3217, %v3221
        %v3223 = vlaneseq
        %v3224 = vshrl.u32 %v3223, 7
        %v3225 = vsub.s32 1, %v3224
        %v3226 = vrot.slane %v793, %v3225
        %v3227 = vadd.f32 %v3222, %v3226
        %v3228 = vpack.c.bf16 %v3227, %v3227
        %v3229 = vld [vmem:[#allocation16] sm:$0xf]
        %v3230 = vld [vmem:[#allocation16 + $0x4] sm:$0xf]
        %v3231 = vld [vmem:[#allocation16 + $0x8] sm:$0xf]
        %v3232 = vld [vmem:[#allocation16 + $0xc] sm:$0xf]
        %v3233 = vld [vmem:[%s13] sm:$0x1]
        %v3235 = vlaneseq
        %v3236 = vshrl.u32 %v3235, 7
        %v3237 = vsub.s32 0, %v3236
        %v3238 = vrot.slane %v3233, %v3237
        %v3244 = vunpack.c.l.b16 %v3229
        %v3245 = vunpack.c.l.b16 %v3230
        %v3246 = vunpack.c.l.b16 %v3231
        %v3247 = vunpack.c.l.b16 %v3232
        %v3248 = vpack.c.b16 %v3245, %v3244
        %v3249 = vpack.c.b16 %v3247, %v3246
        %v3253 = vsel %vm817, %v3228, 0
        %3255 = vmatprep.subr.bf16.mxu0 0
        %3256 = vmatpush1.bf16.msra.mxu0 0
        %3257 = vmatprep.subr.bf16.mxu0 0
        %3258 = vmatpush1.bf16.msra.mxu0 0
        %3259 = vmatprep.subr.bf16.mxu0 0
        %3260 = vmatpush1.bf16.msra.mxu0 0
        %3261 = vmatprep.subr.bf16.mxu0 0
        %3262 = vmatpush1.bf16.msra.mxu0 0
        %3263 = vmatprep.subr.bf16.mxu0 0
        %3264 = vmatpush1.bf16.msra.mxu0 0
        %3265 = vmatprep.subr.bf16.mxu0 0
        %3266 = vmatpush1.bf16.msra.mxu0 0
        %3267 = vmatprep.subr.bf16.mxu0 0
        %3268 = vmatpush1.bf16.msra.mxu0 %v3249
        %3269 = vmatprep.subr.bf16.mxu0 0
        %3270 = vmatpush1.bf16.msra.mxu0 %v3248
        %3271 = vmatprep.subr.bf16.mxu0 0
        %3272 = vmatpush2.bf16.msra.mxu0 0
        %3273 = vmatprep.subr.bf16.mxu0 0
        %3274 = vmatpush2.bf16.msra.mxu0 0
        %3275 = vmatprep.subr.bf16.mxu0 0
        %3276 = vmatpush2.bf16.msra.mxu0 0
        %3277 = vmatprep.subr.bf16.mxu0 0
        %3278 = vmatpush2.bf16.msra.mxu0 0
        %3279 = vmatprep.subr.bf16.mxu0 0
        %3280 = vmatpush2.bf16.msra.mxu0 0
        %3281 = vmatprep.subr.bf16.mxu0 0
        %3282 = vmatpush2.bf16.msra.mxu0 0
        %3283 = vmatprep.subr.bf16.mxu0 0
        %3284 = vmatpush2.bf16.msra.mxu0 0
        %3285 = vmatprep.subr.bf16.mxu0 0
        %3286 = vmatpush2.bf16.msra.mxu0 0
        %3287 = vmatprep.mubr.bf16.mxu0 0
        %3288 = vmatmul.mubr.bf16.gmra.mxu0 %v3253
        %v3289 = vpop.f32.mrf.mxu0
        %v3290 = vadd.f32 %v3238, %v3289
        %v3291 = vpop.f32.mrf.mxu0
        %v3292 = vpop.f32.mrf.mxu0
        %v3293 = vpop.f32.mrf.mxu0
        %3294 = vdwg.mxu0
        %v3295 = vmax.f32 %v3290, 0.0
        %v3296 = vpack.c.bf16 %v3295, %v3295
        %v3297 = vld [vmem:[%s14] sm:$0xf]
        %v3298 = vld [vmem:[%s14 + $0x4] sm:$0xf]
        %v3299 = vld [vmem:[%s14 + $0x8] sm:$0xf]
        %v3300 = vld [vmem:[%s14 + $0xc] sm:$0xf]
        %v3301 = vld [vmem:[%s14 + $0x10] sm:$0xf]
        %v3302 = vld [vmem:[%s14 + $0x14] sm:$0xf]
        %v3303 = vld [vmem:[%s14 + $0x18] sm:$0xf]
        %v3304 = vld [vmem:[%s14 + $0x1c] sm:$0xf]
        %v3305 = vld [vmem:[%s15] sm:$0x1]
        %v3307 = vlaneseq
        %v3308 = vshrl.u32 %v3307, 7
        %v3309 = vsub.s32 0, %v3308
        %v3310 = vrot.slane %v3305, %v3309
        %v3320 = vunpack.c.l.b16 %v3297
        %v3321 = vunpack.c.l.b16 %v3298
        %v3322 = vunpack.c.l.b16 %v3299
        %v3323 = vunpack.c.l.b16 %v3300
        %v3324 = vunpack.c.l.b16 %v3301
        %v3325 = vunpack.c.l.b16 %v3302
        %v3326 = vunpack.c.l.b16 %v3303
        %v3327 = vunpack.c.l.b16 %v3304
        %v3328 = vpack.c.b16 %v3321, %v3320
        %v3329 = vpack.c.b16 %v3323, %v3322
        %v3330 = vpack.c.b16 %v3325, %v3324
        %v3331 = vpack.c.b16 %v3327, %v3326
        %vm3336 = vcmask 523264
        %v3338 = vsel %vm3336, %v3296, 0
        %3340 = vmatprep.subr.bf16.mxu0 0
        %3341 = vmatpush1.bf16.msra.mxu0 0
        %3342 = vmatprep.subr.bf16.mxu0 0
        %3343 = vmatpush1.bf16.msra.mxu0 0
        %3344 = vmatprep.subr.bf16.mxu0 0
        %3345 = vmatpush1.bf16.msra.mxu0 0
        %3346 = vmatprep.subr.bf16.mxu0 0
        %3347 = vmatpush1.bf16.msra.mxu0 0
        %3348 = vmatprep.subr.bf16.mxu0 0
        %3349 = vmatpush1.bf16.msra.mxu0 %v3331
        %3350 = vmatprep.subr.bf16.mxu0 0
        %3351 = vmatpush1.bf16.msra.mxu0 %v3330
        %3352 = vmatprep.subr.bf16.mxu0 0
        %3353 = vmatpush1.bf16.msra.mxu0 %v3329
        %3354 = vmatprep.subr.bf16.mxu0 0
        %3355 = vmatpush1.bf16.msra.mxu0 %v3328
        %3356 = vmatprep.subr.bf16.mxu0 0
        %3357 = vmatpush2.bf16.msra.mxu0 0
        %3358 = vmatprep.subr.bf16.mxu0 0
        %3359 = vmatpush2.bf16.msra.mxu0 0
        %3360 = vmatprep.subr.bf16.mxu0 0
        %3361 = vmatpush2.bf16.msra.mxu0 0
        %3362 = vmatprep.subr.bf16.mxu0 0
        %3363 = vmatpush2.bf16.msra.mxu0 0
        %3364 = vmatprep.subr.bf16.mxu0 0
        %3365 = vmatpush2.bf16.msra.mxu0 0
        %3366 = vmatprep.subr.bf16.mxu0 0
        %3367 = vmatpush2.bf16.msra.mxu0 0
        %3368 = vmatprep.subr.bf16.mxu0 0
        %3369 = vmatpush2.bf16.msra.mxu0 0
        %3370 = vmatprep.subr.bf16.mxu0 0
        %3371 = vmatpush2.bf16.msra.mxu0 0
        %3372 = vmatprep.mubr.bf16.mxu0 0
        %3373 = vmatmul.mubr.bf16.gmra.mxu0 %v3338
        %v3374 = vpop.f32.mrf.mxu0
        %v3375 = vadd.f32 %v3310, %v3374
        %v3376 = vpop.f32.mrf.mxu0
        %v3377 = vpop.f32.mrf.mxu0
        %v3378 = vpop.f32.mrf.mxu0
        %3379 = vdwg.mxu0
        %v3380 = vadd.f32 %v3227, %v3375
        %v3381 = vsel %vm817, %v3380, 0.0
        %3382 = vadd.xlane.f32.xlu0 %v3381
        %v3383 = vpop.xlane.xlu0 %3382
        %v3384 = vmul.f32 %v3383, %v1972
        %v3385 = vsub.f32 %v3380, %v3384
        %v3386 = vmul.f32 %v3385, %v3385
        %v3387 = vsel %vm817, %v3386, 0.0
        %3388 = vadd.xlane.f32.xlu0 %v3387
        %v3389 = vpop.xlane.xlu0 %3388
        %v3390 = vmul.f32 %v3389, %v1972
        %v3391 = vadd.f32 %v3390, 1e-05
        %v3392 = vrsqrt.pop %v3391
        %v3393 = vmul.f32 %v3385, %v3392
        %v3394 = vlaneseq
        %v3395 = vshrl.u32 %v3394, 7
        %v3396 = vsub.s32 2, %v3395
        %v3397 = vrot.slane %v792, %v3396
        %v3398 = vmul.f32 %v3393, %v3397
        %v3399 = vlaneseq
        %v3400 = vshrl.u32 %v3399, 7
        %v3401 = vsub.s32 2, %v3400
        %v3402 = vrot.slane %v793, %v3401
        %v3403 = vadd.f32 %v3398, %v3402
        %3404 = vst.msk [vmem:[%s774] sm:$0xff] %vm817, %v3403
        %s3405 = sand.u32 %s443, 1
        %s3406 = scalar_lea.sflag [#allocation4], %s3405
        %s3407 = sand.u32 %s443, 1
        %s3408 = smul.addr %s3407, 8
        %s3409 = scalar_lea.vmem [#allocation17], %s3408
        %s3410 = sand.u32 %s47, 1
        %s3411 = scalar_lea.sflag [#allocation19], %s3410
        %s3412 = sand.u32 %s469, 1
        %s3413 = smul.addr %s3412, 16
        %s3414 = scalar_lea.vmem [#allocation18], %s3413
        %s3415 = sand.u32 %s47, 1
        %s3416 = scalar_lea.sflag [#allocation19], %s3415
        %s3417 = sand.u32 %s495, 1
        %s3418 = smul.addr %s3417, 16
        %s3419 = scalar_lea.vmem [#allocation20], %s3418
        // Predicated region
        $region129: #{tpu_custom_call.1} parent=91 // pred_check
          %p3420 = pneg %p453
        $region130: #{tpu_custom_call.1} parent=91 // pred_check_branch
          %3422 = sbr.rel (%p3420) target = $region132
        $region131: #{tpu_custom_call.1} parent=91 // pred_region
          %s3424 = ssub.s32 128, 128
          %3425 = vsyncadd %s3406, %s3424
          %s3426 = smul.addr %s47, 128
          %s3427 = scalar_lea.hbm %s18, %s3426
          %s3429 = sshll.u32 %s3409, 4
          %s3430 = int_to_ptr.vmem [resolvable:$true] %s3429
          %3432 = dma.vmem_to_hbm [thread:$0]  %s3430, 128, %s3427, %s3406
        $region132: #{tpu_custom_call.1} parent=91 // pred_fallthru
          _
        // Predicated region
        $region133: #{tpu_custom_call.1} parent=91 // pred_check
          %p3433 = pneg %p479
        $region134: #{tpu_custom_call.1} parent=91 // pred_check_branch
          %3435 = sbr.rel (%p3433) target = $region136
        $region135: #{tpu_custom_call.1} parent=91 // pred_region
          %s3437 = ssub.s32 256, 256
          %3438 = vsyncadd %s3411, %s3437
          %s3439 = smul.addr %s47, 4
          %s3440 = smul.addr %s3439, 64
          %s3441 = scalar_lea.hbm %s19, %s3440
          %s3442 = sshll.u32 %s3414, 4
          %s3443 = int_to_ptr.vmem [resolvable:$true] %s3442
          %3448 = dma.vmem_to_hbm [thread:$0]  %s3443, 256, %s3441, %s3411, 64, 64, 4
        $region136: #{tpu_custom_call.1} parent=91 // pred_fallthru
          _
        // Predicated region
        $region137: #{tpu_custom_call.1} parent=91 // pred_check
          %p3449 = pneg %p505
        $region138: #{tpu_custom_call.1} parent=91 // pred_check_branch
          %3451 = sbr.rel (%p3449) target = $region140
        $region139: #{tpu_custom_call.1} parent=91 // pred_region
          %s3453 = ssub.s32 256, 256
          %3454 = vsyncadd %s3416, %s3453
          %s3455 = smul.addr %s47, 4
          %s3456 = smul.addr %s3455, 64
          %s3457 = scalar_lea.hbm %s20, %s3456
          %s3458 = sshll.u32 %s3419, 4
          %s3459 = int_to_ptr.vmem [resolvable:$true] %s3458
          %3464 = dma.vmem_to_hbm [thread:$0]  %s3459, 256, %s3457, %s3416, 64, 64, 4
        $region140: #{tpu_custom_call.1} parent=91 // pred_fallthru
          _
      $region92: #{tpu_custom_call.1} parent=5 // pred_fallthru
        _
      %p3465 = scmp.le.s32.totalorder 2, %s42
      // Predicated region
      $region141: #{tpu_custom_call.1} parent=5 // pred_check
        %p3466 = pneg %p3465
      $region142: #{tpu_custom_call.1} parent=5 // pred_check_branch
        %3468 = sbr.rel (%p3466) target = $region144
      $region143: #{tpu_custom_call.1} parent=5 // pred_region
        %s3469 = ssub.s32 %s42, 2
        // Predicated region
        $region145: #{tpu_custom_call.1} parent=143 // pred_check
          %p3470 = pneg %p459
        $region146: #{tpu_custom_call.1} parent=143 // pred_check_branch
          %3472 = sbr.rel (%p3470) target = $region148
        $region147: #{tpu_custom_call.1} parent=143 // pred_region
          %s3473 = sand.u32 %s444, 1
          %s3474 = scalar_lea.sflag [#allocation4], %s3473
          %s3475 = sand.u32 %s444, 1
          %s3476 = smul.addr %s3475, 8
          %s3477 = scalar_lea.vmem [#allocation17], %s3476
          %3478 = dma.done %s3474, 128
        $region148: #{tpu_custom_call.1} parent=143 // pred_fallthru
          _
        // Predicated region
        $region149: #{tpu_custom_call.1} parent=143 // pred_check
          %p3479 = pneg %p485
        $region150: #{tpu_custom_call.1} parent=143 // pred_check_branch
          %3481 = sbr.rel (%p3479) target = $region152
        $region151: #{tpu_custom_call.1} parent=143 // pred_region
          %s3482 = sand.u32 %s48, 1
          %s3483 = scalar_lea.sflag [#allocation19], %s3482
          %s3484 = sand.u32 %s470, 1
          %s3485 = smul.addr %s3484, 16
          %s3486 = scalar_lea.vmem [#allocation18], %s3485
          %3487 = dma.done %s3483, 256
        $region152: #{tpu_custom_call.1} parent=143 // pred_fallthru
          _
        // Predicated region
        $region153: #{tpu_custom_call.1} parent=143 // pred_check
          %p3488 = pneg %p511
        $region154: #{tpu_custom_call.1} parent=143 // pred_check_branch
          %3490 = sbr.rel (%p3488) target = $region156
        $region155: #{tpu_custom_call.1} parent=143 // pred_region
          %s3491 = sand.u32 %s48, 1
          %s3492 = scalar_lea.sflag [#allocation19], %s3491
          %s3493 = sand.u32 %s496, 1
          %s3494 = smul.addr %s3493, 16
          %s3495 = scalar_lea.vmem [#allocation20], %s3494
          %3496 = dma.done %s3492, 256
        $region156: #{tpu_custom_call.1} parent=143 // pred_fallthru
          _
      $region144: #{tpu_custom_call.1} parent=5 // pred_fallthru
        _
    $region6: #{tpu_custom_call.1} parent=1 // loop_footer
      %s46 = sadd.s32 1, %s42
    $region7: #{tpu_custom_call.1} parent=1 // loop_footer_branch
      %41 = sbr.rel target = $region3
    $region8: #{tpu_custom_call.1} parent=1 // loop_exit
      _
    %3497 = vsyncpa [#allocation3], 1
    %s3498 = scalar_lea.sflag [#allocation3], 1
    %3499 = vsyncpa %s3498, 1
    %3500 = vsyncpa [#allocation6], 1
    %s3501 = scalar_lea.sflag [#allocation6], 1
    %3502 = vsyncpa %s3501, 1
    %3503 = vsyncpa [#allocation9], 1
    %3504 = vsyncpa [#allocation12], 1
    %3505 = vsyncpa [#allocation15], 1
    %3506 = vsyncpa [#allocation4], 1
    %s3507 = scalar_lea.sflag [#allocation4], 1
    %3508 = vsyncpa %s3507, 1
    %3509 = vsyncpa [#allocation19], 1
    %s3510 = scalar_lea.sflag [#allocation19], 1
    %3511 = vsyncpa %s3510, 1

</llo_original>
